<compile_context>
chip_gen: v7x
topology: tpu7x:2x2x1
jax: 0.10.0
libtpu: 0.0.40
codegen_flags: <defaults>
</compile_context>

<pallas_src>
import functools

import jax
import jax.numpy as jnp
from jax.experimental import pallas as pl
from jax.experimental.pallas import tpu as pltpu


def _enc_block_kernel(p_ref, w_ref, b_ref, o_ref, *, pool):
    """One grid step = one contiguous block of grouped matmul rows.

    p_ref: (rows, G*Kdim)   bf16 grouped im2col patches
    w_ref: (G*Kdim, G*Cout) bf16 block-diagonal, column-permuted conv weights
    b_ref: (1, lanes_out)   f32 bias tiled to the store layout
    o_ref: (rows, lanes_out) output block (lane-dense)
    """
    # Single MXU matmul, f32 accumulation; result is lane-dense by construction.
    acc = jnp.dot(p_ref[...], w_ref[...], preferred_element_type=jnp.float32)

    if pool:
        # Quadrant column layout:
        #   [h-even,w-even | h-even,w-odd | h-odd,w-even | h-odd,w-odd]
        # so MaxPool2d(2,2) is two whole-vreg maxima (slices are 128-aligned).
        half = acc.shape[1] // 2
        m = jnp.maximum(acc[:, :half], acc[:, half:])      # combine h parity
        quarter = half // 2
        y = jnp.maximum(m[:, :quarter], m[:, quarter:])    # combine w parity
    else:
        y = acc

    # Per-channel bias: adding after the max is exact (constant per channel).
    y = y + b_ref[...]
    # SiLU; exp lands on the EUP slot.  TODO(synk): emit bf16 output on
    # v6e/v7x if the consumer accepts it (halves store traffic).
    o_ref[...] = (y * (1.0 / (1.0 + jnp.exp(-y)))).astype(o_ref.dtype)


def _tensorcores_per_chip():
    """Generation-aware parallelism: only split the grid where 2 TCs exist."""
    try:
        kind = jax.devices()[0].device_kind.lower()
    except Exception:
        return 1
    return 2 if any(tag in kind for tag in ("v4", "v5p", "v7", "7x")) else 1


def _num_row_blocks(total_rows, max_blocks):
    """Largest grid size <= max_blocks keeping row blocks sublane-aligned."""
    for g in range(max_blocks, 0, -1):
        if total_rows % g == 0 and ((total_rows // g) % 8 == 0 or g == 1):
            return g
    return 1


def enc_block_forward(x_nchw, weight_oihw, bias, *, stride, padding, pool,
                      num_row_blocks=None):
    """Pallas implementation of EncBlock.forward.  Returns NCHW output."""
    N, Cin, H, W = x_nchw.shape
    Cout, Cin_w, KH, KW = weight_oihw.shape
    assert Cin == Cin_w
    Hp, Wp = H + 2 * padding, W + 2 * padding
    Ho = (Hp - KH) // stride + 1
    Wo = (Wp - KW) // stride + 1
    Kdim = KH * KW * Cin

    if pool:
        # TODO(synk): support Ho % 4 != 0 (but even) with a 2-row grouping.
        assert Ho % 4 == 0 and Wo % 2 == 0, "pool=True needs Ho%4==0, Wo%2==0"
        Hout, Wout = Ho // 2, Wo // 2
        rows_per_group = 4                 # conv rows folded into one matmul row
        lanes_out = 2 * Wout * Cout        # two pooled rows per stored row (=128)
    else:
        Hout, Wout = Ho, Wo
        rows_per_group = 1
        lanes_out = Wo * Cout              # one conv row per stored row (=128)

    G = rows_per_group * Wo                # conv output pixels per matmul row
    n_cols = G * Cout                      # matmul output lanes (pre-pool)
    total_rows = (N * Ho) // rows_per_group

    # ---- layout plumbing in plain JAX (not the hot path) -------------------
    # TODO(synk): at realistic encoder sizes keep the model NHWC end-to-end and
    # move im2col into the kernel (accumulate the KH*KW taps from a DMA'd row
    # tile) to avoid the 9x HBM patch blow-up and the NCHW<->NHWC transposes
    # (worst on v5e's ~820 GB/s); also cap the row block by a VMEM budget on
    # v7x (64 MiB) and consider pl.Buffered(3) on the patches spec on v5e.
    x_nhwc = jnp.transpose(x_nchw, (0, 2, 3, 1))
    xp = jnp.pad(x_nhwc, ((0, 0), (padding, padding), (padding, padding), (0, 0)))
    taps = []
    for kh in range(KH):
        for kw in range(KW):
            taps.append(xp[:, kh:kh + (Ho - 1) * stride + 1:stride,
                           kw:kw + (Wo - 1) * stride + 1:stride, :])
    patches = jnp.stack(taps, axis=3)                  # (N, Ho, Wo, KH*KW, Cin)
    patches = patches.reshape(total_rows, G * Kdim).astype(jnp.bfloat16)

    # Conv weight as (kh, kw, cin) x cout, expanded to a block-diagonal
    # (G*Kdim, G*Cout) matrix; for pool=True its columns are permuted into the
    # pooling/store lane layout so the matmul output needs no repacking.
    w2d = jnp.transpose(weight_oihw, (2, 3, 1, 0)).reshape(Kdim, Cout)
    eye = jnp.eye(G, dtype=w2d.dtype)
    w_big = jnp.einsum("gh,kc->gkhc", eye, w2d).reshape(G * Kdim, n_cols)
    if pool:
        perm = [0] * n_cols
        for dh in range(rows_per_group):
            for w in range(Wo):
                quadrant = 2 * (dh % 2) + (w % 2)
                for c in range(Cout):
                    out_col = (quadrant * lanes_out
                               + (dh // 2) * (Wout * Cout) + (w // 2) * Cout + c)
                    perm[out_col] = (dh * Wo + w) * Cout + c
        w_big = w_big[:, jnp.asarray(perm, dtype=jnp.int32)]
    w_big = w_big.astype(jnp.bfloat16)

    # Bias tiled to the stored-row layout so the in-kernel add is lane-dense.
    bias_tiled = jnp.tile(bias.astype(jnp.float32),
                          lanes_out // Cout).reshape(1, lanes_out)

    if num_row_blocks is None:
        num_row_blocks = _num_row_blocks(total_rows, _tensorcores_per_chip())
    assert total_rows % num_row_blocks == 0
    rows_blk = total_rows // num_row_blocks

    kernel = functools.partial(_enc_block_kernel, pool=pool)
    out_itemsize = jnp.dtype(x_nchw.dtype).itemsize
    cost = pl.CostEstimate(
        flops=2 * total_rows * (G * Kdim) * n_cols,
        transcendentals=total_rows * lanes_out,
        bytes_accessed=(patches.size * 2 + w_big.size * 2 + bias_tiled.size * 4
                        + total_rows * lanes_out * out_itemsize))

    out2d = pl.pallas_call(
        kernel,
        out_shape=jax.ShapeDtypeStruct((total_rows, lanes_out), x_nchw.dtype),
        grid_spec=pltpu.PrefetchScalarGridSpec(
            num_scalar_prefetch=0,
            grid=(num_row_blocks,),
            in_specs=[
                pl.BlockSpec((rows_blk, G * Kdim), lambda i: (i, 0)),
                pl.BlockSpec((G * Kdim, n_cols), lambda i: (0, 0)),
                pl.BlockSpec((1, lanes_out), lambda i: (0, 0)),
            ],
            out_specs=pl.BlockSpec((rows_blk, lanes_out), lambda i: (i, 0)),
        ),
        compiler_params=pltpu.CompilerParams(
            dimension_semantics=("parallel",)),
        cost_estimate=cost,
    )(patches, w_big, bias_tiled)

    out_nhwc = out2d.reshape(N, Hout, Wout, Cout)
    return jnp.transpose(out_nhwc, (0, 3, 1, 2))       # back to NCHW


def _reference_forward(x_nchw, weight_oihw, bias, *, stride, padding, pool):
    """Pure-JAX f32 reference matching torch semantics (for validation)."""
    y = jax.lax.conv_general_dilated(
        x_nchw, weight_oihw,
        window_strides=(stride, stride),
        padding=[(padding, padding), (padding, padding)],
        dimension_numbers=("NCHW", "OIHW", "NCHW"))
    y = y + bias.reshape(1, -1, 1, 1)
    if pool:
        y = jax.lax.reduce_window(y, -jnp.inf, jax.lax.max,
                                  (1, 1, 2, 2), (1, 1, 2, 2), "VALID")
    return jax.nn.silu(y)


if __name__ == "__main__":
    # EncBlock(in_dim=4, out_dim=8, kernel_size=3, stride=1, padding=1, pool=...)
    N, Cin, H, W = 2, 4, 16, 16
    Cout, K, stride, padding = 8, 3, 1, 1

    key = jax.random.PRNGKey(0)
    kx, kw, kb = jax.random.split(key, 3)
    fan_in = Cin * K * K
    bound = 1.0 / (fan_in ** 0.5)
    x = jax.random.normal(kx, (N, Cin, H, W), dtype=jnp.float32)
    weight = jax.random.uniform(kw, (Cout, Cin, K, K), jnp.float32, -bound, bound)
    bias = jax.random.uniform(kb, (Cout,), jnp.float32, -bound, bound)

    for pool in (True, False):
        out = enc_block_forward(x, weight, bias,
                                stride=stride, padding=padding, pool=pool)
        out = jax.block_until_ready(out)
        ref = _reference_forward(x, weight, bias,
                                 stride=stride, padding=padding, pool=pool)
        assert out.shape == ref.shape, (out.shape, ref.shape)
        max_err = float(jnp.max(jnp.abs(out - ref)))
        # bf16 MXU inputs (f32 accumulation) vs. an all-f32 reference.
        assert max_err < 5e-2, f"pool={pool} max_err={max_err}"

    print("KERNEL_OK")
</pallas_src>

<mosaic_0001>
module attributes {stable_mosaic.version = 11 : i64} {
  func.func @_enc_block_kernel(%arg0: i32, %arg1: memref<8x2304xbf16, #tpu.memory_space<vmem>>, %arg2: memref<2304x512xbf16, #tpu.memory_space<vmem>>, %arg3: memref<1x128xf32, #tpu.memory_space<vmem>>, %arg4: memref<8x128xf32, #tpu.memory_space<vmem>>) attributes {dimension_semantics = [#tpu.dimension_semantics<parallel>], iteration_bounds = array<i64: 1>, scalar_prefetch = 0 : i64, scratch_operands = 0 : i64, tpu.core_type = #tpu.core_type<tc>, window_params = [{transform_indices = @transform_0, window_bounds = array<i64: 8, 2304>}, {pipeline_mode = #tpu.pipeline_mode<synchronous>, transform_indices = @transform_1, window_bounds = array<i64: 2304, 512>}, {pipeline_mode = #tpu.pipeline_mode<synchronous>, transform_indices = @transform_2, window_bounds = array<i64: 1, 128>}, {transform_indices = @transform_3, window_bounds = array<i64: 8, 128>}]} {
    %c0 = arith.constant 0 : index
    %c0_0 = arith.constant 0 : index
    %0 = vector.load %arg1[%c0, %c0_0] : memref<8x2304xbf16, #tpu.memory_space<vmem>>, vector<8x2304xbf16>
    %c0_1 = arith.constant 0 : index
    %c0_2 = arith.constant 0 : index
    %1 = vector.load %arg2[%c0_1, %c0_2] : memref<2304x512xbf16, #tpu.memory_space<vmem>>, vector<2304x512xbf16>
    %cst = arith.constant dense<0.000000e+00> : vector<8x512xf32>
    %2 = tpu.matmul %0, %1, %cst {dimension_numbers = #tpu.dot_dimension_numbers<[1], [0], [0], [1], [0, 0, 1, 1], [], []>} : vector<8x2304xbf16>, vector<2304x512xbf16>, vector<8x512xf32> -> vector<8x512xf32>
    %3 = vector.extract_strided_slice %2 {offsets = [0, 0], sizes = [8, 256], strides = [1, 1]} : vector<8x512xf32> to vector<8x256xf32>
    %4 = vector.extract_strided_slice %2 {offsets = [0, 256], sizes = [8, 256], strides = [1, 1]} : vector<8x512xf32> to vector<8x256xf32>
    %5 = arith.maximumf %3, %4 : vector<8x256xf32>
    %6 = vector.extract_strided_slice %5 {offsets = [0, 0], sizes = [8, 128], strides = [1, 1]} : vector<8x256xf32> to vector<8x128xf32>
    %7 = vector.extract_strided_slice %5 {offsets = [0, 128], sizes = [8, 128], strides = [1, 1]} : vector<8x256xf32> to vector<8x128xf32>
    %8 = arith.maximumf %6, %7 : vector<8x128xf32>
    %c0_3 = arith.constant 0 : index
    %c0_4 = arith.constant 0 : index
    %9 = vector.load %arg3[%c0_3, %c0_4] : memref<1x128xf32, #tpu.memory_space<vmem>>, vector<1x128xf32>
    %10 = vector.broadcast %9 : vector<1x128xf32> to vector<8x128xf32>
    %11 = arith.addf %8, %10 : vector<8x128xf32>
    %cst_5 = arith.constant 0.000000e+00 : f32
    %12 = vector.broadcast %cst_5 : f32 to vector<8x128xf32>
    %13 = arith.subf %12, %11 : vector<8x128xf32>
    %14 = math.exp %13 : vector<8x128xf32>
    %cst_6 = arith.constant 1.000000e+00 : f32
    %15 = vector.broadcast %cst_6 : f32 to vector<8x128xf32>
    %16 = arith.addf %15, %14 : vector<8x128xf32>
    %cst_7 = arith.constant 1.000000e+00 : f32
    %17 = vector.broadcast %cst_7 : f32 to vector<8x128xf32>
    %18 = arith.divf %17, %16 : vector<8x128xf32>
    %19 = arith.mulf %11, %18 : vector<8x128xf32>
    %c0_8 = arith.constant 0 : index
    %c0_9 = arith.constant 0 : index
    %20 = vector.load %arg4[%c0_8, %c0_9] : memref<8x128xf32, #tpu.memory_space<vmem>>, vector<8x128xf32>
    tpu.vector_store %arg4[%c0_8, %c0_9], %19 {strides = array<i32>} : memref<8x128xf32, #tpu.memory_space<vmem>>, vector<8x128xf32>,
    return
  }
  func.func @transform_0(%arg0: i32) -> (i32, i32) {
    %c0_i32 = arith.constant 0 : i32
    %c0_i32_0 = arith.constant 0 : i32
    return %arg0, %c0_i32 : i32, i32
  }
  func.func @transform_1(%arg0: i32) -> (i32, i32) {
    %c0_i32 = arith.constant 0 : i32
    %c0_i32_0 = arith.constant 0 : i32
    %c0_i32_1 = arith.constant 0 : i32
    return %c0_i32, %c0_i32_0 : i32, i32
  }
  func.func @transform_2(%arg0: i32) -> (i32, i32) {
    %c0_i32 = arith.constant 0 : i32
    %c0_i32_0 = arith.constant 0 : i32
    %c0_i32_1 = arith.constant 0 : i32
    return %c0_i32, %c0_i32_0 : i32, i32
  }
  func.func @transform_3(%arg0: i32) -> (i32, i32) {
    %c0_i32 = arith.constant 0 : i32
    %c0_i32_0 = arith.constant 0 : i32
    return %arg0, %c0_i32 : i32, i32
  }
}

</mosaic_0001>

<llo_original>
// kernel: tpu_custom_call.1
$region0: #{tpu_custom_call.1}
  #allocation0 [shape = 'u32[]', space=smem, size = 0x4, offset = 0x4, fixed_abs, tag = 'smem constant byte address 0x4 - core index']
  #allocation1 [shape = 'u32[144,128]{1,0:T(1,128)}', space=vmem, size = 0x12000, scoped, tag = 'internal scratch']
  %s0 = inlined_call_operand.hbm [shape: bf16[8,2304], index: 0, kind: input, shape index: {}]
  %s1 = inlined_call_operand.hbm [shape: bf16[2304,512], index: 1, kind: input, shape index: {}]
  %s2 = inlined_call_operand.hbm [shape: f32[1,128], index: 2, kind: input, shape index: {}]
  %s3 = inlined_call_operand.hbm [shape: f32[8,128], index: 3, kind: output, shape index: {}]
  %s4 = sld [smem:[#allocation0]]
  $region34: #{tpu_custom_call.1} parent=0
    _
  %s6 = ssub.s32 1, %s4
  %s7 = scalar_select 0, %s6, %s4
  $region1: #{tpu_custom_call.1} parent=0
    #allocation2 [shape = 'u8[36864]{0}', space=vmem, size = 0x9000, scoped, tag = 'input window, operand 0, single buffered']
    #allocation3 [shape = 's32[1]{0}', space=sflag, size = 0x4, scoped, tag = 'scoped memory for tpu_custom_call.1']
    #allocation4 [shape = 's32[1]{0}', space=sflag, size = 0x4, scoped, tag = 'scoped memory for tpu_custom_call.1']
    #allocation5 [shape = 'u8[2359296]{0}', space=vmem, size = 0x240000, scoped, tag = 'input window, operand 1, single buffered']
    #allocation6 [shape = 's32[1]{0}', space=sflag, size = 0x4, scoped, tag = 'scoped memory for tpu_custom_call.1']
    #allocation7 [shape = 'u8[512]{0}', space=vmem, size = 0x400, scoped, tag = 'input window, operand 2, single buffered']
    #allocation8 [shape = 'u8[4096]{0}', space=vmem, size = 0x1000, scoped, tag = 'output window, operand 0, single buffered']
    %8 = vsyncpa [#allocation3], 0
    %9 = vsyncpa [#allocation6], 0
    %10 = vsyncpa [#allocation4], 0
    // Predicated region
    $region2: #{tpu_custom_call.1} parent=1 // pred_check
      _
    $region3: #{tpu_custom_call.1} parent=1 // pred_check_branch
      %12 = sbr.rel (0) target = $region5
    $region4: #{tpu_custom_call.1} parent=1 // pred_region
      %s14 = ssub.s32 1152, 1152
      %15 = vsyncadd [#allocation3], %s14
      %s17 = sshll.u32 [#allocation2], 4
      %s18 = int_to_ptr.vmem [resolvable:$true] %s17
      %20 = dma.hbm_to_vmem [thread:$0]  %s0, 1152, %s18, [#allocation3]
    $region5: #{tpu_custom_call.1} parent=1 // pred_fallthru
      _
    // Predicated region
    $region6: #{tpu_custom_call.1} parent=1 // pred_check
      _
    $region7: #{tpu_custom_call.1} parent=1 // pred_check_branch
      %22 = sbr.rel (0) target = $region9
    $region8: #{tpu_custom_call.1} parent=1 // pred_region
      %s24 = ssub.s32 73728, 73728
      %25 = vsyncadd [#allocation6], %s24
      %s26 = sshll.u32 [#allocation5], 4
      %s27 = int_to_ptr.vmem [resolvable:$true] %s26
      %32 = dma.hbm_to_vmem [thread:$0]  %s1, 73728, %s27, [#allocation6], 256, 256, 16
    $region9: #{tpu_custom_call.1} parent=1 // pred_fallthru
      _
    // Predicated region
    $region10: #{tpu_custom_call.1} parent=1 // pred_check
      _
    $region11: #{tpu_custom_call.1} parent=1 // pred_check_branch
      %34 = sbr.rel (0) target = $region13
    $region12: #{tpu_custom_call.1} parent=1 // pred_region
      %s36 = ssub.s32 16, 16
      %37 = vsyncadd [#allocation6], %s36
      %s39 = sshll.u32 [#allocation7], 4
      %s40 = int_to_ptr.vmem [resolvable:$true] %s39
      %42 = dma.hbm_to_vmem [thread:$0]  %s2, 16, %s40, [#allocation6]
    $region13: #{tpu_custom_call.1} parent=1 // pred_fallthru
      _
    // Predicated region
    $region14: #{tpu_custom_call.1} parent=1 // pred_check
      _
    $region15: #{tpu_custom_call.1} parent=1 // pred_check_branch
      %44 = sbr.rel (0) target = $region17
    $region16: #{tpu_custom_call.1} parent=1 // pred_region
      %45 = dma.done [#allocation3], 1152
    $region17: #{tpu_custom_call.1} parent=1 // pred_fallthru
      _
    // Predicated region
    $region18: #{tpu_custom_call.1} parent=1 // pred_check
      _
    $region19: #{tpu_custom_call.1} parent=1 // pred_check_branch
      %47 = sbr.rel (0) target = $region21
    $region20: #{tpu_custom_call.1} parent=1 // pred_region
      %48 = dma.done [#allocation6], 73728
    $region21: #{tpu_custom_call.1} parent=1 // pred_fallthru
      _
    // Predicated region
    $region22: #{tpu_custom_call.1} parent=1 // pred_check
      _
    $region23: #{tpu_custom_call.1} parent=1 // pred_check_branch
      %50 = sbr.rel (0) target = $region25
    $region24: #{tpu_custom_call.1} parent=1 // pred_region
      %51 = dma.done [#allocation6], 16
    $region25: #{tpu_custom_call.1} parent=1 // pred_fallthru
      _
    %v52 = vld [vmem:[#allocation2] sm:$0xff]
    %v53 = vld [vmem:[#allocation2 + $0x8] sm:$0xff]
    %v54 = vld [vmem:[#allocation2 + $0x10] sm:$0xff]
    %v55 = vld [vmem:[#allocation2 + $0x18] sm:$0xff]
    %v56 = vld [vmem:[#allocation2 + $0x20] sm:$0xff]
    %v57 = vld [vmem:[#allocation2 + $0x28] sm:$0xff]
    %v58 = vld [vmem:[#allocation2 + $0x30] sm:$0xff]
    %v59 = vld [vmem:[#allocation2 + $0x38] sm:$0xff]
    %v60 = vld [vmem:[#allocation2 + $0x40] sm:$0xff]
    %v61 = vld [vmem:[#allocation5] sm:$0xff]
    %v62 = vld [vmem:[#allocation5 + $0x8] sm:$0xff]
    %v63 = vld [vmem:[#allocation5 + $0x10] sm:$0xff]
    %v64 = vld [vmem:[#allocation5 + $0x18] sm:$0xff]
    %v65 = vld [vmem:[#allocation5 + $0x20] sm:$0xff]
    %v66 = vld [vmem:[#allocation5 + $0x28] sm:$0xff]
    %v67 = vld [vmem:[#allocation5 + $0x30] sm:$0xff]
    %v68 = vld [vmem:[#allocation5 + $0x38] sm:$0xff]
    %v69 = vld [vmem:[#allocation5 + $0x40] sm:$0xff]
    %v70 = vld [vmem:[#allocation5 + $0x48] sm:$0xff]
    %v71 = vld [vmem:[#allocation5 + $0x50] sm:$0xff]
    %v72 = vld [vmem:[#allocation5 + $0x58] sm:$0xff]
    %v73 = vld [vmem:[#allocation5 + $0x60] sm:$0xff]
    %v74 = vld [vmem:[#allocation5 + $0x68] sm:$0xff]
    %v75 = vld [vmem:[#allocation5 + $0x70] sm:$0xff]
    %v76 = vld [vmem:[#allocation5 + $0x78] sm:$0xff]
    %v77 = vld [vmem:[#allocation5 + $0x80] sm:$0xff]
    %v78 = vld [vmem:[#allocation5 + $0x88] sm:$0xff]
    %v79 = vld [vmem:[#allocation5 + $0x90] sm:$0xff]
    %v80 = vld [vmem:[#allocation5 + $0x98] sm:$0xff]
    %v81 = vld [vmem:[#allocation5 + $0xa0] sm:$0xff]
    %v82 = vld [vmem:[#allocation5 + $0xa8] sm:$0xff]
    %v83 = vld [vmem:[#allocation5 + $0xb0] sm:$0xff]
    %v84 = vld [vmem:[#allocation5 + $0xb8] sm:$0xff]
    %v85 = vld [vmem:[#allocation5 + $0xc0] sm:$0xff]
    %v86 = vld [vmem:[#allocation5 + $0xc8] sm:$0xff]
    %v87 = vld [vmem:[#allocation5 + $0xd0] sm:$0xff]
    %v88 = vld [vmem:[#allocation5 + $0xd8] sm:$0xff]
    %v89 = vld [vmem:[#allocation5 + $0xe0] sm:$0xff]
    %v90 = vld [vmem:[#allocation5 + $0xe8] sm:$0xff]
    %v91 = vld [vmem:[#allocation5 + $0xf0] sm:$0xff]
    %v92 = vld [vmem:[#allocation5 + $0xf8] sm:$0xff]
    %v93 = vld [vmem:[#allocation5 + $0x100] sm:$0xff]
    %v94 = vld [vmem:[#allocation5 + $0x108] sm:$0xff]
    %v95 = vld [vmem:[#allocation5 + $0x110] sm:$0xff]
    %v96 = vld [vmem:[#allocation5 + $0x118] sm:$0xff]
    %v97 = vld [vmem:[#allocation5 + $0x120] sm:$0xff]
    %v98 = vld [vmem:[#allocation5 + $0x128] sm:$0xff]
    %v99 = vld [vmem:[#allocation5 + $0x130] sm:$0xff]
    %v100 = vld [vmem:[#allocation5 + $0x138] sm:$0xff]
    %v101 = vld [vmem:[#allocation5 + $0x140] sm:$0xff]
    %v102 = vld [vmem:[#allocation5 + $0x148] sm:$0xff]
    %v103 = vld [vmem:[#allocation5 + $0x150] sm:$0xff]
    %v104 = vld [vmem:[#allocation5 + $0x158] sm:$0xff]
    %v105 = vld [vmem:[#allocation5 + $0x160] sm:$0xff]
    %v106 = vld [vmem:[#allocation5 + $0x168] sm:$0xff]
    %v107 = vld [vmem:[#allocation5 + $0x170] sm:$0xff]
    %v108 = vld [vmem:[#allocation5 + $0x178] sm:$0xff]
    %v109 = vld [vmem:[#allocation5 + $0x180] sm:$0xff]
    %v110 = vld [vmem:[#allocation5 + $0x188] sm:$0xff]
    %v111 = vld [vmem:[#allocation5 + $0x190] sm:$0xff]
    %v112 = vld [vmem:[#allocation5 + $0x198] sm:$0xff]
    %v113 = vld [vmem:[#allocation5 + $0x1a0] sm:$0xff]
    %v114 = vld [vmem:[#allocation5 + $0x1a8] sm:$0xff]
    %v115 = vld [vmem:[#allocation5 + $0x1b0] sm:$0xff]
    %v116 = vld [vmem:[#allocation5 + $0x1b8] sm:$0xff]
    %v117 = vld [vmem:[#allocation5 + $0x1c0] sm:$0xff]
    %v118 = vld [vmem:[#allocation5 + $0x1c8] sm:$0xff]
    %v119 = vld [vmem:[#allocation5 + $0x1d0] sm:$0xff]
    %v120 = vld [vmem:[#allocation5 + $0x1d8] sm:$0xff]
    %v121 = vld [vmem:[#allocation5 + $0x1e0] sm:$0xff]
    %v122 = vld [vmem:[#allocation5 + $0x1e8] sm:$0xff]
    %v123 = vld [vmem:[#allocation5 + $0x1f0] sm:$0xff]
    %v124 = vld [vmem:[#allocation5 + $0x1f8] sm:$0xff]
    %v125 = vld [vmem:[#allocation5 + $0x200] sm:$0xff]
    %v126 = vld [vmem:[#allocation5 + $0x208] sm:$0xff]
    %v127 = vld [vmem:[#allocation5 + $0x210] sm:$0xff]
    %v128 = vld [vmem:[#allocation5 + $0x218] sm:$0xff]
    %v129 = vld [vmem:[#allocation5 + $0x220] sm:$0xff]
    %v130 = vld [vmem:[#allocation5 + $0x228] sm:$0xff]
    %v131 = vld [vmem:[#allocation5 + $0x230] sm:$0xff]
    %v132 = vld [vmem:[#allocation5 + $0x238] sm:$0xff]
    %v133 = vld [vmem:[#allocation5 + $0x240] sm:$0xff]
    %v134 = vld [vmem:[#allocation5 + $0x248] sm:$0xff]
    %v135 = vld [vmem:[#allocation5 + $0x250] sm:$0xff]
    %v136 = vld [vmem:[#allocation5 + $0x258] sm:$0xff]
    %v137 = vld [vmem:[#allocation5 + $0x260] sm:$0xff]
    %v138 = vld [vmem:[#allocation5 + $0x268] sm:$0xff]
    %v139 = vld [vmem:[#allocation5 + $0x270] sm:$0xff]
    %v140 = vld [vmem:[#allocation5 + $0x278] sm:$0xff]
    %v141 = vld [vmem:[#allocation5 + $0x280] sm:$0xff]
    %v142 = vld [vmem:[#allocation5 + $0x288] sm:$0xff]
    %v143 = vld [vmem:[#allocation5 + $0x290] sm:$0xff]
    %v144 = vld [vmem:[#allocation5 + $0x298] sm:$0xff]
    %v145 = vld [vmem:[#allocation5 + $0x2a0] sm:$0xff]
    %v146 = vld [vmem:[#allocation5 + $0x2a8] sm:$0xff]
    %v147 = vld [vmem:[#allocation5 + $0x2b0] sm:$0xff]
    %v148 = vld [vmem:[#allocation5 + $0x2b8] sm:$0xff]
    %v149 = vld [vmem:[#allocation5 + $0x2c0] sm:$0xff]
    %v150 = vld [vmem:[#allocation5 + $0x2c8] sm:$0xff]
    %v151 = vld [vmem:[#allocation5 + $0x2d0] sm:$0xff]
    %v152 = vld [vmem:[#allocation5 + $0x2d8] sm:$0xff]
    %v153 = vld [vmem:[#allocation5 + $0x2e0] sm:$0xff]
    %v154 = vld [vmem:[#allocation5 + $0x2e8] sm:$0xff]
    %v155 = vld [vmem:[#allocation5 + $0x2f0] sm:$0xff]
    %v156 = vld [vmem:[#allocation5 + $0x2f8] sm:$0xff]
    %v157 = vld [vmem:[#allocation5 + $0x300] sm:$0xff]
    %v158 = vld [vmem:[#allocation5 + $0x308] sm:$0xff]
    %v159 = vld [vmem:[#allocation5 + $0x310] sm:$0xff]
    %v160 = vld [vmem:[#allocation5 + $0x318] sm:$0xff]
    %v161 = vld [vmem:[#allocation5 + $0x320] sm:$0xff]
    %v162 = vld [vmem:[#allocation5 + $0x328] sm:$0xff]
    %v163 = vld [vmem:[#allocation5 + $0x330] sm:$0xff]
    %v164 = vld [vmem:[#allocation5 + $0x338] sm:$0xff]
    %v165 = vld [vmem:[#allocation5 + $0x340] sm:$0xff]
    %v166 = vld [vmem:[#allocation5 + $0x348] sm:$0xff]
    %v167 = vld [vmem:[#allocation5 + $0x350] sm:$0xff]
    %v168 = vld [vmem:[#allocation5 + $0x358] sm:$0xff]
    %v169 = vld [vmem:[#allocation5 + $0x360] sm:$0xff]
    %v170 = vld [vmem:[#allocation5 + $0x368] sm:$0xff]
    %v171 = vld [vmem:[#allocation5 + $0x370] sm:$0xff]
    %v172 = vld [vmem:[#allocation5 + $0x378] sm:$0xff]
    %v173 = vld [vmem:[#allocation5 + $0x380] sm:$0xff]
    %v174 = vld [vmem:[#allocation5 + $0x388] sm:$0xff]
    %v175 = vld [vmem:[#allocation5 + $0x390] sm:$0xff]
    %v176 = vld [vmem:[#allocation5 + $0x398] sm:$0xff]
    %v177 = vld [vmem:[#allocation5 + $0x3a0] sm:$0xff]
    %v178 = vld [vmem:[#allocation5 + $0x3a8] sm:$0xff]
    %v179 = vld [vmem:[#allocation5 + $0x3b0] sm:$0xff]
    %v180 = vld [vmem:[#allocation5 + $0x3b8] sm:$0xff]
    %v181 = vld [vmem:[#allocation5 + $0x3c0] sm:$0xff]
    %v182 = vld [vmem:[#allocation5 + $0x3c8] sm:$0xff]
    %v183 = vld [vmem:[#allocation5 + $0x3d0] sm:$0xff]
    %v184 = vld [vmem:[#allocation5 + $0x3d8] sm:$0xff]
    %v185 = vld [vmem:[#allocation5 + $0x3e0] sm:$0xff]
    %v186 = vld [vmem:[#allocation5 + $0x3e8] sm:$0xff]
    %v187 = vld [vmem:[#allocation5 + $0x3f0] sm:$0xff]
    %v188 = vld [vmem:[#allocation5 + $0x3f8] sm:$0xff]
    %v189 = vld [vmem:[#allocation5 + $0x400] sm:$0xff]
    %v190 = vld [vmem:[#allocation5 + $0x408] sm:$0xff]
    %v191 = vld [vmem:[#allocation5 + $0x410] sm:$0xff]
    %v192 = vld [vmem:[#allocation5 + $0x418] sm:$0xff]
    %v193 = vld [vmem:[#allocation5 + $0x420] sm:$0xff]
    %v194 = vld [vmem:[#allocation5 + $0x428] sm:$0xff]
    %v195 = vld [vmem:[#allocation5 + $0x430] sm:$0xff]
    %v196 = vld [vmem:[#allocation5 + $0x438] sm:$0xff]
    %v197 = vld [vmem:[#allocation5 + $0x440] sm:$0xff]
    %v198 = vld [vmem:[#allocation5 + $0x448] sm:$0xff]
    %v199 = vld [vmem:[#allocation5 + $0x450] sm:$0xff]
    %v200 = vld [vmem:[#allocation5 + $0x458] sm:$0xff]
    %v201 = vld [vmem:[#allocation5 + $0x460] sm:$0xff]
    %v202 = vld [vmem:[#allocation5 + $0x468] sm:$0xff]
    %v203 = vld [vmem:[#allocation5 + $0x470] sm:$0xff]
    %v204 = vld [vmem:[#allocation5 + $0x478] sm:$0xff]
    %v205 = vld [vmem:[#allocation5 + $0x480] sm:$0xff]
    %v206 = vld [vmem:[#allocation5 + $0x488] sm:$0xff]
    %v207 = vld [vmem:[#allocation5 + $0x490] sm:$0xff]
    %v208 = vld [vmem:[#allocation5 + $0x498] sm:$0xff]
    %v209 = vld [vmem:[#allocation5 + $0x4a0] sm:$0xff]
    %v210 = vld [vmem:[#allocation5 + $0x4a8] sm:$0xff]
    %v211 = vld [vmem:[#allocation5 + $0x4b0] sm:$0xff]
    %v212 = vld [vmem:[#allocation5 + $0x4b8] sm:$0xff]
    %v213 = vld [vmem:[#allocation5 + $0x4c0] sm:$0xff]
    %v214 = vld [vmem:[#allocation5 + $0x4c8] sm:$0xff]
    %v215 = vld [vmem:[#allocation5 + $0x4d0] sm:$0xff]
    %v216 = vld [vmem:[#allocation5 + $0x4d8] sm:$0xff]
    %v217 = vld [vmem:[#allocation5 + $0x4e0] sm:$0xff]
    %v218 = vld [vmem:[#allocation5 + $0x4e8] sm:$0xff]
    %v219 = vld [vmem:[#allocation5 + $0x4f0] sm:$0xff]
    %v220 = vld [vmem:[#allocation5 + $0x4f8] sm:$0xff]
    %v221 = vld [vmem:[#allocation5 + $0x500] sm:$0xff]
    %v222 = vld [vmem:[#allocation5 + $0x508] sm:$0xff]
    %v223 = vld [vmem:[#allocation5 + $0x510] sm:$0xff]
    %v224 = vld [vmem:[#allocation5 + $0x518] sm:$0xff]
    %v225 = vld [vmem:[#allocation5 + $0x520] sm:$0xff]
    %v226 = vld [vmem:[#allocation5 + $0x528] sm:$0xff]
    %v227 = vld [vmem:[#allocation5 + $0x530] sm:$0xff]
    %v228 = vld [vmem:[#allocation5 + $0x538] sm:$0xff]
    %v229 = vld [vmem:[#allocation5 + $0x540] sm:$0xff]
    %v230 = vld [vmem:[#allocation5 + $0x548] sm:$0xff]
    %v231 = vld [vmem:[#allocation5 + $0x550] sm:$0xff]
    %v232 = vld [vmem:[#allocation5 + $0x558] sm:$0xff]
    %v233 = vld [vmem:[#allocation5 + $0x560] sm:$0xff]
    %v234 = vld [vmem:[#allocation5 + $0x568] sm:$0xff]
    %v235 = vld [vmem:[#allocation5 + $0x570] sm:$0xff]
    %v236 = vld [vmem:[#allocation5 + $0x578] sm:$0xff]
    %v237 = vld [vmem:[#allocation5 + $0x580] sm:$0xff]
    %v238 = vld [vmem:[#allocation5 + $0x588] sm:$0xff]
    %v239 = vld [vmem:[#allocation5 + $0x590] sm:$0xff]
    %v240 = vld [vmem:[#allocation5 + $0x598] sm:$0xff]
    %v241 = vld [vmem:[#allocation5 + $0x5a0] sm:$0xff]
    %v242 = vld [vmem:[#allocation5 + $0x5a8] sm:$0xff]
    %v243 = vld [vmem:[#allocation5 + $0x5b0] sm:$0xff]
    %v244 = vld [vmem:[#allocation5 + $0x5b8] sm:$0xff]
    %v245 = vld [vmem:[#allocation5 + $0x5c0] sm:$0xff]
    %v246 = vld [vmem:[#allocation5 + $0x5c8] sm:$0xff]
    %v247 = vld [vmem:[#allocation5 + $0x5d0] sm:$0xff]
    %v248 = vld [vmem:[#allocation5 + $0x5d8] sm:$0xff]
    %v249 = vld [vmem:[#allocation5 + $0x5e0] sm:$0xff]
    %v250 = vld [vmem:[#allocation5 + $0x5e8] sm:$0xff]
    %v251 = vld [vmem:[#allocation5 + $0x5f0] sm:$0xff]
    %v252 = vld [vmem:[#allocation5 + $0x5f8] sm:$0xff]
    %v253 = vld [vmem:[#allocation5 + $0x600] sm:$0xff]
    %v254 = vld [vmem:[#allocation5 + $0x608] sm:$0xff]
    %v255 = vld [vmem:[#allocation5 + $0x610] sm:$0xff]
    %v256 = vld [vmem:[#allocation5 + $0x618] sm:$0xff]
    %v257 = vld [vmem:[#allocation5 + $0x620] sm:$0xff]
    %v258 = vld [vmem:[#allocation5 + $0x628] sm:$0xff]
    %v259 = vld [vmem:[#allocation5 + $0x630] sm:$0xff]
    %v260 = vld [vmem:[#allocation5 + $0x638] sm:$0xff]
    %v261 = vld [vmem:[#allocation5 + $0x640] sm:$0xff]
    %v262 = vld [vmem:[#allocation5 + $0x648] sm:$0xff]
    %v263 = vld [vmem:[#allocation5 + $0x650] sm:$0xff]
    %v264 = vld [vmem:[#allocation5 + $0x658] sm:$0xff]
    %v265 = vld [vmem:[#allocation5 + $0x660] sm:$0xff]
    %v266 = vld [vmem:[#allocation5 + $0x668] sm:$0xff]
    %v267 = vld [vmem:[#allocation5 + $0x670] sm:$0xff]
    %v268 = vld [vmem:[#allocation5 + $0x678] sm:$0xff]
    %v269 = vld [vmem:[#allocation5 + $0x680] sm:$0xff]
    %v270 = vld [vmem:[#allocation5 + $0x688] sm:$0xff]
    %v271 = vld [vmem:[#allocation5 + $0x690] sm:$0xff]
    %v272 = vld [vmem:[#allocation5 + $0x698] sm:$0xff]
    %v273 = vld [vmem:[#allocation5 + $0x6a0] sm:$0xff]
    %v274 = vld [vmem:[#allocation5 + $0x6a8] sm:$0xff]
    %v275 = vld [vmem:[#allocation5 + $0x6b0] sm:$0xff]
    %v276 = vld [vmem:[#allocation5 + $0x6b8] sm:$0xff]
    %v277 = vld [vmem:[#allocation5 + $0x6c0] sm:$0xff]
    %v278 = vld [vmem:[#allocation5 + $0x6c8] sm:$0xff]
    %v279 = vld [vmem:[#allocation5 + $0x6d0] sm:$0xff]
    %v280 = vld [vmem:[#allocation5 + $0x6d8] sm:$0xff]
    %v281 = vld [vmem:[#allocation5 + $0x6e0] sm:$0xff]
    %v282 = vld [vmem:[#allocation5 + $0x6e8] sm:$0xff]
    %v283 = vld [vmem:[#allocation5 + $0x6f0] sm:$0xff]
    %v284 = vld [vmem:[#allocation5 + $0x6f8] sm:$0xff]
    %v285 = vld [vmem:[#allocation5 + $0x700] sm:$0xff]
    %v286 = vld [vmem:[#allocation5 + $0x708] sm:$0xff]
    %v287 = vld [vmem:[#allocation5 + $0x710] sm:$0xff]
    %v288 = vld [vmem:[#allocation5 + $0x718] sm:$0xff]
    %v289 = vld [vmem:[#allocation5 + $0x720] sm:$0xff]
    %v290 = vld [vmem:[#allocation5 + $0x728] sm:$0xff]
    %v291 = vld [vmem:[#allocation5 + $0x730] sm:$0xff]
    %v292 = vld [vmem:[#allocation5 + $0x738] sm:$0xff]
    %v293 = vld [vmem:[#allocation5 + $0x740] sm:$0xff]
    %v294 = vld [vmem:[#allocation5 + $0x748] sm:$0xff]
    %v295 = vld [vmem:[#allocation5 + $0x750] sm:$0xff]
    %v296 = vld [vmem:[#allocation5 + $0x758] sm:$0xff]
    %v297 = vld [vmem:[#allocation5 + $0x760] sm:$0xff]
    %v298 = vld [vmem:[#allocation5 + $0x768] sm:$0xff]
    %v299 = vld [vmem:[#allocation5 + $0x770] sm:$0xff]
    %v300 = vld [vmem:[#allocation5 + $0x778] sm:$0xff]
    %v301 = vld [vmem:[#allocation5 + $0x780] sm:$0xff]
    %v302 = vld [vmem:[#allocation5 + $0x788] sm:$0xff]
    %v303 = vld [vmem:[#allocation5 + $0x790] sm:$0xff]
    %v304 = vld [vmem:[#allocation5 + $0x798] sm:$0xff]
    %v305 = vld [vmem:[#allocation5 + $0x7a0] sm:$0xff]
    %v306 = vld [vmem:[#allocation5 + $0x7a8] sm:$0xff]
    %v307 = vld [vmem:[#allocation5 + $0x7b0] sm:$0xff]
    %v308 = vld [vmem:[#allocation5 + $0x7b8] sm:$0xff]
    %v309 = vld [vmem:[#allocation5 + $0x7c0] sm:$0xff]
    %v310 = vld [vmem:[#allocation5 + $0x7c8] sm:$0xff]
    %v311 = vld [vmem:[#allocation5 + $0x7d0] sm:$0xff]
    %v312 = vld [vmem:[#allocation5 + $0x7d8] sm:$0xff]
    %v313 = vld [vmem:[#allocation5 + $0x7e0] sm:$0xff]
    %v314 = vld [vmem:[#allocation5 + $0x7e8] sm:$0xff]
    %v315 = vld [vmem:[#allocation5 + $0x7f0] sm:$0xff]
    %v316 = vld [vmem:[#allocation5 + $0x7f8] sm:$0xff]
    %v317 = vld [vmem:[#allocation5 + $0x800] sm:$0xff]
    %v318 = vld [vmem:[#allocation5 + $0x808] sm:$0xff]
    %v319 = vld [vmem:[#allocation5 + $0x810] sm:$0xff]
    %v320 = vld [vmem:[#allocation5 + $0x818] sm:$0xff]
    %v321 = vld [vmem:[#allocation5 + $0x820] sm:$0xff]
    %v322 = vld [vmem:[#allocation5 + $0x828] sm:$0xff]
    %v323 = vld [vmem:[#allocation5 + $0x830] sm:$0xff]
    %v324 = vld [vmem:[#allocation5 + $0x838] sm:$0xff]
    %v325 = vld [vmem:[#allocation5 + $0x840] sm:$0xff]
    %v326 = vld [vmem:[#allocation5 + $0x848] sm:$0xff]
    %v327 = vld [vmem:[#allocation5 + $0x850] sm:$0xff]
    %v328 = vld [vmem:[#allocation5 + $0x858] sm:$0xff]
    %v329 = vld [vmem:[#allocation5 + $0x860] sm:$0xff]
    %v330 = vld [vmem:[#allocation5 + $0x868] sm:$0xff]
    %v331 = vld [vmem:[#allocation5 + $0x870] sm:$0xff]
    %v332 = vld [vmem:[#allocation5 + $0x878] sm:$0xff]
    %v333 = vld [vmem:[#allocation5 + $0x880] sm:$0xff]
    %v334 = vld [vmem:[#allocation5 + $0x888] sm:$0xff]
    %v335 = vld [vmem:[#allocation5 + $0x890] sm:$0xff]
    %v336 = vld [vmem:[#allocation5 + $0x898] sm:$0xff]
    %v337 = vld [vmem:[#allocation5 + $0x8a0] sm:$0xff]
    %v338 = vld [vmem:[#allocation5 + $0x8a8] sm:$0xff]
    %v339 = vld [vmem:[#allocation5 + $0x8b0] sm:$0xff]
    %v340 = vld [vmem:[#allocation5 + $0x8b8] sm:$0xff]
    %v341 = vld [vmem:[#allocation5 + $0x8c0] sm:$0xff]
    %v342 = vld [vmem:[#allocation5 + $0x8c8] sm:$0xff]
    %v343 = vld [vmem:[#allocation5 + $0x8d0] sm:$0xff]
    %v344 = vld [vmem:[#allocation5 + $0x8d8] sm:$0xff]
    %v345 = vld [vmem:[#allocation5 + $0x8e0] sm:$0xff]
    %v346 = vld [vmem:[#allocation5 + $0x8e8] sm:$0xff]
    %v347 = vld [vmem:[#allocation5 + $0x8f0] sm:$0xff]
    %v348 = vld [vmem:[#allocation5 + $0x8f8] sm:$0xff]
    %v349 = vld [vmem:[#allocation5 + $0x900] sm:$0xff]
    %v350 = vld [vmem:[#allocation5 + $0x908] sm:$0xff]
    %v351 = vld [vmem:[#allocation5 + $0x910] sm:$0xff]
    %v352 = vld [vmem:[#allocation5 + $0x918] sm:$0xff]
    %v353 = vld [vmem:[#allocation5 + $0x920] sm:$0xff]
    %v354 = vld [vmem:[#allocation5 + $0x928] sm:$0xff]
    %v355 = vld [vmem:[#allocation5 + $0x930] sm:$0xff]
    %v356 = vld [vmem:[#allocation5 + $0x938] sm:$0xff]
    %v357 = vld [vmem:[#allocation5 + $0x940] sm:$0xff]
    %v358 = vld [vmem:[#allocation5 + $0x948] sm:$0xff]
    %v359 = vld [vmem:[#allocation5 + $0x950] sm:$0xff]
    %v360 = vld [vmem:[#allocation5 + $0x958] sm:$0xff]
    %v361 = vld [vmem:[#allocation5 + $0x960] sm:$0xff]
    %v362 = vld [vmem:[#allocation5 + $0x968] sm:$0xff]
    %v363 = vld [vmem:[#allocation5 + $0x970] sm:$0xff]
    %v364 = vld [vmem:[#allocation5 + $0x978] sm:$0xff]
    %v365 = vld [vmem:[#allocation5 + $0x980] sm:$0xff]
    %v366 = vld [vmem:[#allocation5 + $0x988] sm:$0xff]
    %v367 = vld [vmem:[#allocation5 + $0x990] sm:$0xff]
    %v368 = vld [vmem:[#allocation5 + $0x998] sm:$0xff]
    %v369 = vld [vmem:[#allocation5 + $0x9a0] sm:$0xff]
    %v370 = vld [vmem:[#allocation5 + $0x9a8] sm:$0xff]
    %v371 = vld [vmem:[#allocation5 + $0x9b0] sm:$0xff]
    %v372 = vld [vmem:[#allocation5 + $0x9b8] sm:$0xff]
    %v373 = vld [vmem:[#allocation5 + $0x9c0] sm:$0xff]
    %v374 = vld [vmem:[#allocation5 + $0x9c8] sm:$0xff]
    %v375 = vld [vmem:[#allocation5 + $0x9d0] sm:$0xff]
    %v376 = vld [vmem:[#allocation5 + $0x9d8] sm:$0xff]
    %v377 = vld [vmem:[#allocation5 + $0x9e0] sm:$0xff]
    %v378 = vld [vmem:[#allocation5 + $0x9e8] sm:$0xff]
    %v379 = vld [vmem:[#allocation5 + $0x9f0] sm:$0xff]
    %v380 = vld [vmem:[#allocation5 + $0x9f8] sm:$0xff]
    %v381 = vld [vmem:[#allocation5 + $0xa00] sm:$0xff]
    %v382 = vld [vmem:[#allocation5 + $0xa08] sm:$0xff]
    %v383 = vld [vmem:[#allocation5 + $0xa10] sm:$0xff]
    %v384 = vld [vmem:[#allocation5 + $0xa18] sm:$0xff]
    %v385 = vld [vmem:[#allocation5 + $0xa20] sm:$0xff]
    %v386 = vld [vmem:[#allocation5 + $0xa28] sm:$0xff]
    %v387 = vld [vmem:[#allocation5 + $0xa30] sm:$0xff]
    %v388 = vld [vmem:[#allocation5 + $0xa38] sm:$0xff]
    %v389 = vld [vmem:[#allocation5 + $0xa40] sm:$0xff]
    %v390 = vld [vmem:[#allocation5 + $0xa48] sm:$0xff]
    %v391 = vld [vmem:[#allocation5 + $0xa50] sm:$0xff]
    %v392 = vld [vmem:[#allocation5 + $0xa58] sm:$0xff]
    %v393 = vld [vmem:[#allocation5 + $0xa60] sm:$0xff]
    %v394 = vld [vmem:[#allocation5 + $0xa68] sm:$0xff]
    %v395 = vld [vmem:[#allocation5 + $0xa70] sm:$0xff]
    %v396 = vld [vmem:[#allocation5 + $0xa78] sm:$0xff]
    %v397 = vld [vmem:[#allocation5 + $0xa80] sm:$0xff]
    %v398 = vld [vmem:[#allocation5 + $0xa88] sm:$0xff]
    %v399 = vld [vmem:[#allocation5 + $0xa90] sm:$0xff]
    %v400 = vld [vmem:[#allocation5 + $0xa98] sm:$0xff]
    %v401 = vld [vmem:[#allocation5 + $0xaa0] sm:$0xff]
    %v402 = vld [vmem:[#allocation5 + $0xaa8] sm:$0xff]
    %v403 = vld [vmem:[#allocation5 + $0xab0] sm:$0xff]
    %v404 = vld [vmem:[#allocation5 + $0xab8] sm:$0xff]
    %v405 = vld [vmem:[#allocation5 + $0xac0] sm:$0xff]
    %v406 = vld [vmem:[#allocation5 + $0xac8] sm:$0xff]
    %v407 = vld [vmem:[#allocation5 + $0xad0] sm:$0xff]
    %v408 = vld [vmem:[#allocation5 + $0xad8] sm:$0xff]
    %v409 = vld [vmem:[#allocation5 + $0xae0] sm:$0xff]
    %v410 = vld [vmem:[#allocation5 + $0xae8] sm:$0xff]
    %v411 = vld [vmem:[#allocation5 + $0xaf0] sm:$0xff]
    %v412 = vld [vmem:[#allocation5 + $0xaf8] sm:$0xff]
    %v413 = vld [vmem:[#allocation5 + $0xb00] sm:$0xff]
    %v414 = vld [vmem:[#allocation5 + $0xb08] sm:$0xff]
    %v415 = vld [vmem:[#allocation5 + $0xb10] sm:$0xff]
    %v416 = vld [vmem:[#allocation5 + $0xb18] sm:$0xff]
    %v417 = vld [vmem:[#allocation5 + $0xb20] sm:$0xff]
    %v418 = vld [vmem:[#allocation5 + $0xb28] sm:$0xff]
    %v419 = vld [vmem:[#allocation5 + $0xb30] sm:$0xff]
    %v420 = vld [vmem:[#allocation5 + $0xb38] sm:$0xff]
    %v421 = vld [vmem:[#allocation5 + $0xb40] sm:$0xff]
    %v422 = vld [vmem:[#allocation5 + $0xb48] sm:$0xff]
    %v423 = vld [vmem:[#allocation5 + $0xb50] sm:$0xff]
    %v424 = vld [vmem:[#allocation5 + $0xb58] sm:$0xff]
    %v425 = vld [vmem:[#allocation5 + $0xb60] sm:$0xff]
    %v426 = vld [vmem:[#allocation5 + $0xb68] sm:$0xff]
    %v427 = vld [vmem:[#allocation5 + $0xb70] sm:$0xff]
    %v428 = vld [vmem:[#allocation5 + $0xb78] sm:$0xff]
    %v429 = vld [vmem:[#allocation5 + $0xb80] sm:$0xff]
    %v430 = vld [vmem:[#allocation5 + $0xb88] sm:$0xff]
    %v431 = vld [vmem:[#allocation5 + $0xb90] sm:$0xff]
    %v432 = vld [vmem:[#allocation5 + $0xb98] sm:$0xff]
    %v433 = vld [vmem:[#allocation5 + $0xba0] sm:$0xff]
    %v434 = vld [vmem:[#allocation5 + $0xba8] sm:$0xff]
    %v435 = vld [vmem:[#allocation5 + $0xbb0] sm:$0xff]
    %v436 = vld [vmem:[#allocation5 + $0xbb8] sm:$0xff]
    %v437 = vld [vmem:[#allocation5 + $0xbc0] sm:$0xff]
    %v438 = vld [vmem:[#allocation5 + $0xbc8] sm:$0xff]
    %v439 = vld [vmem:[#allocation5 + $0xbd0] sm:$0xff]
    %v440 = vld [vmem:[#allocation5 + $0xbd8] sm:$0xff]
    %v441 = vld [vmem:[#allocation5 + $0xbe0] sm:$0xff]
    %v442 = vld [vmem:[#allocation5 + $0xbe8] sm:$0xff]
    %v443 = vld [vmem:[#allocation5 + $0xbf0] sm:$0xff]
    %v444 = vld [vmem:[#allocation5 + $0xbf8] sm:$0xff]
    %v445 = vld [vmem:[#allocation5 + $0xc00] sm:$0xff]
    %v446 = vld [vmem:[#allocation5 + $0xc08] sm:$0xff]
    %v447 = vld [vmem:[#allocation5 + $0xc10] sm:$0xff]
    %v448 = vld [vmem:[#allocation5 + $0xc18] sm:$0xff]
    %v449 = vld [vmem:[#allocation5 + $0xc20] sm:$0xff]
    %v450 = vld [vmem:[#allocation5 + $0xc28] sm:$0xff]
    %v451 = vld [vmem:[#allocation5 + $0xc30] sm:$0xff]
    %v452 = vld [vmem:[#allocation5 + $0xc38] sm:$0xff]
    %v453 = vld [vmem:[#allocation5 + $0xc40] sm:$0xff]
    %v454 = vld [vmem:[#allocation5 + $0xc48] sm:$0xff]
    %v455 = vld [vmem:[#allocation5 + $0xc50] sm:$0xff]
    %v456 = vld [vmem:[#allocation5 + $0xc58] sm:$0xff]
    %v457 = vld [vmem:[#allocation5 + $0xc60] sm:$0xff]
    %v458 = vld [vmem:[#allocation5 + $0xc68] sm:$0xff]
    %v459 = vld [vmem:[#allocation5 + $0xc70] sm:$0xff]
    %v460 = vld [vmem:[#allocation5 + $0xc78] sm:$0xff]
    %v461 = vld [vmem:[#allocation5 + $0xc80] sm:$0xff]
    %v462 = vld [vmem:[#allocation5 + $0xc88] sm:$0xff]
    %v463 = vld [vmem:[#allocation5 + $0xc90] sm:$0xff]
    %v464 = vld [vmem:[#allocation5 + $0xc98] sm:$0xff]
    %v465 = vld [vmem:[#allocation5 + $0xca0] sm:$0xff]
    %v466 = vld [vmem:[#allocation5 + $0xca8] sm:$0xff]
    %v467 = vld [vmem:[#allocation5 + $0xcb0] sm:$0xff]
    %v468 = vld [vmem:[#allocation5 + $0xcb8] sm:$0xff]
    %v469 = vld [vmem:[#allocation5 + $0xcc0] sm:$0xff]
    %v470 = vld [vmem:[#allocation5 + $0xcc8] sm:$0xff]
    %v471 = vld [vmem:[#allocation5 + $0xcd0] sm:$0xff]
    %v472 = vld [vmem:[#allocation5 + $0xcd8] sm:$0xff]
    %v473 = vld [vmem:[#allocation5 + $0xce0] sm:$0xff]
    %v474 = vld [vmem:[#allocation5 + $0xce8] sm:$0xff]
    %v475 = vld [vmem:[#allocation5 + $0xcf0] sm:$0xff]
    %v476 = vld [vmem:[#allocation5 + $0xcf8] sm:$0xff]
    %v477 = vld [vmem:[#allocation5 + $0xd00] sm:$0xff]
    %v478 = vld [vmem:[#allocation5 + $0xd08] sm:$0xff]
    %v479 = vld [vmem:[#allocation5 + $0xd10] sm:$0xff]
    %v480 = vld [vmem:[#allocation5 + $0xd18] sm:$0xff]
    %v481 = vld [vmem:[#allocation5 + $0xd20] sm:$0xff]
    %v482 = vld [vmem:[#allocation5 + $0xd28] sm:$0xff]
    %v483 = vld [vmem:[#allocation5 + $0xd30] sm:$0xff]
    %v484 = vld [vmem:[#allocation5 + $0xd38] sm:$0xff]
    %v485 = vld [vmem:[#allocation5 + $0xd40] sm:$0xff]
    %v486 = vld [vmem:[#allocation5 + $0xd48] sm:$0xff]
    %v487 = vld [vmem:[#allocation5 + $0xd50] sm:$0xff]
    %v488 = vld [vmem:[#allocation5 + $0xd58] sm:$0xff]
    %v489 = vld [vmem:[#allocation5 + $0xd60] sm:$0xff]
    %v490 = vld [vmem:[#allocation5 + $0xd68] sm:$0xff]
    %v491 = vld [vmem:[#allocation5 + $0xd70] sm:$0xff]
    %v492 = vld [vmem:[#allocation5 + $0xd78] sm:$0xff]
    %v493 = vld [vmem:[#allocation5 + $0xd80] sm:$0xff]
    %v494 = vld [vmem:[#allocation5 + $0xd88] sm:$0xff]
    %v495 = vld [vmem:[#allocation5 + $0xd90] sm:$0xff]
    %v496 = vld [vmem:[#allocation5 + $0xd98] sm:$0xff]
    %v497 = vld [vmem:[#allocation5 + $0xda0] sm:$0xff]
    %v498 = vld [vmem:[#allocation5 + $0xda8] sm:$0xff]
    %v499 = vld [vmem:[#allocation5 + $0xdb0] sm:$0xff]
    %v500 = vld [vmem:[#allocation5 + $0xdb8] sm:$0xff]
    %v501 = vld [vmem:[#allocation5 + $0xdc0] sm:$0xff]
    %v502 = vld [vmem:[#allocation5 + $0xdc8] sm:$0xff]
    %v503 = vld [vmem:[#allocation5 + $0xdd0] sm:$0xff]
    %v504 = vld [vmem:[#allocation5 + $0xdd8] sm:$0xff]
    %v505 = vld [vmem:[#allocation5 + $0xde0] sm:$0xff]
    %v506 = vld [vmem:[#allocation5 + $0xde8] sm:$0xff]
    %v507 = vld [vmem:[#allocation5 + $0xdf0] sm:$0xff]
    %v508 = vld [vmem:[#allocation5 + $0xdf8] sm:$0xff]
    %v509 = vld [vmem:[#allocation5 + $0xe00] sm:$0xff]
    %v510 = vld [vmem:[#allocation5 + $0xe08] sm:$0xff]
    %v511 = vld [vmem:[#allocation5 + $0xe10] sm:$0xff]
    %v512 = vld [vmem:[#allocation5 + $0xe18] sm:$0xff]
    %v513 = vld [vmem:[#allocation5 + $0xe20] sm:$0xff]
    %v514 = vld [vmem:[#allocation5 + $0xe28] sm:$0xff]
    %v515 = vld [vmem:[#allocation5 + $0xe30] sm:$0xff]
    %v516 = vld [vmem:[#allocation5 + $0xe38] sm:$0xff]
    %v517 = vld [vmem:[#allocation5 + $0xe40] sm:$0xff]
    %v518 = vld [vmem:[#allocation5 + $0xe48] sm:$0xff]
    %v519 = vld [vmem:[#allocation5 + $0xe50] sm:$0xff]
    %v520 = vld [vmem:[#allocation5 + $0xe58] sm:$0xff]
    %v521 = vld [vmem:[#allocation5 + $0xe60] sm:$0xff]
    %v522 = vld [vmem:[#allocation5 + $0xe68] sm:$0xff]
    %v523 = vld [vmem:[#allocation5 + $0xe70] sm:$0xff]
    %v524 = vld [vmem:[#allocation5 + $0xe78] sm:$0xff]
    %v525 = vld [vmem:[#allocation5 + $0xe80] sm:$0xff]
    %v526 = vld [vmem:[#allocation5 + $0xe88] sm:$0xff]
    %v527 = vld [vmem:[#allocation5 + $0xe90] sm:$0xff]
    %v528 = vld [vmem:[#allocation5 + $0xe98] sm:$0xff]
    %v529 = vld [vmem:[#allocation5 + $0xea0] sm:$0xff]
    %v530 = vld [vmem:[#allocation5 + $0xea8] sm:$0xff]
    %v531 = vld [vmem:[#allocation5 + $0xeb0] sm:$0xff]
    %v532 = vld [vmem:[#allocation5 + $0xeb8] sm:$0xff]
    %v533 = vld [vmem:[#allocation5 + $0xec0] sm:$0xff]
    %v534 = vld [vmem:[#allocation5 + $0xec8] sm:$0xff]
    %v535 = vld [vmem:[#allocation5 + $0xed0] sm:$0xff]
    %v536 = vld [vmem:[#allocation5 + $0xed8] sm:$0xff]
    %v537 = vld [vmem:[#allocation5 + $0xee0] sm:$0xff]
    %v538 = vld [vmem:[#allocation5 + $0xee8] sm:$0xff]
    %v539 = vld [vmem:[#allocation5 + $0xef0] sm:$0xff]
    %v540 = vld [vmem:[#allocation5 + $0xef8] sm:$0xff]
    %v541 = vld [vmem:[#allocation5 + $0xf00] sm:$0xff]
    %v542 = vld [vmem:[#allocation5 + $0xf08] sm:$0xff]
    %v543 = vld [vmem:[#allocation5 + $0xf10] sm:$0xff]
    %v544 = vld [vmem:[#allocation5 + $0xf18] sm:$0xff]
    %v545 = vld [vmem:[#allocation5 + $0xf20] sm:$0xff]
    %v546 = vld [vmem:[#allocation5 + $0xf28] sm:$0xff]
    %v547 = vld [vmem:[#allocation5 + $0xf30] sm:$0xff]
    %v548 = vld [vmem:[#allocation5 + $0xf38] sm:$0xff]
    %v549 = vld [vmem:[#allocation5 + $0xf40] sm:$0xff]
    %v550 = vld [vmem:[#allocation5 + $0xf48] sm:$0xff]
    %v551 = vld [vmem:[#allocation5 + $0xf50] sm:$0xff]
    %v552 = vld [vmem:[#allocation5 + $0xf58] sm:$0xff]
    %v553 = vld [vmem:[#allocation5 + $0xf60] sm:$0xff]
    %v554 = vld [vmem:[#allocation5 + $0xf68] sm:$0xff]
    %v555 = vld [vmem:[#allocation5 + $0xf70] sm:$0xff]
    %v556 = vld [vmem:[#allocation5 + $0xf78] sm:$0xff]
    %v557 = vld [vmem:[#allocation5 + $0xf80] sm:$0xff]
    %v558 = vld [vmem:[#allocation5 + $0xf88] sm:$0xff]
    %v559 = vld [vmem:[#allocation5 + $0xf90] sm:$0xff]
    %v560 = vld [vmem:[#allocation5 + $0xf98] sm:$0xff]
    %v561 = vld [vmem:[#allocation5 + $0xfa0] sm:$0xff]
    %v562 = vld [vmem:[#allocation5 + $0xfa8] sm:$0xff]
    %v563 = vld [vmem:[#allocation5 + $0xfb0] sm:$0xff]
    %v564 = vld [vmem:[#allocation5 + $0xfb8] sm:$0xff]
    %v565 = vld [vmem:[#allocation5 + $0xfc0] sm:$0xff]
    %v566 = vld [vmem:[#allocation5 + $0xfc8] sm:$0xff]
    %v567 = vld [vmem:[#allocation5 + $0xfd0] sm:$0xff]
    %v568 = vld [vmem:[#allocation5 + $0xfd8] sm:$0xff]
    %v569 = vld [vmem:[#allocation5 + $0xfe0] sm:$0xff]
    %v570 = vld [vmem:[#allocation5 + $0xfe8] sm:$0xff]
    %v571 = vld [vmem:[#allocation5 + $0xff0] sm:$0xff]
    %v572 = vld [vmem:[#allocation5 + $0xff8] sm:$0xff]
    %v573 = vld [vmem:[#allocation5 + $0x1000] sm:$0xff]
    %v574 = vld [vmem:[#allocation5 + $0x1008] sm:$0xff]
    %v575 = vld [vmem:[#allocation5 + $0x1010] sm:$0xff]
    %v576 = vld [vmem:[#allocation5 + $0x1018] sm:$0xff]
    %v577 = vld [vmem:[#allocation5 + $0x1020] sm:$0xff]
    %v578 = vld [vmem:[#allocation5 + $0x1028] sm:$0xff]
    %v579 = vld [vmem:[#allocation5 + $0x1030] sm:$0xff]
    %v580 = vld [vmem:[#allocation5 + $0x1038] sm:$0xff]
    %v581 = vld [vmem:[#allocation5 + $0x1040] sm:$0xff]
    %v582 = vld [vmem:[#allocation5 + $0x1048] sm:$0xff]
    %v583 = vld [vmem:[#allocation5 + $0x1050] sm:$0xff]
    %v584 = vld [vmem:[#allocation5 + $0x1058] sm:$0xff]
    %v585 = vld [vmem:[#allocation5 + $0x1060] sm:$0xff]
    %v586 = vld [vmem:[#allocation5 + $0x1068] sm:$0xff]
    %v587 = vld [vmem:[#allocation5 + $0x1070] sm:$0xff]
    %v588 = vld [vmem:[#allocation5 + $0x1078] sm:$0xff]
    %v589 = vld [vmem:[#allocation5 + $0x1080] sm:$0xff]
    %v590 = vld [vmem:[#allocation5 + $0x1088] sm:$0xff]
    %v591 = vld [vmem:[#allocation5 + $0x1090] sm:$0xff]
    %v592 = vld [vmem:[#allocation5 + $0x1098] sm:$0xff]
    %v593 = vld [vmem:[#allocation5 + $0x10a0] sm:$0xff]
    %v594 = vld [vmem:[#allocation5 + $0x10a8] sm:$0xff]
    %v595 = vld [vmem:[#allocation5 + $0x10b0] sm:$0xff]
    %v596 = vld [vmem:[#allocation5 + $0x10b8] sm:$0xff]
    %v597 = vld [vmem:[#allocation5 + $0x10c0] sm:$0xff]
    %v598 = vld [vmem:[#allocation5 + $0x10c8] sm:$0xff]
    %v599 = vld [vmem:[#allocation5 + $0x10d0] sm:$0xff]
    %v600 = vld [vmem:[#allocation5 + $0x10d8] sm:$0xff]
    %v601 = vld [vmem:[#allocation5 + $0x10e0] sm:$0xff]
    %v602 = vld [vmem:[#allocation5 + $0x10e8] sm:$0xff]
    %v603 = vld [vmem:[#allocation5 + $0x10f0] sm:$0xff]
    %v604 = vld [vmem:[#allocation5 + $0x10f8] sm:$0xff]
    %v605 = vld [vmem:[#allocation5 + $0x1100] sm:$0xff]
    %v606 = vld [vmem:[#allocation5 + $0x1108] sm:$0xff]
    %v607 = vld [vmem:[#allocation5 + $0x1110] sm:$0xff]
    %v608 = vld [vmem:[#allocation5 + $0x1118] sm:$0xff]
    %v609 = vld [vmem:[#allocation5 + $0x1120] sm:$0xff]
    %v610 = vld [vmem:[#allocation5 + $0x1128] sm:$0xff]
    %v611 = vld [vmem:[#allocation5 + $0x1130] sm:$0xff]
    %v612 = vld [vmem:[#allocation5 + $0x1138] sm:$0xff]
    %v613 = vld [vmem:[#allocation5 + $0x1140] sm:$0xff]
    %v614 = vld [vmem:[#allocation5 + $0x1148] sm:$0xff]
    %v615 = vld [vmem:[#allocation5 + $0x1150] sm:$0xff]
    %v616 = vld [vmem:[#allocation5 + $0x1158] sm:$0xff]
    %v617 = vld [vmem:[#allocation5 + $0x1160] sm:$0xff]
    %v618 = vld [vmem:[#allocation5 + $0x1168] sm:$0xff]
    %v619 = vld [vmem:[#allocation5 + $0x1170] sm:$0xff]
    %v620 = vld [vmem:[#allocation5 + $0x1178] sm:$0xff]
    %v621 = vld [vmem:[#allocation5 + $0x1180] sm:$0xff]
    %v622 = vld [vmem:[#allocation5 + $0x1188] sm:$0xff]
    %v623 = vld [vmem:[#allocation5 + $0x1190] sm:$0xff]
    %v624 = vld [vmem:[#allocation5 + $0x1198] sm:$0xff]
    %v625 = vld [vmem:[#allocation5 + $0x11a0] sm:$0xff]
    %v626 = vld [vmem:[#allocation5 + $0x11a8] sm:$0xff]
    %v627 = vld [vmem:[#allocation5 + $0x11b0] sm:$0xff]
    %v628 = vld [vmem:[#allocation5 + $0x11b8] sm:$0xff]
    %v629 = vld [vmem:[#allocation5 + $0x11c0] sm:$0xff]
    %v630 = vld [vmem:[#allocation5 + $0x11c8] sm:$0xff]
    %v631 = vld [vmem:[#allocation5 + $0x11d0] sm:$0xff]
    %v632 = vld [vmem:[#allocation5 + $0x11d8] sm:$0xff]
    %v633 = vld [vmem:[#allocation5 + $0x11e0] sm:$0xff]
    %v634 = vld [vmem:[#allocation5 + $0x11e8] sm:$0xff]
    %v635 = vld [vmem:[#allocation5 + $0x11f0] sm:$0xff]
    %v636 = vld [vmem:[#allocation5 + $0x11f8] sm:$0xff]
    %v646 = vunpack.c.l.b16 %v52
    %v647 = vunpack.c.h.b16 %v52
    %v648 = vunpack.c.l.b16 %v53
    %v649 = vunpack.c.h.b16 %v53
    %v650 = vunpack.c.l.b16 %v54
    %v651 = vunpack.c.h.b16 %v54
    %v652 = vunpack.c.l.b16 %v55
    %v653 = vunpack.c.h.b16 %v55
    %v654 = vunpack.c.l.b16 %v56
    %v655 = vunpack.c.h.b16 %v56
    %v656 = vunpack.c.l.b16 %v57
    %v657 = vunpack.c.h.b16 %v57
    %v658 = vunpack.c.l.b16 %v58
    %v659 = vunpack.c.h.b16 %v58
    %v660 = vunpack.c.l.b16 %v59
    %v661 = vunpack.c.h.b16 %v59
    %v662 = vunpack.c.l.b16 %v60
    %v663 = vunpack.c.h.b16 %v60
    %v664 = vpack.c.b16 %v646, %v646
    %v665 = vpack.c.b16 %v647, %v647
    %v666 = vpack.c.b16 %v648, %v648
    %v667 = vpack.c.b16 %v649, %v649
    %v668 = vpack.c.b16 %v650, %v650
    %v669 = vpack.c.b16 %v651, %v651
    %v670 = vpack.c.b16 %v652, %v652
    %v671 = vpack.c.b16 %v653, %v653
    %v672 = vpack.c.b16 %v654, %v654
    %v673 = vpack.c.b16 %v655, %v655
    %v674 = vpack.c.b16 %v656, %v656
    %v675 = vpack.c.b16 %v657, %v657
    %v676 = vpack.c.b16 %v658, %v658
    %v677 = vpack.c.b16 %v659, %v659
    %v678 = vpack.c.b16 %v660, %v660
    %v679 = vpack.c.b16 %v661, %v661
    %v680 = vpack.c.b16 %v662, %v662
    %v681 = vpack.c.b16 %v663, %v663
    %v1276 = vunpack.c.l.b16 %v61
    %v1277 = vunpack.c.h.b16 %v61
    %v1278 = vunpack.c.l.b16 %v62
    %v1279 = vunpack.c.h.b16 %v62
    %v1280 = vunpack.c.l.b16 %v63
    %v1281 = vunpack.c.h.b16 %v63
    %v1282 = vunpack.c.l.b16 %v64
    %v1283 = vunpack.c.h.b16 %v64
    %v1284 = vunpack.c.l.b16 %v65
    %v1285 = vunpack.c.h.b16 %v65
    %v1286 = vunpack.c.l.b16 %v66
    %v1287 = vunpack.c.h.b16 %v66
    %v1288 = vunpack.c.l.b16 %v67
    %v1289 = vunpack.c.h.b16 %v67
    %v1290 = vunpack.c.l.b16 %v68
    %v1291 = vunpack.c.h.b16 %v68
    %v1292 = vunpack.c.l.b16 %v69
    %v1293 = vunpack.c.h.b16 %v69
    %v1294 = vunpack.c.l.b16 %v70
    %v1295 = vunpack.c.h.b16 %v70
    %v1296 = vunpack.c.l.b16 %v71
    %v1297 = vunpack.c.h.b16 %v71
    %v1298 = vunpack.c.l.b16 %v72
    %v1299 = vunpack.c.h.b16 %v72
    %v1300 = vunpack.c.l.b16 %v73
    %v1301 = vunpack.c.h.b16 %v73
    %v1302 = vunpack.c.l.b16 %v74
    %v1303 = vunpack.c.h.b16 %v74
    %v1304 = vunpack.c.l.b16 %v75
    %v1305 = vunpack.c.h.b16 %v75
    %v1306 = vunpack.c.l.b16 %v76
    %v1307 = vunpack.c.h.b16 %v76
    %v1308 = vunpack.c.l.b16 %v77
    %v1309 = vunpack.c.h.b16 %v77
    %v1310 = vunpack.c.l.b16 %v78
    %v1311 = vunpack.c.h.b16 %v78
    %v1312 = vunpack.c.l.b16 %v79
    %v1313 = vunpack.c.h.b16 %v79
    %v1314 = vunpack.c.l.b16 %v80
    %v1315 = vunpack.c.h.b16 %v80
    %v1316 = vunpack.c.l.b16 %v81
    %v1317 = vunpack.c.h.b16 %v81
    %v1318 = vunpack.c.l.b16 %v82
    %v1319 = vunpack.c.h.b16 %v82
    %v1320 = vunpack.c.l.b16 %v83
    %v1321 = vunpack.c.h.b16 %v83
    %v1322 = vunpack.c.l.b16 %v84
    %v1323 = vunpack.c.h.b16 %v84
    %v1324 = vunpack.c.l.b16 %v85
    %v1325 = vunpack.c.h.b16 %v85
    %v1326 = vunpack.c.l.b16 %v86
    %v1327 = vunpack.c.h.b16 %v86
    %v1328 = vunpack.c.l.b16 %v87
    %v1329 = vunpack.c.h.b16 %v87
    %v1330 = vunpack.c.l.b16 %v88
    %v1331 = vunpack.c.h.b16 %v88
    %v1332 = vunpack.c.l.b16 %v89
    %v1333 = vunpack.c.h.b16 %v89
    %v1334 = vunpack.c.l.b16 %v90
    %v1335 = vunpack.c.h.b16 %v90
    %v1336 = vunpack.c.l.b16 %v91
    %v1337 = vunpack.c.h.b16 %v91
    %v1338 = vunpack.c.l.b16 %v92
    %v1339 = vunpack.c.h.b16 %v92
    %v1340 = vunpack.c.l.b16 %v93
    %v1341 = vunpack.c.h.b16 %v93
    %v1342 = vunpack.c.l.b16 %v94
    %v1343 = vunpack.c.h.b16 %v94
    %v1344 = vunpack.c.l.b16 %v95
    %v1345 = vunpack.c.h.b16 %v95
    %v1346 = vunpack.c.l.b16 %v96
    %v1347 = vunpack.c.h.b16 %v96
    %v1348 = vunpack.c.l.b16 %v97
    %v1349 = vunpack.c.h.b16 %v97
    %v1350 = vunpack.c.l.b16 %v98
    %v1351 = vunpack.c.h.b16 %v98
    %v1352 = vunpack.c.l.b16 %v99
    %v1353 = vunpack.c.h.b16 %v99
    %v1354 = vunpack.c.l.b16 %v100
    %v1355 = vunpack.c.h.b16 %v100
    %v1356 = vunpack.c.l.b16 %v101
    %v1357 = vunpack.c.h.b16 %v101
    %v1358 = vunpack.c.l.b16 %v102
    %v1359 = vunpack.c.h.b16 %v102
    %v1360 = vunpack.c.l.b16 %v103
    %v1361 = vunpack.c.h.b16 %v103
    %v1362 = vunpack.c.l.b16 %v104
    %v1363 = vunpack.c.h.b16 %v104
    %v1364 = vunpack.c.l.b16 %v105
    %v1365 = vunpack.c.h.b16 %v105
    %v1366 = vunpack.c.l.b16 %v106
    %v1367 = vunpack.c.h.b16 %v106
    %v1368 = vunpack.c.l.b16 %v107
    %v1369 = vunpack.c.h.b16 %v107
    %v1370 = vunpack.c.l.b16 %v108
    %v1371 = vunpack.c.h.b16 %v108
    %v1372 = vunpack.c.l.b16 %v109
    %v1373 = vunpack.c.h.b16 %v109
    %v1374 = vunpack.c.l.b16 %v110
    %v1375 = vunpack.c.h.b16 %v110
    %v1376 = vunpack.c.l.b16 %v111
    %v1377 = vunpack.c.h.b16 %v111
    %v1378 = vunpack.c.l.b16 %v112
    %v1379 = vunpack.c.h.b16 %v112
    %v1380 = vunpack.c.l.b16 %v113
    %v1381 = vunpack.c.h.b16 %v113
    %v1382 = vunpack.c.l.b16 %v114
    %v1383 = vunpack.c.h.b16 %v114
    %v1384 = vunpack.c.l.b16 %v115
    %v1385 = vunpack.c.h.b16 %v115
    %v1386 = vunpack.c.l.b16 %v116
    %v1387 = vunpack.c.h.b16 %v116
    %v1388 = vunpack.c.l.b16 %v117
    %v1389 = vunpack.c.h.b16 %v117
    %v1390 = vunpack.c.l.b16 %v118
    %v1391 = vunpack.c.h.b16 %v118
    %v1392 = vunpack.c.l.b16 %v119
    %v1393 = vunpack.c.h.b16 %v119
    %v1394 = vunpack.c.l.b16 %v120
    %v1395 = vunpack.c.h.b16 %v120
    %v1396 = vunpack.c.l.b16 %v121
    %v1397 = vunpack.c.h.b16 %v121
    %v1398 = vunpack.c.l.b16 %v122
    %v1399 = vunpack.c.h.b16 %v122
    %v1400 = vunpack.c.l.b16 %v123
    %v1401 = vunpack.c.h.b16 %v123
    %v1402 = vunpack.c.l.b16 %v124
    %v1403 = vunpack.c.h.b16 %v124
    %v1404 = vunpack.c.l.b16 %v125
    %v1405 = vunpack.c.h.b16 %v125
    %v1406 = vunpack.c.l.b16 %v126
    %v1407 = vunpack.c.h.b16 %v126
    %v1408 = vunpack.c.l.b16 %v127
    %v1409 = vunpack.c.h.b16 %v127
    %v1410 = vunpack.c.l.b16 %v128
    %v1411 = vunpack.c.h.b16 %v128
    %v1412 = vunpack.c.l.b16 %v129
    %v1413 = vunpack.c.h.b16 %v129
    %v1414 = vunpack.c.l.b16 %v130
    %v1415 = vunpack.c.h.b16 %v130
    %v1416 = vunpack.c.l.b16 %v131
    %v1417 = vunpack.c.h.b16 %v131
    %v1418 = vunpack.c.l.b16 %v132
    %v1419 = vunpack.c.h.b16 %v132
    %v1420 = vunpack.c.l.b16 %v133
    %v1421 = vunpack.c.h.b16 %v133
    %v1422 = vunpack.c.l.b16 %v134
    %v1423 = vunpack.c.h.b16 %v134
    %v1424 = vunpack.c.l.b16 %v135
    %v1425 = vunpack.c.h.b16 %v135
    %v1426 = vunpack.c.l.b16 %v136
    %v1427 = vunpack.c.h.b16 %v136
    %v1428 = vunpack.c.l.b16 %v137
    %v1429 = vunpack.c.h.b16 %v137
    %v1430 = vunpack.c.l.b16 %v138
    %v1431 = vunpack.c.h.b16 %v138
    %v1432 = vunpack.c.l.b16 %v139
    %v1433 = vunpack.c.h.b16 %v139
    %v1434 = vunpack.c.l.b16 %v140
    %v1435 = vunpack.c.h.b16 %v140
    %v1436 = vunpack.c.l.b16 %v141
    %v1437 = vunpack.c.h.b16 %v141
    %v1438 = vunpack.c.l.b16 %v142
    %v1439 = vunpack.c.h.b16 %v142
    %v1440 = vunpack.c.l.b16 %v143
    %v1441 = vunpack.c.h.b16 %v143
    %v1442 = vunpack.c.l.b16 %v144
    %v1443 = vunpack.c.h.b16 %v144
    %v1444 = vunpack.c.l.b16 %v145
    %v1445 = vunpack.c.h.b16 %v145
    %v1446 = vunpack.c.l.b16 %v146
    %v1447 = vunpack.c.h.b16 %v146
    %v1448 = vunpack.c.l.b16 %v147
    %v1449 = vunpack.c.h.b16 %v147
    %v1450 = vunpack.c.l.b16 %v148
    %v1451 = vunpack.c.h.b16 %v148
    %v1452 = vunpack.c.l.b16 %v149
    %v1453 = vunpack.c.h.b16 %v149
    %v1454 = vunpack.c.l.b16 %v150
    %v1455 = vunpack.c.h.b16 %v150
    %v1456 = vunpack.c.l.b16 %v151
    %v1457 = vunpack.c.h.b16 %v151
    %v1458 = vunpack.c.l.b16 %v152
    %v1459 = vunpack.c.h.b16 %v152
    %v1460 = vunpack.c.l.b16 %v153
    %v1461 = vunpack.c.h.b16 %v153
    %v1462 = vunpack.c.l.b16 %v154
    %v1463 = vunpack.c.h.b16 %v154
    %v1464 = vunpack.c.l.b16 %v155
    %v1465 = vunpack.c.h.b16 %v155
    %v1466 = vunpack.c.l.b16 %v156
    %v1467 = vunpack.c.h.b16 %v156
    %v1468 = vunpack.c.l.b16 %v157
    %v1469 = vunpack.c.h.b16 %v157
    %v1470 = vunpack.c.l.b16 %v158
    %v1471 = vunpack.c.h.b16 %v158
    %v1472 = vunpack.c.l.b16 %v159
    %v1473 = vunpack.c.h.b16 %v159
    %v1474 = vunpack.c.l.b16 %v160
    %v1475 = vunpack.c.h.b16 %v160
    %v1476 = vunpack.c.l.b16 %v161
    %v1477 = vunpack.c.h.b16 %v161
    %v1478 = vunpack.c.l.b16 %v162
    %v1479 = vunpack.c.h.b16 %v162
    %v1480 = vunpack.c.l.b16 %v163
    %v1481 = vunpack.c.h.b16 %v163
    %v1482 = vunpack.c.l.b16 %v164
    %v1483 = vunpack.c.h.b16 %v164
    %v1484 = vunpack.c.l.b16 %v165
    %v1485 = vunpack.c.h.b16 %v165
    %v1486 = vunpack.c.l.b16 %v166
    %v1487 = vunpack.c.h.b16 %v166
    %v1488 = vunpack.c.l.b16 %v167
    %v1489 = vunpack.c.h.b16 %v167
    %v1490 = vunpack.c.l.b16 %v168
    %v1491 = vunpack.c.h.b16 %v168
    %v1492 = vunpack.c.l.b16 %v169
    %v1493 = vunpack.c.h.b16 %v169
    %v1494 = vunpack.c.l.b16 %v170
    %v1495 = vunpack.c.h.b16 %v170
    %v1496 = vunpack.c.l.b16 %v171
    %v1497 = vunpack.c.h.b16 %v171
    %v1498 = vunpack.c.l.b16 %v172
    %v1499 = vunpack.c.h.b16 %v172
    %v1500 = vunpack.c.l.b16 %v173
    %v1501 = vunpack.c.h.b16 %v173
    %v1502 = vunpack.c.l.b16 %v174
    %v1503 = vunpack.c.h.b16 %v174
    %v1504 = vunpack.c.l.b16 %v175
    %v1505 = vunpack.c.h.b16 %v175
    %v1506 = vunpack.c.l.b16 %v176
    %v1507 = vunpack.c.h.b16 %v176
    %v1508 = vunpack.c.l.b16 %v177
    %v1509 = vunpack.c.h.b16 %v177
    %v1510 = vunpack.c.l.b16 %v178
    %v1511 = vunpack.c.h.b16 %v178
    %v1512 = vunpack.c.l.b16 %v179
    %v1513 = vunpack.c.h.b16 %v179
    %v1514 = vunpack.c.l.b16 %v180
    %v1515 = vunpack.c.h.b16 %v180
    %v1516 = vunpack.c.l.b16 %v181
    %v1517 = vunpack.c.h.b16 %v181
    %v1518 = vunpack.c.l.b16 %v182
    %v1519 = vunpack.c.h.b16 %v182
    %v1520 = vunpack.c.l.b16 %v183
    %v1521 = vunpack.c.h.b16 %v183
    %v1522 = vunpack.c.l.b16 %v184
    %v1523 = vunpack.c.h.b16 %v184
    %v1524 = vunpack.c.l.b16 %v185
    %v1525 = vunpack.c.h.b16 %v185
    %v1526 = vunpack.c.l.b16 %v186
    %v1527 = vunpack.c.h.b16 %v186
    %v1528 = vunpack.c.l.b16 %v187
    %v1529 = vunpack.c.h.b16 %v187
    %v1530 = vunpack.c.l.b16 %v188
    %v1531 = vunpack.c.h.b16 %v188
    %v1532 = vunpack.c.l.b16 %v189
    %v1533 = vunpack.c.h.b16 %v189
    %v1534 = vunpack.c.l.b16 %v190
    %v1535 = vunpack.c.h.b16 %v190
    %v1536 = vunpack.c.l.b16 %v191
    %v1537 = vunpack.c.h.b16 %v191
    %v1538 = vunpack.c.l.b16 %v192
    %v1539 = vunpack.c.h.b16 %v192
    %v1540 = vunpack.c.l.b16 %v193
    %v1541 = vunpack.c.h.b16 %v193
    %v1542 = vunpack.c.l.b16 %v194
    %v1543 = vunpack.c.h.b16 %v194
    %v1544 = vunpack.c.l.b16 %v195
    %v1545 = vunpack.c.h.b16 %v195
    %v1546 = vunpack.c.l.b16 %v196
    %v1547 = vunpack.c.h.b16 %v196
    %v1548 = vunpack.c.l.b16 %v197
    %v1549 = vunpack.c.h.b16 %v197
    %v1550 = vunpack.c.l.b16 %v198
    %v1551 = vunpack.c.h.b16 %v198
    %v1552 = vunpack.c.l.b16 %v199
    %v1553 = vunpack.c.h.b16 %v199
    %v1554 = vunpack.c.l.b16 %v200
    %v1555 = vunpack.c.h.b16 %v200
    %v1556 = vunpack.c.l.b16 %v201
    %v1557 = vunpack.c.h.b16 %v201
    %v1558 = vunpack.c.l.b16 %v202
    %v1559 = vunpack.c.h.b16 %v202
    %v1560 = vunpack.c.l.b16 %v203
    %v1561 = vunpack.c.h.b16 %v203
    %v1562 = vunpack.c.l.b16 %v204
    %v1563 = vunpack.c.h.b16 %v204
    %v1564 = vunpack.c.l.b16 %v205
    %v1565 = vunpack.c.h.b16 %v205
    %v1566 = vunpack.c.l.b16 %v206
    %v1567 = vunpack.c.h.b16 %v206
    %v1568 = vunpack.c.l.b16 %v207
    %v1569 = vunpack.c.h.b16 %v207
    %v1570 = vunpack.c.l.b16 %v208
    %v1571 = vunpack.c.h.b16 %v208
    %v1572 = vunpack.c.l.b16 %v209
    %v1573 = vunpack.c.h.b16 %v209
    %v1574 = vunpack.c.l.b16 %v210
    %v1575 = vunpack.c.h.b16 %v210
    %v1576 = vunpack.c.l.b16 %v211
    %v1577 = vunpack.c.h.b16 %v211
    %v1578 = vunpack.c.l.b16 %v212
    %v1579 = vunpack.c.h.b16 %v212
    %v1580 = vunpack.c.l.b16 %v213
    %v1581 = vunpack.c.h.b16 %v213
    %v1582 = vunpack.c.l.b16 %v214
    %v1583 = vunpack.c.h.b16 %v214
    %v1584 = vunpack.c.l.b16 %v215
    %v1585 = vunpack.c.h.b16 %v215
    %v1586 = vunpack.c.l.b16 %v216
    %v1587 = vunpack.c.h.b16 %v216
    %v1588 = vunpack.c.l.b16 %v217
    %v1589 = vunpack.c.h.b16 %v217
    %v1590 = vunpack.c.l.b16 %v218
    %v1591 = vunpack.c.h.b16 %v218
    %v1592 = vunpack.c.l.b16 %v219
    %v1593 = vunpack.c.h.b16 %v219
    %v1594 = vunpack.c.l.b16 %v220
    %v1595 = vunpack.c.h.b16 %v220
    %v1596 = vunpack.c.l.b16 %v221
    %v1597 = vunpack.c.h.b16 %v221
    %v1598 = vunpack.c.l.b16 %v222
    %v1599 = vunpack.c.h.b16 %v222
    %v1600 = vunpack.c.l.b16 %v223
    %v1601 = vunpack.c.h.b16 %v223
    %v1602 = vunpack.c.l.b16 %v224
    %v1603 = vunpack.c.h.b16 %v224
    %v1604 = vunpack.c.l.b16 %v225
    %v1605 = vunpack.c.h.b16 %v225
    %v1606 = vunpack.c.l.b16 %v226
    %v1607 = vunpack.c.h.b16 %v226
    %v1608 = vunpack.c.l.b16 %v227
    %v1609 = vunpack.c.h.b16 %v227
    %v1610 = vunpack.c.l.b16 %v228
    %v1611 = vunpack.c.h.b16 %v228
    %v1612 = vunpack.c.l.b16 %v229
    %v1613 = vunpack.c.h.b16 %v229
    %v1614 = vunpack.c.l.b16 %v230
    %v1615 = vunpack.c.h.b16 %v230
    %v1616 = vunpack.c.l.b16 %v231
    %v1617 = vunpack.c.h.b16 %v231
    %v1618 = vunpack.c.l.b16 %v232
    %v1619 = vunpack.c.h.b16 %v232
    %v1620 = vunpack.c.l.b16 %v233
    %v1621 = vunpack.c.h.b16 %v233
    %v1622 = vunpack.c.l.b16 %v234
    %v1623 = vunpack.c.h.b16 %v234
    %v1624 = vunpack.c.l.b16 %v235
    %v1625 = vunpack.c.h.b16 %v235
    %v1626 = vunpack.c.l.b16 %v236
    %v1627 = vunpack.c.h.b16 %v236
    %v1628 = vunpack.c.l.b16 %v237
    %v1629 = vunpack.c.h.b16 %v237
    %v1630 = vunpack.c.l.b16 %v238
    %v1631 = vunpack.c.h.b16 %v238
    %v1632 = vunpack.c.l.b16 %v239
    %v1633 = vunpack.c.h.b16 %v239
    %v1634 = vunpack.c.l.b16 %v240
    %v1635 = vunpack.c.h.b16 %v240
    %v1636 = vunpack.c.l.b16 %v241
    %v1637 = vunpack.c.h.b16 %v241
    %v1638 = vunpack.c.l.b16 %v242
    %v1639 = vunpack.c.h.b16 %v242
    %v1640 = vunpack.c.l.b16 %v243
    %v1641 = vunpack.c.h.b16 %v243
    %v1642 = vunpack.c.l.b16 %v244
    %v1643 = vunpack.c.h.b16 %v244
    %v1644 = vunpack.c.l.b16 %v245
    %v1645 = vunpack.c.h.b16 %v245
    %v1646 = vunpack.c.l.b16 %v246
    %v1647 = vunpack.c.h.b16 %v246
    %v1648 = vunpack.c.l.b16 %v247
    %v1649 = vunpack.c.h.b16 %v247
    %v1650 = vunpack.c.l.b16 %v248
    %v1651 = vunpack.c.h.b16 %v248
    %v1652 = vunpack.c.l.b16 %v249
    %v1653 = vunpack.c.h.b16 %v249
    %v1654 = vunpack.c.l.b16 %v250
    %v1655 = vunpack.c.h.b16 %v250
    %v1656 = vunpack.c.l.b16 %v251
    %v1657 = vunpack.c.h.b16 %v251
    %v1658 = vunpack.c.l.b16 %v252
    %v1659 = vunpack.c.h.b16 %v252
    %v1660 = vunpack.c.l.b16 %v253
    %v1661 = vunpack.c.h.b16 %v253
    %v1662 = vunpack.c.l.b16 %v254
    %v1663 = vunpack.c.h.b16 %v254
    %v1664 = vunpack.c.l.b16 %v255
    %v1665 = vunpack.c.h.b16 %v255
    %v1666 = vunpack.c.l.b16 %v256
    %v1667 = vunpack.c.h.b16 %v256
    %v1668 = vunpack.c.l.b16 %v257
    %v1669 = vunpack.c.h.b16 %v257
    %v1670 = vunpack.c.l.b16 %v258
    %v1671 = vunpack.c.h.b16 %v258
    %v1672 = vunpack.c.l.b16 %v259
    %v1673 = vunpack.c.h.b16 %v259
    %v1674 = vunpack.c.l.b16 %v260
    %v1675 = vunpack.c.h.b16 %v260
    %v1676 = vunpack.c.l.b16 %v261
    %v1677 = vunpack.c.h.b16 %v261
    %v1678 = vunpack.c.l.b16 %v262
    %v1679 = vunpack.c.h.b16 %v262
    %v1680 = vunpack.c.l.b16 %v263
    %v1681 = vunpack.c.h.b16 %v263
    %v1682 = vunpack.c.l.b16 %v264
    %v1683 = vunpack.c.h.b16 %v264
    %v1684 = vunpack.c.l.b16 %v265
    %v1685 = vunpack.c.h.b16 %v265
    %v1686 = vunpack.c.l.b16 %v266
    %v1687 = vunpack.c.h.b16 %v266
    %v1688 = vunpack.c.l.b16 %v267
    %v1689 = vunpack.c.h.b16 %v267
    %v1690 = vunpack.c.l.b16 %v268
    %v1691 = vunpack.c.h.b16 %v268
    %v1692 = vunpack.c.l.b16 %v269
    %v1693 = vunpack.c.h.b16 %v269
    %v1694 = vunpack.c.l.b16 %v270
    %v1695 = vunpack.c.h.b16 %v270
    %v1696 = vunpack.c.l.b16 %v271
    %v1697 = vunpack.c.h.b16 %v271
    %v1698 = vunpack.c.l.b16 %v272
    %v1699 = vunpack.c.h.b16 %v272
    %v1700 = vunpack.c.l.b16 %v273
    %v1701 = vunpack.c.h.b16 %v273
    %v1702 = vunpack.c.l.b16 %v274
    %v1703 = vunpack.c.h.b16 %v274
    %v1704 = vunpack.c.l.b16 %v275
    %v1705 = vunpack.c.h.b16 %v275
    %v1706 = vunpack.c.l.b16 %v276
    %v1707 = vunpack.c.h.b16 %v276
    %v1708 = vunpack.c.l.b16 %v277
    %v1709 = vunpack.c.h.b16 %v277
    %v1710 = vunpack.c.l.b16 %v278
    %v1711 = vunpack.c.h.b16 %v278
    %v1712 = vunpack.c.l.b16 %v279
    %v1713 = vunpack.c.h.b16 %v279
    %v1714 = vunpack.c.l.b16 %v280
    %v1715 = vunpack.c.h.b16 %v280
    %v1716 = vunpack.c.l.b16 %v281
    %v1717 = vunpack.c.h.b16 %v281
    %v1718 = vunpack.c.l.b16 %v282
    %v1719 = vunpack.c.h.b16 %v282
    %v1720 = vunpack.c.l.b16 %v283
    %v1721 = vunpack.c.h.b16 %v283
    %v1722 = vunpack.c.l.b16 %v284
    %v1723 = vunpack.c.h.b16 %v284
    %v1724 = vunpack.c.l.b16 %v285
    %v1725 = vunpack.c.h.b16 %v285
    %v1726 = vunpack.c.l.b16 %v286
    %v1727 = vunpack.c.h.b16 %v286
    %v1728 = vunpack.c.l.b16 %v287
    %v1729 = vunpack.c.h.b16 %v287
    %v1730 = vunpack.c.l.b16 %v288
    %v1731 = vunpack.c.h.b16 %v288
    %v1732 = vunpack.c.l.b16 %v289
    %v1733 = vunpack.c.h.b16 %v289
    %v1734 = vunpack.c.l.b16 %v290
    %v1735 = vunpack.c.h.b16 %v290
    %v1736 = vunpack.c.l.b16 %v291
    %v1737 = vunpack.c.h.b16 %v291
    %v1738 = vunpack.c.l.b16 %v292
    %v1739 = vunpack.c.h.b16 %v292
    %v1740 = vunpack.c.l.b16 %v293
    %v1741 = vunpack.c.h.b16 %v293
    %v1742 = vunpack.c.l.b16 %v294
    %v1743 = vunpack.c.h.b16 %v294
    %v1744 = vunpack.c.l.b16 %v295
    %v1745 = vunpack.c.h.b16 %v295
    %v1746 = vunpack.c.l.b16 %v296
    %v1747 = vunpack.c.h.b16 %v296
    %v1748 = vunpack.c.l.b16 %v297
    %v1749 = vunpack.c.h.b16 %v297
    %v1750 = vunpack.c.l.b16 %v298
    %v1751 = vunpack.c.h.b16 %v298
    %v1752 = vunpack.c.l.b16 %v299
    %v1753 = vunpack.c.h.b16 %v299
    %v1754 = vunpack.c.l.b16 %v300
    %v1755 = vunpack.c.h.b16 %v300
    %v1756 = vunpack.c.l.b16 %v301
    %v1757 = vunpack.c.h.b16 %v301
    %v1758 = vunpack.c.l.b16 %v302
    %v1759 = vunpack.c.h.b16 %v302
    %v1760 = vunpack.c.l.b16 %v303
    %v1761 = vunpack.c.h.b16 %v303
    %v1762 = vunpack.c.l.b16 %v304
    %v1763 = vunpack.c.h.b16 %v304
    %v1764 = vunpack.c.l.b16 %v305
    %v1765 = vunpack.c.h.b16 %v305
    %v1766 = vunpack.c.l.b16 %v306
    %v1767 = vunpack.c.h.b16 %v306
    %v1768 = vunpack.c.l.b16 %v307
    %v1769 = vunpack.c.h.b16 %v307
    %v1770 = vunpack.c.l.b16 %v308
    %v1771 = vunpack.c.h.b16 %v308
    %v1772 = vunpack.c.l.b16 %v309
    %v1773 = vunpack.c.h.b16 %v309
    %v1774 = vunpack.c.l.b16 %v310
    %v1775 = vunpack.c.h.b16 %v310
    %v1776 = vunpack.c.l.b16 %v311
    %v1777 = vunpack.c.h.b16 %v311
    %v1778 = vunpack.c.l.b16 %v312
    %v1779 = vunpack.c.h.b16 %v312
    %v1780 = vunpack.c.l.b16 %v313
    %v1781 = vunpack.c.h.b16 %v313
    %v1782 = vunpack.c.l.b16 %v314
    %v1783 = vunpack.c.h.b16 %v314
    %v1784 = vunpack.c.l.b16 %v315
    %v1785 = vunpack.c.h.b16 %v315
    %v1786 = vunpack.c.l.b16 %v316
    %v1787 = vunpack.c.h.b16 %v316
    %v1788 = vunpack.c.l.b16 %v317
    %v1789 = vunpack.c.h.b16 %v317
    %v1790 = vunpack.c.l.b16 %v318
    %v1791 = vunpack.c.h.b16 %v318
    %v1792 = vunpack.c.l.b16 %v319
    %v1793 = vunpack.c.h.b16 %v319
    %v1794 = vunpack.c.l.b16 %v320
    %v1795 = vunpack.c.h.b16 %v320
    %v1796 = vunpack.c.l.b16 %v321
    %v1797 = vunpack.c.h.b16 %v321
    %v1798 = vunpack.c.l.b16 %v322
    %v1799 = vunpack.c.h.b16 %v322
    %v1800 = vunpack.c.l.b16 %v323
    %v1801 = vunpack.c.h.b16 %v323
    %v1802 = vunpack.c.l.b16 %v324
    %v1803 = vunpack.c.h.b16 %v324
    %v1804 = vunpack.c.l.b16 %v325
    %v1805 = vunpack.c.h.b16 %v325
    %v1806 = vunpack.c.l.b16 %v326
    %v1807 = vunpack.c.h.b16 %v326
    %v1808 = vunpack.c.l.b16 %v327
    %v1809 = vunpack.c.h.b16 %v327
    %v1810 = vunpack.c.l.b16 %v328
    %v1811 = vunpack.c.h.b16 %v328
    %v1812 = vunpack.c.l.b16 %v329
    %v1813 = vunpack.c.h.b16 %v329
    %v1814 = vunpack.c.l.b16 %v330
    %v1815 = vunpack.c.h.b16 %v330
    %v1816 = vunpack.c.l.b16 %v331
    %v1817 = vunpack.c.h.b16 %v331
    %v1818 = vunpack.c.l.b16 %v332
    %v1819 = vunpack.c.h.b16 %v332
    %v1820 = vunpack.c.l.b16 %v333
    %v1821 = vunpack.c.h.b16 %v333
    %v1822 = vunpack.c.l.b16 %v334
    %v1823 = vunpack.c.h.b16 %v334
    %v1824 = vunpack.c.l.b16 %v335
    %v1825 = vunpack.c.h.b16 %v335
    %v1826 = vunpack.c.l.b16 %v336
    %v1827 = vunpack.c.h.b16 %v336
    %v1828 = vunpack.c.l.b16 %v337
    %v1829 = vunpack.c.h.b16 %v337
    %v1830 = vunpack.c.l.b16 %v338
    %v1831 = vunpack.c.h.b16 %v338
    %v1832 = vunpack.c.l.b16 %v339
    %v1833 = vunpack.c.h.b16 %v339
    %v1834 = vunpack.c.l.b16 %v340
    %v1835 = vunpack.c.h.b16 %v340
    %v1836 = vunpack.c.l.b16 %v341
    %v1837 = vunpack.c.h.b16 %v341
    %v1838 = vunpack.c.l.b16 %v342
    %v1839 = vunpack.c.h.b16 %v342
    %v1840 = vunpack.c.l.b16 %v343
    %v1841 = vunpack.c.h.b16 %v343
    %v1842 = vunpack.c.l.b16 %v344
    %v1843 = vunpack.c.h.b16 %v344
    %v1844 = vunpack.c.l.b16 %v345
    %v1845 = vunpack.c.h.b16 %v345
    %v1846 = vunpack.c.l.b16 %v346
    %v1847 = vunpack.c.h.b16 %v346
    %v1848 = vunpack.c.l.b16 %v347
    %v1849 = vunpack.c.h.b16 %v347
    %v1850 = vunpack.c.l.b16 %v348
    %v1851 = vunpack.c.h.b16 %v348
    %v1852 = vunpack.c.l.b16 %v349
    %v1853 = vunpack.c.h.b16 %v349
    %v1854 = vunpack.c.l.b16 %v350
    %v1855 = vunpack.c.h.b16 %v350
    %v1856 = vunpack.c.l.b16 %v351
    %v1857 = vunpack.c.h.b16 %v351
    %v1858 = vunpack.c.l.b16 %v352
    %v1859 = vunpack.c.h.b16 %v352
    %v1860 = vunpack.c.l.b16 %v353
    %v1861 = vunpack.c.h.b16 %v353
    %v1862 = vunpack.c.l.b16 %v354
    %v1863 = vunpack.c.h.b16 %v354
    %v1864 = vunpack.c.l.b16 %v355
    %v1865 = vunpack.c.h.b16 %v355
    %v1866 = vunpack.c.l.b16 %v356
    %v1867 = vunpack.c.h.b16 %v356
    %v1868 = vunpack.c.l.b16 %v357
    %v1869 = vunpack.c.h.b16 %v357
    %v1870 = vunpack.c.l.b16 %v358
    %v1871 = vunpack.c.h.b16 %v358
    %v1872 = vunpack.c.l.b16 %v359
    %v1873 = vunpack.c.h.b16 %v359
    %v1874 = vunpack.c.l.b16 %v360
    %v1875 = vunpack.c.h.b16 %v360
    %v1876 = vunpack.c.l.b16 %v361
    %v1877 = vunpack.c.h.b16 %v361
    %v1878 = vunpack.c.l.b16 %v362
    %v1879 = vunpack.c.h.b16 %v362
    %v1880 = vunpack.c.l.b16 %v363
    %v1881 = vunpack.c.h.b16 %v363
    %v1882 = vunpack.c.l.b16 %v364
    %v1883 = vunpack.c.h.b16 %v364
    %v1884 = vunpack.c.l.b16 %v365
    %v1885 = vunpack.c.h.b16 %v365
    %v1886 = vunpack.c.l.b16 %v366
    %v1887 = vunpack.c.h.b16 %v366
    %v1888 = vunpack.c.l.b16 %v367
    %v1889 = vunpack.c.h.b16 %v367
    %v1890 = vunpack.c.l.b16 %v368
    %v1891 = vunpack.c.h.b16 %v368
    %v1892 = vunpack.c.l.b16 %v369
    %v1893 = vunpack.c.h.b16 %v369
    %v1894 = vunpack.c.l.b16 %v370
    %v1895 = vunpack.c.h.b16 %v370
    %v1896 = vunpack.c.l.b16 %v371
    %v1897 = vunpack.c.h.b16 %v371
    %v1898 = vunpack.c.l.b16 %v372
    %v1899 = vunpack.c.h.b16 %v372
    %v1900 = vunpack.c.l.b16 %v373
    %v1901 = vunpack.c.h.b16 %v373
    %v1902 = vunpack.c.l.b16 %v374
    %v1903 = vunpack.c.h.b16 %v374
    %v1904 = vunpack.c.l.b16 %v375
    %v1905 = vunpack.c.h.b16 %v375
    %v1906 = vunpack.c.l.b16 %v376
    %v1907 = vunpack.c.h.b16 %v376
    %v1908 = vunpack.c.l.b16 %v377
    %v1909 = vunpack.c.h.b16 %v377
    %v1910 = vunpack.c.l.b16 %v378
    %v1911 = vunpack.c.h.b16 %v378
    %v1912 = vunpack.c.l.b16 %v379
    %v1913 = vunpack.c.h.b16 %v379
    %v1914 = vunpack.c.l.b16 %v380
    %v1915 = vunpack.c.h.b16 %v380
    %v1916 = vunpack.c.l.b16 %v381
    %v1917 = vunpack.c.h.b16 %v381
    %v1918 = vunpack.c.l.b16 %v382
    %v1919 = vunpack.c.h.b16 %v382
    %v1920 = vunpack.c.l.b16 %v383
    %v1921 = vunpack.c.h.b16 %v383
    %v1922 = vunpack.c.l.b16 %v384
    %v1923 = vunpack.c.h.b16 %v384
    %v1924 = vunpack.c.l.b16 %v385
    %v1925 = vunpack.c.h.b16 %v385
    %v1926 = vunpack.c.l.b16 %v386
    %v1927 = vunpack.c.h.b16 %v386
    %v1928 = vunpack.c.l.b16 %v387
    %v1929 = vunpack.c.h.b16 %v387
    %v1930 = vunpack.c.l.b16 %v388
    %v1931 = vunpack.c.h.b16 %v388
    %v1932 = vunpack.c.l.b16 %v389
    %v1933 = vunpack.c.h.b16 %v389
    %v1934 = vunpack.c.l.b16 %v390
    %v1935 = vunpack.c.h.b16 %v390
    %v1936 = vunpack.c.l.b16 %v391
    %v1937 = vunpack.c.h.b16 %v391
    %v1938 = vunpack.c.l.b16 %v392
    %v1939 = vunpack.c.h.b16 %v392
    %v1940 = vunpack.c.l.b16 %v393
    %v1941 = vunpack.c.h.b16 %v393
    %v1942 = vunpack.c.l.b16 %v394
    %v1943 = vunpack.c.h.b16 %v394
    %v1944 = vunpack.c.l.b16 %v395
    %v1945 = vunpack.c.h.b16 %v395
    %v1946 = vunpack.c.l.b16 %v396
    %v1947 = vunpack.c.h.b16 %v396
    %v1948 = vunpack.c.l.b16 %v397
    %v1949 = vunpack.c.h.b16 %v397
    %v1950 = vunpack.c.l.b16 %v398
    %v1951 = vunpack.c.h.b16 %v398
    %v1952 = vunpack.c.l.b16 %v399
    %v1953 = vunpack.c.h.b16 %v399
    %v1954 = vunpack.c.l.b16 %v400
    %v1955 = vunpack.c.h.b16 %v400
    %v1956 = vunpack.c.l.b16 %v401
    %v1957 = vunpack.c.h.b16 %v401
    %v1958 = vunpack.c.l.b16 %v402
    %v1959 = vunpack.c.h.b16 %v402
    %v1960 = vunpack.c.l.b16 %v403
    %v1961 = vunpack.c.h.b16 %v403
    %v1962 = vunpack.c.l.b16 %v404
    %v1963 = vunpack.c.h.b16 %v404
    %v1964 = vunpack.c.l.b16 %v405
    %v1965 = vunpack.c.h.b16 %v405
    %v1966 = vunpack.c.l.b16 %v406
    %v1967 = vunpack.c.h.b16 %v406
    %v1968 = vunpack.c.l.b16 %v407
    %v1969 = vunpack.c.h.b16 %v407
    %v1970 = vunpack.c.l.b16 %v408
    %v1971 = vunpack.c.h.b16 %v408
    %v1972 = vunpack.c.l.b16 %v409
    %v1973 = vunpack.c.h.b16 %v409
    %v1974 = vunpack.c.l.b16 %v410
    %v1975 = vunpack.c.h.b16 %v410
    %v1976 = vunpack.c.l.b16 %v411
    %v1977 = vunpack.c.h.b16 %v411
    %v1978 = vunpack.c.l.b16 %v412
    %v1979 = vunpack.c.h.b16 %v412
    %v1980 = vunpack.c.l.b16 %v413
    %v1981 = vunpack.c.h.b16 %v413
    %v1982 = vunpack.c.l.b16 %v414
    %v1983 = vunpack.c.h.b16 %v414
    %v1984 = vunpack.c.l.b16 %v415
    %v1985 = vunpack.c.h.b16 %v415
    %v1986 = vunpack.c.l.b16 %v416
    %v1987 = vunpack.c.h.b16 %v416
    %v1988 = vunpack.c.l.b16 %v417
    %v1989 = vunpack.c.h.b16 %v417
    %v1990 = vunpack.c.l.b16 %v418
    %v1991 = vunpack.c.h.b16 %v418
    %v1992 = vunpack.c.l.b16 %v419
    %v1993 = vunpack.c.h.b16 %v419
    %v1994 = vunpack.c.l.b16 %v420
    %v1995 = vunpack.c.h.b16 %v420
    %v1996 = vunpack.c.l.b16 %v421
    %v1997 = vunpack.c.h.b16 %v421
    %v1998 = vunpack.c.l.b16 %v422
    %v1999 = vunpack.c.h.b16 %v422
    %v2000 = vunpack.c.l.b16 %v423
    %v2001 = vunpack.c.h.b16 %v423
    %v2002 = vunpack.c.l.b16 %v424
    %v2003 = vunpack.c.h.b16 %v424
    %v2004 = vunpack.c.l.b16 %v425
    %v2005 = vunpack.c.h.b16 %v425
    %v2006 = vunpack.c.l.b16 %v426
    %v2007 = vunpack.c.h.b16 %v426
    %v2008 = vunpack.c.l.b16 %v427
    %v2009 = vunpack.c.h.b16 %v427
    %v2010 = vunpack.c.l.b16 %v428
    %v2011 = vunpack.c.h.b16 %v428
    %v2012 = vunpack.c.l.b16 %v429
    %v2013 = vunpack.c.h.b16 %v429
    %v2014 = vunpack.c.l.b16 %v430
    %v2015 = vunpack.c.h.b16 %v430
    %v2016 = vunpack.c.l.b16 %v431
    %v2017 = vunpack.c.h.b16 %v431
    %v2018 = vunpack.c.l.b16 %v432
    %v2019 = vunpack.c.h.b16 %v432
    %v2020 = vunpack.c.l.b16 %v433
    %v2021 = vunpack.c.h.b16 %v433
    %v2022 = vunpack.c.l.b16 %v434
    %v2023 = vunpack.c.h.b16 %v434
    %v2024 = vunpack.c.l.b16 %v435
    %v2025 = vunpack.c.h.b16 %v435
    %v2026 = vunpack.c.l.b16 %v436
    %v2027 = vunpack.c.h.b16 %v436
    %v2028 = vunpack.c.l.b16 %v437
    %v2029 = vunpack.c.h.b16 %v437
    %v2030 = vunpack.c.l.b16 %v438
    %v2031 = vunpack.c.h.b16 %v438
    %v2032 = vunpack.c.l.b16 %v439
    %v2033 = vunpack.c.h.b16 %v439
    %v2034 = vunpack.c.l.b16 %v440
    %v2035 = vunpack.c.h.b16 %v440
    %v2036 = vunpack.c.l.b16 %v441
    %v2037 = vunpack.c.h.b16 %v441
    %v2038 = vunpack.c.l.b16 %v442
    %v2039 = vunpack.c.h.b16 %v442
    %v2040 = vunpack.c.l.b16 %v443
    %v2041 = vunpack.c.h.b16 %v443
    %v2042 = vunpack.c.l.b16 %v444
    %v2043 = vunpack.c.h.b16 %v444
    %v2044 = vunpack.c.l.b16 %v445
    %v2045 = vunpack.c.h.b16 %v445
    %v2046 = vunpack.c.l.b16 %v446
    %v2047 = vunpack.c.h.b16 %v446
    %v2048 = vunpack.c.l.b16 %v447
    %v2049 = vunpack.c.h.b16 %v447
    %v2050 = vunpack.c.l.b16 %v448
    %v2051 = vunpack.c.h.b16 %v448
    %v2052 = vunpack.c.l.b16 %v449
    %v2053 = vunpack.c.h.b16 %v449
    %v2054 = vunpack.c.l.b16 %v450
    %v2055 = vunpack.c.h.b16 %v450
    %v2056 = vunpack.c.l.b16 %v451
    %v2057 = vunpack.c.h.b16 %v451
    %v2058 = vunpack.c.l.b16 %v452
    %v2059 = vunpack.c.h.b16 %v452
    %v2060 = vunpack.c.l.b16 %v453
    %v2061 = vunpack.c.h.b16 %v453
    %v2062 = vunpack.c.l.b16 %v454
    %v2063 = vunpack.c.h.b16 %v454
    %v2064 = vunpack.c.l.b16 %v455
    %v2065 = vunpack.c.h.b16 %v455
    %v2066 = vunpack.c.l.b16 %v456
    %v2067 = vunpack.c.h.b16 %v456
    %v2068 = vunpack.c.l.b16 %v457
    %v2069 = vunpack.c.h.b16 %v457
    %v2070 = vunpack.c.l.b16 %v458
    %v2071 = vunpack.c.h.b16 %v458
    %v2072 = vunpack.c.l.b16 %v459
    %v2073 = vunpack.c.h.b16 %v459
    %v2074 = vunpack.c.l.b16 %v460
    %v2075 = vunpack.c.h.b16 %v460
    %v2076 = vunpack.c.l.b16 %v461
    %v2077 = vunpack.c.h.b16 %v461
    %v2078 = vunpack.c.l.b16 %v462
    %v2079 = vunpack.c.h.b16 %v462
    %v2080 = vunpack.c.l.b16 %v463
    %v2081 = vunpack.c.h.b16 %v463
    %v2082 = vunpack.c.l.b16 %v464
    %v2083 = vunpack.c.h.b16 %v464
    %v2084 = vunpack.c.l.b16 %v465
    %v2085 = vunpack.c.h.b16 %v465
    %v2086 = vunpack.c.l.b16 %v466
    %v2087 = vunpack.c.h.b16 %v466
    %v2088 = vunpack.c.l.b16 %v467
    %v2089 = vunpack.c.h.b16 %v467
    %v2090 = vunpack.c.l.b16 %v468
    %v2091 = vunpack.c.h.b16 %v468
    %v2092 = vunpack.c.l.b16 %v469
    %v2093 = vunpack.c.h.b16 %v469
    %v2094 = vunpack.c.l.b16 %v470
    %v2095 = vunpack.c.h.b16 %v470
    %v2096 = vunpack.c.l.b16 %v471
    %v2097 = vunpack.c.h.b16 %v471
    %v2098 = vunpack.c.l.b16 %v472
    %v2099 = vunpack.c.h.b16 %v472
    %v2100 = vunpack.c.l.b16 %v473
    %v2101 = vunpack.c.h.b16 %v473
    %v2102 = vunpack.c.l.b16 %v474
    %v2103 = vunpack.c.h.b16 %v474
    %v2104 = vunpack.c.l.b16 %v475
    %v2105 = vunpack.c.h.b16 %v475
    %v2106 = vunpack.c.l.b16 %v476
    %v2107 = vunpack.c.h.b16 %v476
    %v2108 = vunpack.c.l.b16 %v477
    %v2109 = vunpack.c.h.b16 %v477
    %v2110 = vunpack.c.l.b16 %v478
    %v2111 = vunpack.c.h.b16 %v478
    %v2112 = vunpack.c.l.b16 %v479
    %v2113 = vunpack.c.h.b16 %v479
    %v2114 = vunpack.c.l.b16 %v480
    %v2115 = vunpack.c.h.b16 %v480
    %v2116 = vunpack.c.l.b16 %v481
    %v2117 = vunpack.c.h.b16 %v481
    %v2118 = vunpack.c.l.b16 %v482
    %v2119 = vunpack.c.h.b16 %v482
    %v2120 = vunpack.c.l.b16 %v483
    %v2121 = vunpack.c.h.b16 %v483
    %v2122 = vunpack.c.l.b16 %v484
    %v2123 = vunpack.c.h.b16 %v484
    %v2124 = vunpack.c.l.b16 %v485
    %v2125 = vunpack.c.h.b16 %v485
    %v2126 = vunpack.c.l.b16 %v486
    %v2127 = vunpack.c.h.b16 %v486
    %v2128 = vunpack.c.l.b16 %v487
    %v2129 = vunpack.c.h.b16 %v487
    %v2130 = vunpack.c.l.b16 %v488
    %v2131 = vunpack.c.h.b16 %v488
    %v2132 = vunpack.c.l.b16 %v489
    %v2133 = vunpack.c.h.b16 %v489
    %v2134 = vunpack.c.l.b16 %v490
    %v2135 = vunpack.c.h.b16 %v490
    %v2136 = vunpack.c.l.b16 %v491
    %v2137 = vunpack.c.h.b16 %v491
    %v2138 = vunpack.c.l.b16 %v492
    %v2139 = vunpack.c.h.b16 %v492
    %v2140 = vunpack.c.l.b16 %v493
    %v2141 = vunpack.c.h.b16 %v493
    %v2142 = vunpack.c.l.b16 %v494
    %v2143 = vunpack.c.h.b16 %v494
    %v2144 = vunpack.c.l.b16 %v495
    %v2145 = vunpack.c.h.b16 %v495
    %v2146 = vunpack.c.l.b16 %v496
    %v2147 = vunpack.c.h.b16 %v496
    %v2148 = vunpack.c.l.b16 %v497
    %v2149 = vunpack.c.h.b16 %v497
    %v2150 = vunpack.c.l.b16 %v498
    %v2151 = vunpack.c.h.b16 %v498
    %v2152 = vunpack.c.l.b16 %v499
    %v2153 = vunpack.c.h.b16 %v499
    %v2154 = vunpack.c.l.b16 %v500
    %v2155 = vunpack.c.h.b16 %v500
    %v2156 = vunpack.c.l.b16 %v501
    %v2157 = vunpack.c.h.b16 %v501
    %v2158 = vunpack.c.l.b16 %v502
    %v2159 = vunpack.c.h.b16 %v502
    %v2160 = vunpack.c.l.b16 %v503
    %v2161 = vunpack.c.h.b16 %v503
    %v2162 = vunpack.c.l.b16 %v504
    %v2163 = vunpack.c.h.b16 %v504
    %v2164 = vunpack.c.l.b16 %v505
    %v2165 = vunpack.c.h.b16 %v505
    %v2166 = vunpack.c.l.b16 %v506
    %v2167 = vunpack.c.h.b16 %v506
    %v2168 = vunpack.c.l.b16 %v507
    %v2169 = vunpack.c.h.b16 %v507
    %v2170 = vunpack.c.l.b16 %v508
    %v2171 = vunpack.c.h.b16 %v508
    %v2172 = vunpack.c.l.b16 %v509
    %v2173 = vunpack.c.h.b16 %v509
    %v2174 = vunpack.c.l.b16 %v510
    %v2175 = vunpack.c.h.b16 %v510
    %v2176 = vunpack.c.l.b16 %v511
    %v2177 = vunpack.c.h.b16 %v511
    %v2178 = vunpack.c.l.b16 %v512
    %v2179 = vunpack.c.h.b16 %v512
    %v2180 = vunpack.c.l.b16 %v513
    %v2181 = vunpack.c.h.b16 %v513
    %v2182 = vunpack.c.l.b16 %v514
    %v2183 = vunpack.c.h.b16 %v514
    %v2184 = vunpack.c.l.b16 %v515
    %v2185 = vunpack.c.h.b16 %v515
    %v2186 = vunpack.c.l.b16 %v516
    %v2187 = vunpack.c.h.b16 %v516
    %v2188 = vunpack.c.l.b16 %v517
    %v2189 = vunpack.c.h.b16 %v517
    %v2190 = vunpack.c.l.b16 %v518
    %v2191 = vunpack.c.h.b16 %v518
    %v2192 = vunpack.c.l.b16 %v519
    %v2193 = vunpack.c.h.b16 %v519
    %v2194 = vunpack.c.l.b16 %v520
    %v2195 = vunpack.c.h.b16 %v520
    %v2196 = vunpack.c.l.b16 %v521
    %v2197 = vunpack.c.h.b16 %v521
    %v2198 = vunpack.c.l.b16 %v522
    %v2199 = vunpack.c.h.b16 %v522
    %v2200 = vunpack.c.l.b16 %v523
    %v2201 = vunpack.c.h.b16 %v523
    %v2202 = vunpack.c.l.b16 %v524
    %v2203 = vunpack.c.h.b16 %v524
    %v2204 = vunpack.c.l.b16 %v525
    %v2205 = vunpack.c.h.b16 %v525
    %v2206 = vunpack.c.l.b16 %v526
    %v2207 = vunpack.c.h.b16 %v526
    %v2208 = vunpack.c.l.b16 %v527
    %v2209 = vunpack.c.h.b16 %v527
    %v2210 = vunpack.c.l.b16 %v528
    %v2211 = vunpack.c.h.b16 %v528
    %v2212 = vunpack.c.l.b16 %v529
    %v2213 = vunpack.c.h.b16 %v529
    %v2214 = vunpack.c.l.b16 %v530
    %v2215 = vunpack.c.h.b16 %v530
    %v2216 = vunpack.c.l.b16 %v531
    %v2217 = vunpack.c.h.b16 %v531
    %v2218 = vunpack.c.l.b16 %v532
    %v2219 = vunpack.c.h.b16 %v532
    %v2220 = vunpack.c.l.b16 %v533
    %v2221 = vunpack.c.h.b16 %v533
    %v2222 = vunpack.c.l.b16 %v534
    %v2223 = vunpack.c.h.b16 %v534
    %v2224 = vunpack.c.l.b16 %v535
    %v2225 = vunpack.c.h.b16 %v535
    %v2226 = vunpack.c.l.b16 %v536
    %v2227 = vunpack.c.h.b16 %v536
    %v2228 = vunpack.c.l.b16 %v537
    %v2229 = vunpack.c.h.b16 %v537
    %v2230 = vunpack.c.l.b16 %v538
    %v2231 = vunpack.c.h.b16 %v538
    %v2232 = vunpack.c.l.b16 %v539
    %v2233 = vunpack.c.h.b16 %v539
    %v2234 = vunpack.c.l.b16 %v540
    %v2235 = vunpack.c.h.b16 %v540
    %v2236 = vunpack.c.l.b16 %v541
    %v2237 = vunpack.c.h.b16 %v541
    %v2238 = vunpack.c.l.b16 %v542
    %v2239 = vunpack.c.h.b16 %v542
    %v2240 = vunpack.c.l.b16 %v543
    %v2241 = vunpack.c.h.b16 %v543
    %v2242 = vunpack.c.l.b16 %v544
    %v2243 = vunpack.c.h.b16 %v544
    %v2244 = vunpack.c.l.b16 %v545
    %v2245 = vunpack.c.h.b16 %v545
    %v2246 = vunpack.c.l.b16 %v546
    %v2247 = vunpack.c.h.b16 %v546
    %v2248 = vunpack.c.l.b16 %v547
    %v2249 = vunpack.c.h.b16 %v547
    %v2250 = vunpack.c.l.b16 %v548
    %v2251 = vunpack.c.h.b16 %v548
    %v2252 = vunpack.c.l.b16 %v549
    %v2253 = vunpack.c.h.b16 %v549
    %v2254 = vunpack.c.l.b16 %v550
    %v2255 = vunpack.c.h.b16 %v550
    %v2256 = vunpack.c.l.b16 %v551
    %v2257 = vunpack.c.h.b16 %v551
    %v2258 = vunpack.c.l.b16 %v552
    %v2259 = vunpack.c.h.b16 %v552
    %v2260 = vunpack.c.l.b16 %v553
    %v2261 = vunpack.c.h.b16 %v553
    %v2262 = vunpack.c.l.b16 %v554
    %v2263 = vunpack.c.h.b16 %v554
    %v2264 = vunpack.c.l.b16 %v555
    %v2265 = vunpack.c.h.b16 %v555
    %v2266 = vunpack.c.l.b16 %v556
    %v2267 = vunpack.c.h.b16 %v556
    %v2268 = vunpack.c.l.b16 %v557
    %v2269 = vunpack.c.h.b16 %v557
    %v2270 = vunpack.c.l.b16 %v558
    %v2271 = vunpack.c.h.b16 %v558
    %v2272 = vunpack.c.l.b16 %v559
    %v2273 = vunpack.c.h.b16 %v559
    %v2274 = vunpack.c.l.b16 %v560
    %v2275 = vunpack.c.h.b16 %v560
    %v2276 = vunpack.c.l.b16 %v561
    %v2277 = vunpack.c.h.b16 %v561
    %v2278 = vunpack.c.l.b16 %v562
    %v2279 = vunpack.c.h.b16 %v562
    %v2280 = vunpack.c.l.b16 %v563
    %v2281 = vunpack.c.h.b16 %v563
    %v2282 = vunpack.c.l.b16 %v564
    %v2283 = vunpack.c.h.b16 %v564
    %v2284 = vunpack.c.l.b16 %v565
    %v2285 = vunpack.c.h.b16 %v565
    %v2286 = vunpack.c.l.b16 %v566
    %v2287 = vunpack.c.h.b16 %v566
    %v2288 = vunpack.c.l.b16 %v567
    %v2289 = vunpack.c.h.b16 %v567
    %v2290 = vunpack.c.l.b16 %v568
    %v2291 = vunpack.c.h.b16 %v568
    %v2292 = vunpack.c.l.b16 %v569
    %v2293 = vunpack.c.h.b16 %v569
    %v2294 = vunpack.c.l.b16 %v570
    %v2295 = vunpack.c.h.b16 %v570
    %v2296 = vunpack.c.l.b16 %v571
    %v2297 = vunpack.c.h.b16 %v571
    %v2298 = vunpack.c.l.b16 %v572
    %v2299 = vunpack.c.h.b16 %v572
    %v2300 = vunpack.c.l.b16 %v573
    %v2301 = vunpack.c.h.b16 %v573
    %v2302 = vunpack.c.l.b16 %v574
    %v2303 = vunpack.c.h.b16 %v574
    %v2304 = vunpack.c.l.b16 %v575
    %v2305 = vunpack.c.h.b16 %v575
    %v2306 = vunpack.c.l.b16 %v576
    %v2307 = vunpack.c.h.b16 %v576
    %v2308 = vunpack.c.l.b16 %v577
    %v2309 = vunpack.c.h.b16 %v577
    %v2310 = vunpack.c.l.b16 %v578
    %v2311 = vunpack.c.h.b16 %v578
    %v2312 = vunpack.c.l.b16 %v579
    %v2313 = vunpack.c.h.b16 %v579
    %v2314 = vunpack.c.l.b16 %v580
    %v2315 = vunpack.c.h.b16 %v580
    %v2316 = vunpack.c.l.b16 %v581
    %v2317 = vunpack.c.h.b16 %v581
    %v2318 = vunpack.c.l.b16 %v582
    %v2319 = vunpack.c.h.b16 %v582
    %v2320 = vunpack.c.l.b16 %v583
    %v2321 = vunpack.c.h.b16 %v583
    %v2322 = vunpack.c.l.b16 %v584
    %v2323 = vunpack.c.h.b16 %v584
    %v2324 = vunpack.c.l.b16 %v585
    %v2325 = vunpack.c.h.b16 %v585
    %v2326 = vunpack.c.l.b16 %v586
    %v2327 = vunpack.c.h.b16 %v586
    %v2328 = vunpack.c.l.b16 %v587
    %v2329 = vunpack.c.h.b16 %v587
    %v2330 = vunpack.c.l.b16 %v588
    %v2331 = vunpack.c.h.b16 %v588
    %v2332 = vunpack.c.l.b16 %v589
    %v2333 = vunpack.c.h.b16 %v589
    %v2334 = vunpack.c.l.b16 %v590
    %v2335 = vunpack.c.h.b16 %v590
    %v2336 = vunpack.c.l.b16 %v591
    %v2337 = vunpack.c.h.b16 %v591
    %v2338 = vunpack.c.l.b16 %v592
    %v2339 = vunpack.c.h.b16 %v592
    %v2340 = vunpack.c.l.b16 %v593
    %v2341 = vunpack.c.h.b16 %v593
    %v2342 = vunpack.c.l.b16 %v594
    %v2343 = vunpack.c.h.b16 %v594
    %v2344 = vunpack.c.l.b16 %v595
    %v2345 = vunpack.c.h.b16 %v595
    %v2346 = vunpack.c.l.b16 %v596
    %v2347 = vunpack.c.h.b16 %v596
    %v2348 = vunpack.c.l.b16 %v597
    %v2349 = vunpack.c.h.b16 %v597
    %v2350 = vunpack.c.l.b16 %v598
    %v2351 = vunpack.c.h.b16 %v598
    %v2352 = vunpack.c.l.b16 %v599
    %v2353 = vunpack.c.h.b16 %v599
    %v2354 = vunpack.c.l.b16 %v600
    %v2355 = vunpack.c.h.b16 %v600
    %v2356 = vunpack.c.l.b16 %v601
    %v2357 = vunpack.c.h.b16 %v601
    %v2358 = vunpack.c.l.b16 %v602
    %v2359 = vunpack.c.h.b16 %v602
    %v2360 = vunpack.c.l.b16 %v603
    %v2361 = vunpack.c.h.b16 %v603
    %v2362 = vunpack.c.l.b16 %v604
    %v2363 = vunpack.c.h.b16 %v604
    %v2364 = vunpack.c.l.b16 %v605
    %v2365 = vunpack.c.h.b16 %v605
    %v2366 = vunpack.c.l.b16 %v606
    %v2367 = vunpack.c.h.b16 %v606
    %v2368 = vunpack.c.l.b16 %v607
    %v2369 = vunpack.c.h.b16 %v607
    %v2370 = vunpack.c.l.b16 %v608
    %v2371 = vunpack.c.h.b16 %v608
    %v2372 = vunpack.c.l.b16 %v609
    %v2373 = vunpack.c.h.b16 %v609
    %v2374 = vunpack.c.l.b16 %v610
    %v2375 = vunpack.c.h.b16 %v610
    %v2376 = vunpack.c.l.b16 %v611
    %v2377 = vunpack.c.h.b16 %v611
    %v2378 = vunpack.c.l.b16 %v612
    %v2379 = vunpack.c.h.b16 %v612
    %v2380 = vunpack.c.l.b16 %v613
    %v2381 = vunpack.c.h.b16 %v613
    %v2382 = vunpack.c.l.b16 %v614
    %v2383 = vunpack.c.h.b16 %v614
    %v2384 = vunpack.c.l.b16 %v615
    %v2385 = vunpack.c.h.b16 %v615
    %v2386 = vunpack.c.l.b16 %v616
    %v2387 = vunpack.c.h.b16 %v616
    %v2388 = vunpack.c.l.b16 %v617
    %v2389 = vunpack.c.h.b16 %v617
    %v2390 = vunpack.c.l.b16 %v618
    %v2391 = vunpack.c.h.b16 %v618
    %v2392 = vunpack.c.l.b16 %v619
    %v2393 = vunpack.c.h.b16 %v619
    %v2394 = vunpack.c.l.b16 %v620
    %v2395 = vunpack.c.h.b16 %v620
    %v2396 = vunpack.c.l.b16 %v621
    %v2397 = vunpack.c.h.b16 %v621
    %v2398 = vunpack.c.l.b16 %v622
    %v2399 = vunpack.c.h.b16 %v622
    %v2400 = vunpack.c.l.b16 %v623
    %v2401 = vunpack.c.h.b16 %v623
    %v2402 = vunpack.c.l.b16 %v624
    %v2403 = vunpack.c.h.b16 %v624
    %v2404 = vunpack.c.l.b16 %v625
    %v2405 = vunpack.c.h.b16 %v625
    %v2406 = vunpack.c.l.b16 %v626
    %v2407 = vunpack.c.h.b16 %v626
    %v2408 = vunpack.c.l.b16 %v627
    %v2409 = vunpack.c.h.b16 %v627
    %v2410 = vunpack.c.l.b16 %v628
    %v2411 = vunpack.c.h.b16 %v628
    %v2412 = vunpack.c.l.b16 %v629
    %v2413 = vunpack.c.h.b16 %v629
    %v2414 = vunpack.c.l.b16 %v630
    %v2415 = vunpack.c.h.b16 %v630
    %v2416 = vunpack.c.l.b16 %v631
    %v2417 = vunpack.c.h.b16 %v631
    %v2418 = vunpack.c.l.b16 %v632
    %v2419 = vunpack.c.h.b16 %v632
    %v2420 = vunpack.c.l.b16 %v633
    %v2421 = vunpack.c.h.b16 %v633
    %v2422 = vunpack.c.l.b16 %v634
    %v2423 = vunpack.c.h.b16 %v634
    %v2424 = vunpack.c.l.b16 %v635
    %v2425 = vunpack.c.h.b16 %v635
    %v2426 = vunpack.c.l.b16 %v636
    %v2427 = vunpack.c.h.b16 %v636
    %v2428 = vpack.c.b16 %v1280, %v1276
    %v2429 = vpack.c.b16 %v1281, %v1277
    %v2430 = vpack.c.b16 %v1282, %v1278
    %v2431 = vpack.c.b16 %v1283, %v1279
    %v2432 = vpack.c.b16 %v1288, %v1284
    %v2433 = vpack.c.b16 %v1289, %v1285
    %v2434 = vpack.c.b16 %v1290, %v1286
    %v2435 = vpack.c.b16 %v1291, %v1287
    %v2436 = vpack.c.b16 %v1296, %v1292
    %v2437 = vpack.c.b16 %v1297, %v1293
    %v2438 = vpack.c.b16 %v1298, %v1294
    %v2439 = vpack.c.b16 %v1299, %v1295
    %v2440 = vpack.c.b16 %v1304, %v1300
    %v2441 = vpack.c.b16 %v1305, %v1301
    %v2442 = vpack.c.b16 %v1306, %v1302
    %v2443 = vpack.c.b16 %v1307, %v1303
    %v2444 = vpack.c.b16 %v1312, %v1308
    %v2445 = vpack.c.b16 %v1313, %v1309
    %v2446 = vpack.c.b16 %v1314, %v1310
    %v2447 = vpack.c.b16 %v1315, %v1311
    %v2448 = vpack.c.b16 %v1320, %v1316
    %v2449 = vpack.c.b16 %v1321, %v1317
    %v2450 = vpack.c.b16 %v1322, %v1318
    %v2451 = vpack.c.b16 %v1323, %v1319
    %v2452 = vpack.c.b16 %v1328, %v1324
    %v2453 = vpack.c.b16 %v1329, %v1325
    %v2454 = vpack.c.b16 %v1330, %v1326
    %v2455 = vpack.c.b16 %v1331, %v1327
    %v2456 = vpack.c.b16 %v1336, %v1332
    %v2457 = vpack.c.b16 %v1337, %v1333
    %v2458 = vpack.c.b16 %v1338, %v1334
    %v2459 = vpack.c.b16 %v1339, %v1335
    %v2460 = vpack.c.b16 %v1344, %v1340
    %v2461 = vpack.c.b16 %v1345, %v1341
    %v2462 = vpack.c.b16 %v1346, %v1342
    %v2463 = vpack.c.b16 %v1347, %v1343
    %v2464 = vpack.c.b16 %v1352, %v1348
    %v2465 = vpack.c.b16 %v1353, %v1349
    %v2466 = vpack.c.b16 %v1354, %v1350
    %v2467 = vpack.c.b16 %v1355, %v1351
    %v2468 = vpack.c.b16 %v1360, %v1356
    %v2469 = vpack.c.b16 %v1361, %v1357
    %v2470 = vpack.c.b16 %v1362, %v1358
    %v2471 = vpack.c.b16 %v1363, %v1359
    %v2472 = vpack.c.b16 %v1368, %v1364
    %v2473 = vpack.c.b16 %v1369, %v1365
    %v2474 = vpack.c.b16 %v1370, %v1366
    %v2475 = vpack.c.b16 %v1371, %v1367
    %v2476 = vpack.c.b16 %v1376, %v1372
    %v2477 = vpack.c.b16 %v1377, %v1373
    %v2478 = vpack.c.b16 %v1378, %v1374
    %v2479 = vpack.c.b16 %v1379, %v1375
    %v2480 = vpack.c.b16 %v1384, %v1380
    %v2481 = vpack.c.b16 %v1385, %v1381
    %v2482 = vpack.c.b16 %v1386, %v1382
    %v2483 = vpack.c.b16 %v1387, %v1383
    %v2484 = vpack.c.b16 %v1392, %v1388
    %v2485 = vpack.c.b16 %v1393, %v1389
    %v2486 = vpack.c.b16 %v1394, %v1390
    %v2487 = vpack.c.b16 %v1395, %v1391
    %v2488 = vpack.c.b16 %v1400, %v1396
    %v2489 = vpack.c.b16 %v1401, %v1397
    %v2490 = vpack.c.b16 %v1402, %v1398
    %v2491 = vpack.c.b16 %v1403, %v1399
    %v2492 = vpack.c.b16 %v1408, %v1404
    %v2493 = vpack.c.b16 %v1409, %v1405
    %v2494 = vpack.c.b16 %v1410, %v1406
    %v2495 = vpack.c.b16 %v1411, %v1407
    %v2496 = vpack.c.b16 %v1416, %v1412
    %v2497 = vpack.c.b16 %v1417, %v1413
    %v2498 = vpack.c.b16 %v1418, %v1414
    %v2499 = vpack.c.b16 %v1419, %v1415
    %v2500 = vpack.c.b16 %v1424, %v1420
    %v2501 = vpack.c.b16 %v1425, %v1421
    %v2502 = vpack.c.b16 %v1426, %v1422
    %v2503 = vpack.c.b16 %v1427, %v1423
    %v2504 = vpack.c.b16 %v1432, %v1428
    %v2505 = vpack.c.b16 %v1433, %v1429
    %v2506 = vpack.c.b16 %v1434, %v1430
    %v2507 = vpack.c.b16 %v1435, %v1431
    %v2508 = vpack.c.b16 %v1440, %v1436
    %v2509 = vpack.c.b16 %v1441, %v1437
    %v2510 = vpack.c.b16 %v1442, %v1438
    %v2511 = vpack.c.b16 %v1443, %v1439
    %v2512 = vpack.c.b16 %v1448, %v1444
    %v2513 = vpack.c.b16 %v1449, %v1445
    %v2514 = vpack.c.b16 %v1450, %v1446
    %v2515 = vpack.c.b16 %v1451, %v1447
    %v2516 = vpack.c.b16 %v1456, %v1452
    %v2517 = vpack.c.b16 %v1457, %v1453
    %v2518 = vpack.c.b16 %v1458, %v1454
    %v2519 = vpack.c.b16 %v1459, %v1455
    %v2520 = vpack.c.b16 %v1464, %v1460
    %v2521 = vpack.c.b16 %v1465, %v1461
    %v2522 = vpack.c.b16 %v1466, %v1462
    %v2523 = vpack.c.b16 %v1467, %v1463
    %v2524 = vpack.c.b16 %v1472, %v1468
    %v2525 = vpack.c.b16 %v1473, %v1469
    %v2526 = vpack.c.b16 %v1474, %v1470
    %v2527 = vpack.c.b16 %v1475, %v1471
    %v2528 = vpack.c.b16 %v1480, %v1476
    %v2529 = vpack.c.b16 %v1481, %v1477
    %v2530 = vpack.c.b16 %v1482, %v1478
    %v2531 = vpack.c.b16 %v1483, %v1479
    %v2532 = vpack.c.b16 %v1488, %v1484
    %v2533 = vpack.c.b16 %v1489, %v1485
    %v2534 = vpack.c.b16 %v1490, %v1486
    %v2535 = vpack.c.b16 %v1491, %v1487
    %v2536 = vpack.c.b16 %v1496, %v1492
    %v2537 = vpack.c.b16 %v1497, %v1493
    %v2538 = vpack.c.b16 %v1498, %v1494
    %v2539 = vpack.c.b16 %v1499, %v1495
    %v2540 = vpack.c.b16 %v1504, %v1500
    %v2541 = vpack.c.b16 %v1505, %v1501
    %v2542 = vpack.c.b16 %v1506, %v1502
    %v2543 = vpack.c.b16 %v1507, %v1503
    %v2544 = vpack.c.b16 %v1512, %v1508
    %v2545 = vpack.c.b16 %v1513, %v1509
    %v2546 = vpack.c.b16 %v1514, %v1510
    %v2547 = vpack.c.b16 %v1515, %v1511
    %v2548 = vpack.c.b16 %v1520, %v1516
    %v2549 = vpack.c.b16 %v1521, %v1517
    %v2550 = vpack.c.b16 %v1522, %v1518
    %v2551 = vpack.c.b16 %v1523, %v1519
    %v2552 = vpack.c.b16 %v1528, %v1524
    %v2553 = vpack.c.b16 %v1529, %v1525
    %v2554 = vpack.c.b16 %v1530, %v1526
    %v2555 = vpack.c.b16 %v1531, %v1527
    %v2556 = vpack.c.b16 %v1536, %v1532
    %v2557 = vpack.c.b16 %v1537, %v1533
    %v2558 = vpack.c.b16 %v1538, %v1534
    %v2559 = vpack.c.b16 %v1539, %v1535
    %v2560 = vpack.c.b16 %v1544, %v1540
    %v2561 = vpack.c.b16 %v1545, %v1541
    %v2562 = vpack.c.b16 %v1546, %v1542
    %v2563 = vpack.c.b16 %v1547, %v1543
    %v2564 = vpack.c.b16 %v1552, %v1548
    %v2565 = vpack.c.b16 %v1553, %v1549
    %v2566 = vpack.c.b16 %v1554, %v1550
    %v2567 = vpack.c.b16 %v1555, %v1551
    %v2568 = vpack.c.b16 %v1560, %v1556
    %v2569 = vpack.c.b16 %v1561, %v1557
    %v2570 = vpack.c.b16 %v1562, %v1558
    %v2571 = vpack.c.b16 %v1563, %v1559
    %v2572 = vpack.c.b16 %v1568, %v1564
    %v2573 = vpack.c.b16 %v1569, %v1565
    %v2574 = vpack.c.b16 %v1570, %v1566
    %v2575 = vpack.c.b16 %v1571, %v1567
    %v2576 = vpack.c.b16 %v1576, %v1572
    %v2577 = vpack.c.b16 %v1577, %v1573
    %v2578 = vpack.c.b16 %v1578, %v1574
    %v2579 = vpack.c.b16 %v1579, %v1575
    %v2580 = vpack.c.b16 %v1584, %v1580
    %v2581 = vpack.c.b16 %v1585, %v1581
    %v2582 = vpack.c.b16 %v1586, %v1582
    %v2583 = vpack.c.b16 %v1587, %v1583
    %v2584 = vpack.c.b16 %v1592, %v1588
    %v2585 = vpack.c.b16 %v1593, %v1589
    %v2586 = vpack.c.b16 %v1594, %v1590
    %v2587 = vpack.c.b16 %v1595, %v1591
    %v2588 = vpack.c.b16 %v1600, %v1596
    %v2589 = vpack.c.b16 %v1601, %v1597
    %v2590 = vpack.c.b16 %v1602, %v1598
    %v2591 = vpack.c.b16 %v1603, %v1599
    %v2592 = vpack.c.b16 %v1608, %v1604
    %v2593 = vpack.c.b16 %v1609, %v1605
    %v2594 = vpack.c.b16 %v1610, %v1606
    %v2595 = vpack.c.b16 %v1611, %v1607
    %v2596 = vpack.c.b16 %v1616, %v1612
    %v2597 = vpack.c.b16 %v1617, %v1613
    %v2598 = vpack.c.b16 %v1618, %v1614
    %v2599 = vpack.c.b16 %v1619, %v1615
    %v2600 = vpack.c.b16 %v1624, %v1620
    %v2601 = vpack.c.b16 %v1625, %v1621
    %v2602 = vpack.c.b16 %v1626, %v1622
    %v2603 = vpack.c.b16 %v1627, %v1623
    %v2604 = vpack.c.b16 %v1632, %v1628
    %v2605 = vpack.c.b16 %v1633, %v1629
    %v2606 = vpack.c.b16 %v1634, %v1630
    %v2607 = vpack.c.b16 %v1635, %v1631
    %v2608 = vpack.c.b16 %v1640, %v1636
    %v2609 = vpack.c.b16 %v1641, %v1637
    %v2610 = vpack.c.b16 %v1642, %v1638
    %v2611 = vpack.c.b16 %v1643, %v1639
    %v2612 = vpack.c.b16 %v1648, %v1644
    %v2613 = vpack.c.b16 %v1649, %v1645
    %v2614 = vpack.c.b16 %v1650, %v1646
    %v2615 = vpack.c.b16 %v1651, %v1647
    %v2616 = vpack.c.b16 %v1656, %v1652
    %v2617 = vpack.c.b16 %v1657, %v1653
    %v2618 = vpack.c.b16 %v1658, %v1654
    %v2619 = vpack.c.b16 %v1659, %v1655
    %v2620 = vpack.c.b16 %v1664, %v1660
    %v2621 = vpack.c.b16 %v1665, %v1661
    %v2622 = vpack.c.b16 %v1666, %v1662
    %v2623 = vpack.c.b16 %v1667, %v1663
    %v2624 = vpack.c.b16 %v1672, %v1668
    %v2625 = vpack.c.b16 %v1673, %v1669
    %v2626 = vpack.c.b16 %v1674, %v1670
    %v2627 = vpack.c.b16 %v1675, %v1671
    %v2628 = vpack.c.b16 %v1680, %v1676
    %v2629 = vpack.c.b16 %v1681, %v1677
    %v2630 = vpack.c.b16 %v1682, %v1678
    %v2631 = vpack.c.b16 %v1683, %v1679
    %v2632 = vpack.c.b16 %v1688, %v1684
    %v2633 = vpack.c.b16 %v1689, %v1685
    %v2634 = vpack.c.b16 %v1690, %v1686
    %v2635 = vpack.c.b16 %v1691, %v1687
    %v2636 = vpack.c.b16 %v1696, %v1692
    %v2637 = vpack.c.b16 %v1697, %v1693
    %v2638 = vpack.c.b16 %v1698, %v1694
    %v2639 = vpack.c.b16 %v1699, %v1695
    %v2640 = vpack.c.b16 %v1704, %v1700
    %v2641 = vpack.c.b16 %v1705, %v1701
    %v2642 = vpack.c.b16 %v1706, %v1702
    %v2643 = vpack.c.b16 %v1707, %v1703
    %v2644 = vpack.c.b16 %v1712, %v1708
    %v2645 = vpack.c.b16 %v1713, %v1709
    %v2646 = vpack.c.b16 %v1714, %v1710
    %v2647 = vpack.c.b16 %v1715, %v1711
    %v2648 = vpack.c.b16 %v1720, %v1716
    %v2649 = vpack.c.b16 %v1721, %v1717
    %v2650 = vpack.c.b16 %v1722, %v1718
    %v2651 = vpack.c.b16 %v1723, %v1719
    %v2652 = vpack.c.b16 %v1728, %v1724
    %v2653 = vpack.c.b16 %v1729, %v1725
    %v2654 = vpack.c.b16 %v1730, %v1726
    %v2655 = vpack.c.b16 %v1731, %v1727
    %v2656 = vpack.c.b16 %v1736, %v1732
    %v2657 = vpack.c.b16 %v1737, %v1733
    %v2658 = vpack.c.b16 %v1738, %v1734
    %v2659 = vpack.c.b16 %v1739, %v1735
    %v2660 = vpack.c.b16 %v1744, %v1740
    %v2661 = vpack.c.b16 %v1745, %v1741
    %v2662 = vpack.c.b16 %v1746, %v1742
    %v2663 = vpack.c.b16 %v1747, %v1743
    %v2664 = vpack.c.b16 %v1752, %v1748
    %v2665 = vpack.c.b16 %v1753, %v1749
    %v2666 = vpack.c.b16 %v1754, %v1750
    %v2667 = vpack.c.b16 %v1755, %v1751
    %v2668 = vpack.c.b16 %v1760, %v1756
    %v2669 = vpack.c.b16 %v1761, %v1757
    %v2670 = vpack.c.b16 %v1762, %v1758
    %v2671 = vpack.c.b16 %v1763, %v1759
    %v2672 = vpack.c.b16 %v1768, %v1764
    %v2673 = vpack.c.b16 %v1769, %v1765
    %v2674 = vpack.c.b16 %v1770, %v1766
    %v2675 = vpack.c.b16 %v1771, %v1767
    %v2676 = vpack.c.b16 %v1776, %v1772
    %v2677 = vpack.c.b16 %v1777, %v1773
    %v2678 = vpack.c.b16 %v1778, %v1774
    %v2679 = vpack.c.b16 %v1779, %v1775
    %v2680 = vpack.c.b16 %v1784, %v1780
    %v2681 = vpack.c.b16 %v1785, %v1781
    %v2682 = vpack.c.b16 %v1786, %v1782
    %v2683 = vpack.c.b16 %v1787, %v1783
    %v2684 = vpack.c.b16 %v1792, %v1788
    %v2685 = vpack.c.b16 %v1793, %v1789
    %v2686 = vpack.c.b16 %v1794, %v1790
    %v2687 = vpack.c.b16 %v1795, %v1791
    %v2688 = vpack.c.b16 %v1800, %v1796
    %v2689 = vpack.c.b16 %v1801, %v1797
    %v2690 = vpack.c.b16 %v1802, %v1798
    %v2691 = vpack.c.b16 %v1803, %v1799
    %v2692 = vpack.c.b16 %v1808, %v1804
    %v2693 = vpack.c.b16 %v1809, %v1805
    %v2694 = vpack.c.b16 %v1810, %v1806
    %v2695 = vpack.c.b16 %v1811, %v1807
    %v2696 = vpack.c.b16 %v1816, %v1812
    %v2697 = vpack.c.b16 %v1817, %v1813
    %v2698 = vpack.c.b16 %v1818, %v1814
    %v2699 = vpack.c.b16 %v1819, %v1815
    %v2700 = vpack.c.b16 %v1824, %v1820
    %v2701 = vpack.c.b16 %v1825, %v1821
    %v2702 = vpack.c.b16 %v1826, %v1822
    %v2703 = vpack.c.b16 %v1827, %v1823
    %v2704 = vpack.c.b16 %v1832, %v1828
    %v2705 = vpack.c.b16 %v1833, %v1829
    %v2706 = vpack.c.b16 %v1834, %v1830
    %v2707 = vpack.c.b16 %v1835, %v1831
    %v2708 = vpack.c.b16 %v1840, %v1836
    %v2709 = vpack.c.b16 %v1841, %v1837
    %v2710 = vpack.c.b16 %v1842, %v1838
    %v2711 = vpack.c.b16 %v1843, %v1839
    %v2712 = vpack.c.b16 %v1848, %v1844
    %v2713 = vpack.c.b16 %v1849, %v1845
    %v2714 = vpack.c.b16 %v1850, %v1846
    %v2715 = vpack.c.b16 %v1851, %v1847
    %v2716 = vpack.c.b16 %v1856, %v1852
    %v2717 = vpack.c.b16 %v1857, %v1853
    %v2718 = vpack.c.b16 %v1858, %v1854
    %v2719 = vpack.c.b16 %v1859, %v1855
    %v2720 = vpack.c.b16 %v1864, %v1860
    %v2721 = vpack.c.b16 %v1865, %v1861
    %v2722 = vpack.c.b16 %v1866, %v1862
    %v2723 = vpack.c.b16 %v1867, %v1863
    %v2724 = vpack.c.b16 %v1872, %v1868
    %v2725 = vpack.c.b16 %v1873, %v1869
    %v2726 = vpack.c.b16 %v1874, %v1870
    %v2727 = vpack.c.b16 %v1875, %v1871
    %v2728 = vpack.c.b16 %v1880, %v1876
    %v2729 = vpack.c.b16 %v1881, %v1877
    %v2730 = vpack.c.b16 %v1882, %v1878
    %v2731 = vpack.c.b16 %v1883, %v1879
    %v2732 = vpack.c.b16 %v1888, %v1884
    %v2733 = vpack.c.b16 %v1889, %v1885
    %v2734 = vpack.c.b16 %v1890, %v1886
    %v2735 = vpack.c.b16 %v1891, %v1887
    %v2736 = vpack.c.b16 %v1896, %v1892
    %v2737 = vpack.c.b16 %v1897, %v1893
    %v2738 = vpack.c.b16 %v1898, %v1894
    %v2739 = vpack.c.b16 %v1899, %v1895
    %v2740 = vpack.c.b16 %v1904, %v1900
    %v2741 = vpack.c.b16 %v1905, %v1901
    %v2742 = vpack.c.b16 %v1906, %v1902
    %v2743 = vpack.c.b16 %v1907, %v1903
    %v2744 = vpack.c.b16 %v1912, %v1908
    %v2745 = vpack.c.b16 %v1913, %v1909
    %v2746 = vpack.c.b16 %v1914, %v1910
    %v2747 = vpack.c.b16 %v1915, %v1911
    %v2748 = vpack.c.b16 %v1920, %v1916
    %v2749 = vpack.c.b16 %v1921, %v1917
    %v2750 = vpack.c.b16 %v1922, %v1918
    %v2751 = vpack.c.b16 %v1923, %v1919
    %v2752 = vpack.c.b16 %v1928, %v1924
    %v2753 = vpack.c.b16 %v1929, %v1925
    %v2754 = vpack.c.b16 %v1930, %v1926
    %v2755 = vpack.c.b16 %v1931, %v1927
    %v2756 = vpack.c.b16 %v1936, %v1932
    %v2757 = vpack.c.b16 %v1937, %v1933
    %v2758 = vpack.c.b16 %v1938, %v1934
    %v2759 = vpack.c.b16 %v1939, %v1935
    %v2760 = vpack.c.b16 %v1944, %v1940
    %v2761 = vpack.c.b16 %v1945, %v1941
    %v2762 = vpack.c.b16 %v1946, %v1942
    %v2763 = vpack.c.b16 %v1947, %v1943
    %v2764 = vpack.c.b16 %v1952, %v1948
    %v2765 = vpack.c.b16 %v1953, %v1949
    %v2766 = vpack.c.b16 %v1954, %v1950
    %v2767 = vpack.c.b16 %v1955, %v1951
    %v2768 = vpack.c.b16 %v1960, %v1956
    %v2769 = vpack.c.b16 %v1961, %v1957
    %v2770 = vpack.c.b16 %v1962, %v1958
    %v2771 = vpack.c.b16 %v1963, %v1959
    %v2772 = vpack.c.b16 %v1968, %v1964
    %v2773 = vpack.c.b16 %v1969, %v1965
    %v2774 = vpack.c.b16 %v1970, %v1966
    %v2775 = vpack.c.b16 %v1971, %v1967
    %v2776 = vpack.c.b16 %v1976, %v1972
    %v2777 = vpack.c.b16 %v1977, %v1973
    %v2778 = vpack.c.b16 %v1978, %v1974
    %v2779 = vpack.c.b16 %v1979, %v1975
    %v2780 = vpack.c.b16 %v1984, %v1980
    %v2781 = vpack.c.b16 %v1985, %v1981
    %v2782 = vpack.c.b16 %v1986, %v1982
    %v2783 = vpack.c.b16 %v1987, %v1983
    %v2784 = vpack.c.b16 %v1992, %v1988
    %v2785 = vpack.c.b16 %v1993, %v1989
    %v2786 = vpack.c.b16 %v1994, %v1990
    %v2787 = vpack.c.b16 %v1995, %v1991
    %v2788 = vpack.c.b16 %v2000, %v1996
    %v2789 = vpack.c.b16 %v2001, %v1997
    %v2790 = vpack.c.b16 %v2002, %v1998
    %v2791 = vpack.c.b16 %v2003, %v1999
    %v2792 = vpack.c.b16 %v2008, %v2004
    %v2793 = vpack.c.b16 %v2009, %v2005
    %v2794 = vpack.c.b16 %v2010, %v2006
    %v2795 = vpack.c.b16 %v2011, %v2007
    %v2796 = vpack.c.b16 %v2016, %v2012
    %v2797 = vpack.c.b16 %v2017, %v2013
    %v2798 = vpack.c.b16 %v2018, %v2014
    %v2799 = vpack.c.b16 %v2019, %v2015
    %v2800 = vpack.c.b16 %v2024, %v2020
    %v2801 = vpack.c.b16 %v2025, %v2021
    %v2802 = vpack.c.b16 %v2026, %v2022
    %v2803 = vpack.c.b16 %v2027, %v2023
    %v2804 = vpack.c.b16 %v2032, %v2028
    %v2805 = vpack.c.b16 %v2033, %v2029
    %v2806 = vpack.c.b16 %v2034, %v2030
    %v2807 = vpack.c.b16 %v2035, %v2031
    %v2808 = vpack.c.b16 %v2040, %v2036
    %v2809 = vpack.c.b16 %v2041, %v2037
    %v2810 = vpack.c.b16 %v2042, %v2038
    %v2811 = vpack.c.b16 %v2043, %v2039
    %v2812 = vpack.c.b16 %v2048, %v2044
    %v2813 = vpack.c.b16 %v2049, %v2045
    %v2814 = vpack.c.b16 %v2050, %v2046
    %v2815 = vpack.c.b16 %v2051, %v2047
    %v2816 = vpack.c.b16 %v2056, %v2052
    %v2817 = vpack.c.b16 %v2057, %v2053
    %v2818 = vpack.c.b16 %v2058, %v2054
    %v2819 = vpack.c.b16 %v2059, %v2055
    %v2820 = vpack.c.b16 %v2064, %v2060
    %v2821 = vpack.c.b16 %v2065, %v2061
    %v2822 = vpack.c.b16 %v2066, %v2062
    %v2823 = vpack.c.b16 %v2067, %v2063
    %v2824 = vpack.c.b16 %v2072, %v2068
    %v2825 = vpack.c.b16 %v2073, %v2069
    %v2826 = vpack.c.b16 %v2074, %v2070
    %v2827 = vpack.c.b16 %v2075, %v2071
    %v2828 = vpack.c.b16 %v2080, %v2076
    %v2829 = vpack.c.b16 %v2081, %v2077
    %v2830 = vpack.c.b16 %v2082, %v2078
    %v2831 = vpack.c.b16 %v2083, %v2079
    %v2832 = vpack.c.b16 %v2088, %v2084
    %v2833 = vpack.c.b16 %v2089, %v2085
    %v2834 = vpack.c.b16 %v2090, %v2086
    %v2835 = vpack.c.b16 %v2091, %v2087
    %v2836 = vpack.c.b16 %v2096, %v2092
    %v2837 = vpack.c.b16 %v2097, %v2093
    %v2838 = vpack.c.b16 %v2098, %v2094
    %v2839 = vpack.c.b16 %v2099, %v2095
    %v2840 = vpack.c.b16 %v2104, %v2100
    %v2841 = vpack.c.b16 %v2105, %v2101
    %v2842 = vpack.c.b16 %v2106, %v2102
    %v2843 = vpack.c.b16 %v2107, %v2103
    %v2844 = vpack.c.b16 %v2112, %v2108
    %v2845 = vpack.c.b16 %v2113, %v2109
    %v2846 = vpack.c.b16 %v2114, %v2110
    %v2847 = vpack.c.b16 %v2115, %v2111
    %v2848 = vpack.c.b16 %v2120, %v2116
    %v2849 = vpack.c.b16 %v2121, %v2117
    %v2850 = vpack.c.b16 %v2122, %v2118
    %v2851 = vpack.c.b16 %v2123, %v2119
    %v2852 = vpack.c.b16 %v2128, %v2124
    %v2853 = vpack.c.b16 %v2129, %v2125
    %v2854 = vpack.c.b16 %v2130, %v2126
    %v2855 = vpack.c.b16 %v2131, %v2127
    %v2856 = vpack.c.b16 %v2136, %v2132
    %v2857 = vpack.c.b16 %v2137, %v2133
    %v2858 = vpack.c.b16 %v2138, %v2134
    %v2859 = vpack.c.b16 %v2139, %v2135
    %v2860 = vpack.c.b16 %v2144, %v2140
    %v2861 = vpack.c.b16 %v2145, %v2141
    %v2862 = vpack.c.b16 %v2146, %v2142
    %v2863 = vpack.c.b16 %v2147, %v2143
    %v2864 = vpack.c.b16 %v2152, %v2148
    %v2865 = vpack.c.b16 %v2153, %v2149
    %v2866 = vpack.c.b16 %v2154, %v2150
    %v2867 = vpack.c.b16 %v2155, %v2151
    %v2868 = vpack.c.b16 %v2160, %v2156
    %v2869 = vpack.c.b16 %v2161, %v2157
    %v2870 = vpack.c.b16 %v2162, %v2158
    %v2871 = vpack.c.b16 %v2163, %v2159
    %v2872 = vpack.c.b16 %v2168, %v2164
    %v2873 = vpack.c.b16 %v2169, %v2165
    %v2874 = vpack.c.b16 %v2170, %v2166
    %v2875 = vpack.c.b16 %v2171, %v2167
    %v2876 = vpack.c.b16 %v2176, %v2172
    %v2877 = vpack.c.b16 %v2177, %v2173
    %v2878 = vpack.c.b16 %v2178, %v2174
    %v2879 = vpack.c.b16 %v2179, %v2175
    %v2880 = vpack.c.b16 %v2184, %v2180
    %v2881 = vpack.c.b16 %v2185, %v2181
    %v2882 = vpack.c.b16 %v2186, %v2182
    %v2883 = vpack.c.b16 %v2187, %v2183
    %v2884 = vpack.c.b16 %v2192, %v2188
    %v2885 = vpack.c.b16 %v2193, %v2189
    %v2886 = vpack.c.b16 %v2194, %v2190
    %v2887 = vpack.c.b16 %v2195, %v2191
    %v2888 = vpack.c.b16 %v2200, %v2196
    %v2889 = vpack.c.b16 %v2201, %v2197
    %v2890 = vpack.c.b16 %v2202, %v2198
    %v2891 = vpack.c.b16 %v2203, %v2199
    %v2892 = vpack.c.b16 %v2208, %v2204
    %v2893 = vpack.c.b16 %v2209, %v2205
    %v2894 = vpack.c.b16 %v2210, %v2206
    %v2895 = vpack.c.b16 %v2211, %v2207
    %v2896 = vpack.c.b16 %v2216, %v2212
    %v2897 = vpack.c.b16 %v2217, %v2213
    %v2898 = vpack.c.b16 %v2218, %v2214
    %v2899 = vpack.c.b16 %v2219, %v2215
    %v2900 = vpack.c.b16 %v2224, %v2220
    %v2901 = vpack.c.b16 %v2225, %v2221
    %v2902 = vpack.c.b16 %v2226, %v2222
    %v2903 = vpack.c.b16 %v2227, %v2223
    %v2904 = vpack.c.b16 %v2232, %v2228
    %v2905 = vpack.c.b16 %v2233, %v2229
    %v2906 = vpack.c.b16 %v2234, %v2230
    %v2907 = vpack.c.b16 %v2235, %v2231
    %v2908 = vpack.c.b16 %v2240, %v2236
    %v2909 = vpack.c.b16 %v2241, %v2237
    %v2910 = vpack.c.b16 %v2242, %v2238
    %v2911 = vpack.c.b16 %v2243, %v2239
    %v2912 = vpack.c.b16 %v2248, %v2244
    %v2913 = vpack.c.b16 %v2249, %v2245
    %v2914 = vpack.c.b16 %v2250, %v2246
    %v2915 = vpack.c.b16 %v2251, %v2247
    %v2916 = vpack.c.b16 %v2256, %v2252
    %v2917 = vpack.c.b16 %v2257, %v2253
    %v2918 = vpack.c.b16 %v2258, %v2254
    %v2919 = vpack.c.b16 %v2259, %v2255
    %v2920 = vpack.c.b16 %v2264, %v2260
    %v2921 = vpack.c.b16 %v2265, %v2261
    %v2922 = vpack.c.b16 %v2266, %v2262
    %v2923 = vpack.c.b16 %v2267, %v2263
    %v2924 = vpack.c.b16 %v2272, %v2268
    %v2925 = vpack.c.b16 %v2273, %v2269
    %v2926 = vpack.c.b16 %v2274, %v2270
    %v2927 = vpack.c.b16 %v2275, %v2271
    %v2928 = vpack.c.b16 %v2280, %v2276
    %v2929 = vpack.c.b16 %v2281, %v2277
    %v2930 = vpack.c.b16 %v2282, %v2278
    %v2931 = vpack.c.b16 %v2283, %v2279
    %v2932 = vpack.c.b16 %v2288, %v2284
    %v2933 = vpack.c.b16 %v2289, %v2285
    %v2934 = vpack.c.b16 %v2290, %v2286
    %v2935 = vpack.c.b16 %v2291, %v2287
    %v2936 = vpack.c.b16 %v2296, %v2292
    %v2937 = vpack.c.b16 %v2297, %v2293
    %v2938 = vpack.c.b16 %v2298, %v2294
    %v2939 = vpack.c.b16 %v2299, %v2295
    %v2940 = vpack.c.b16 %v2304, %v2300
    %v2941 = vpack.c.b16 %v2305, %v2301
    %v2942 = vpack.c.b16 %v2306, %v2302
    %v2943 = vpack.c.b16 %v2307, %v2303
    %v2944 = vpack.c.b16 %v2312, %v2308
    %v2945 = vpack.c.b16 %v2313, %v2309
    %v2946 = vpack.c.b16 %v2314, %v2310
    %v2947 = vpack.c.b16 %v2315, %v2311
    %v2948 = vpack.c.b16 %v2320, %v2316
    %v2949 = vpack.c.b16 %v2321, %v2317
    %v2950 = vpack.c.b16 %v2322, %v2318
    %v2951 = vpack.c.b16 %v2323, %v2319
    %v2952 = vpack.c.b16 %v2328, %v2324
    %v2953 = vpack.c.b16 %v2329, %v2325
    %v2954 = vpack.c.b16 %v2330, %v2326
    %v2955 = vpack.c.b16 %v2331, %v2327
    %v2956 = vpack.c.b16 %v2336, %v2332
    %v2957 = vpack.c.b16 %v2337, %v2333
    %v2958 = vpack.c.b16 %v2338, %v2334
    %v2959 = vpack.c.b16 %v2339, %v2335
    %v2960 = vpack.c.b16 %v2344, %v2340
    %v2961 = vpack.c.b16 %v2345, %v2341
    %v2962 = vpack.c.b16 %v2346, %v2342
    %v2963 = vpack.c.b16 %v2347, %v2343
    %v2964 = vpack.c.b16 %v2352, %v2348
    %v2965 = vpack.c.b16 %v2353, %v2349
    %v2966 = vpack.c.b16 %v2354, %v2350
    %v2967 = vpack.c.b16 %v2355, %v2351
    %v2968 = vpack.c.b16 %v2360, %v2356
    %v2969 = vpack.c.b16 %v2361, %v2357
    %v2970 = vpack.c.b16 %v2362, %v2358
    %v2971 = vpack.c.b16 %v2363, %v2359
    %v2972 = vpack.c.b16 %v2368, %v2364
    %v2973 = vpack.c.b16 %v2369, %v2365
    %v2974 = vpack.c.b16 %v2370, %v2366
    %v2975 = vpack.c.b16 %v2371, %v2367
    %v2976 = vpack.c.b16 %v2376, %v2372
    %v2977 = vpack.c.b16 %v2377, %v2373
    %v2978 = vpack.c.b16 %v2378, %v2374
    %v2979 = vpack.c.b16 %v2379, %v2375
    %v2980 = vpack.c.b16 %v2384, %v2380
    %v2981 = vpack.c.b16 %v2385, %v2381
    %v2982 = vpack.c.b16 %v2386, %v2382
    %v2983 = vpack.c.b16 %v2387, %v2383
    %v2984 = vpack.c.b16 %v2392, %v2388
    %v2985 = vpack.c.b16 %v2393, %v2389
    %v2986 = vpack.c.b16 %v2394, %v2390
    %v2987 = vpack.c.b16 %v2395, %v2391
    %v2988 = vpack.c.b16 %v2400, %v2396
    %v2989 = vpack.c.b16 %v2401, %v2397
    %v2990 = vpack.c.b16 %v2402, %v2398
    %v2991 = vpack.c.b16 %v2403, %v2399
    %v2992 = vpack.c.b16 %v2408, %v2404
    %v2993 = vpack.c.b16 %v2409, %v2405
    %v2994 = vpack.c.b16 %v2410, %v2406
    %v2995 = vpack.c.b16 %v2411, %v2407
    %v2996 = vpack.c.b16 %v2416, %v2412
    %v2997 = vpack.c.b16 %v2417, %v2413
    %v2998 = vpack.c.b16 %v2418, %v2414
    %v2999 = vpack.c.b16 %v2419, %v2415
    %v3000 = vpack.c.b16 %v2424, %v2420
    %v3001 = vpack.c.b16 %v2425, %v2421
    %v3002 = vpack.c.b16 %v2426, %v2422
    %v3003 = vpack.c.b16 %v2427, %v2423
    %3580 = vmatprep.subr.bf16.mxu0 %v2429
    %3581 = vmatpush1.bf16.msra.mxu0 %v2428
    %3582 = vmatprep.subr.bf16.mxu0 %v2433
    %3583 = vmatpush1.bf16.msra.mxu0 %v2432
    %3584 = vmatprep.subr.bf16.mxu0 %v2437
    %3585 = vmatpush1.bf16.msra.mxu0 %v2436
    %3586 = vmatprep.subr.bf16.mxu0 %v2441
    %3587 = vmatpush1.bf16.msra.mxu0 %v2440
    %3588 = vmatprep.subr.bf16.mxu0 %v2445
    %3589 = vmatpush1.bf16.msra.mxu0 %v2444
    %3590 = vmatprep.subr.bf16.mxu0 %v2449
    %3591 = vmatpush1.bf16.msra.mxu0 %v2448
    %3592 = vmatprep.subr.bf16.mxu0 %v2453
    %3593 = vmatpush1.bf16.msra.mxu0 %v2452
    %3594 = vmatprep.subr.bf16.mxu0 %v2457
    %3595 = vmatpush1.bf16.msra.mxu0 %v2456
    %3596 = vmatprep.subr.bf16.mxu0 %v2461
    %3597 = vmatpush1.bf16.msra.mxu0 %v2460
    %3598 = vmatprep.subr.bf16.mxu0 %v2465
    %3599 = vmatpush1.bf16.msra.mxu0 %v2464
    %3600 = vmatprep.subr.bf16.mxu0 %v2469
    %3601 = vmatpush1.bf16.msra.mxu0 %v2468
    %3602 = vmatprep.subr.bf16.mxu0 %v2473
    %3603 = vmatpush1.bf16.msra.mxu0 %v2472
    %3604 = vmatprep.subr.bf16.mxu0 %v2477
    %3605 = vmatpush1.bf16.msra.mxu0 %v2476
    %3606 = vmatprep.subr.bf16.mxu0 %v2481
    %3607 = vmatpush1.bf16.msra.mxu0 %v2480
    %3608 = vmatprep.subr.bf16.mxu0 %v2485
    %3609 = vmatpush1.bf16.msra.mxu0 %v2484
    %3610 = vmatprep.subr.bf16.mxu0 %v2489
    %3611 = vmatpush1.bf16.msra.mxu0 %v2488
    %3612 = vmatprep.mubr.bf16.mxu0 %v665
    %3613 = vmatmul.mubr.bf16.gmra.mrb[0].mxu0 %v664
    %v3614 = vpop.f32.mrb[0].mxu0
    %v3615 = vadd.f32 0.0, %v3614
    %v3616 = vpop.f32.mrb[0].mxu0
    %v3617 = vadd.f32 0.0, %v3616
    %v3618 = vpop.f32.mrb[0].mxu0
    %v3619 = vpop.f32.mrb[0].mxu0
    %3620 = vdwg.mxu0
    %3621 = vmatprep.subr.bf16.mxu0 %v2493
    %3622 = vmatpush1.bf16.msra.mxu0 %v2492
    %3623 = vmatprep.subr.bf16.mxu0 %v2497
    %3624 = vmatpush1.bf16.msra.mxu0 %v2496
    %3625 = vmatprep.subr.bf16.mxu0 %v2501
    %3626 = vmatpush1.bf16.msra.mxu0 %v2500
    %3627 = vmatprep.subr.bf16.mxu0 %v2505
    %3628 = vmatpush1.bf16.msra.mxu0 %v2504
    %3629 = vmatprep.subr.bf16.mxu0 %v2509
    %3630 = vmatpush1.bf16.msra.mxu0 %v2508
    %3631 = vmatprep.subr.bf16.mxu0 %v2513
    %3632 = vmatpush1.bf16.msra.mxu0 %v2512
    %3633 = vmatprep.subr.bf16.mxu0 %v2517
    %3634 = vmatpush1.bf16.msra.mxu0 %v2516
    %3635 = vmatprep.subr.bf16.mxu0 %v2521
    %3636 = vmatpush1.bf16.msra.mxu0 %v2520
    %3637 = vmatprep.subr.bf16.mxu0 %v2525
    %3638 = vmatpush1.bf16.msra.mxu0 %v2524
    %3639 = vmatprep.subr.bf16.mxu0 %v2529
    %3640 = vmatpush1.bf16.msra.mxu0 %v2528
    %3641 = vmatprep.subr.bf16.mxu0 %v2533
    %3642 = vmatpush1.bf16.msra.mxu0 %v2532
    %3643 = vmatprep.subr.bf16.mxu0 %v2537
    %3644 = vmatpush1.bf16.msra.mxu0 %v2536
    %3645 = vmatprep.subr.bf16.mxu0 %v2541
    %3646 = vmatpush1.bf16.msra.mxu0 %v2540
    %3647 = vmatprep.subr.bf16.mxu0 %v2545
    %3648 = vmatpush1.bf16.msra.mxu0 %v2544
    %3649 = vmatprep.subr.bf16.mxu0 %v2549
    %3650 = vmatpush1.bf16.msra.mxu0 %v2548
    %3651 = vmatprep.subr.bf16.mxu0 %v2553
    %3652 = vmatpush1.bf16.msra.mxu0 %v2552
    %3653 = vmatprep.mubr.bf16.mxu0 %v667
    %3654 = vmatmul.mubr.bf16.gmra.mrb[0].mxu0 %v666
    %v3655 = vpop.f32.mrb[0].mxu0
    %v3656 = vadd.f32 %v3615, %v3655
    %v3657 = vpop.f32.mrb[0].mxu0
    %v3658 = vadd.f32 %v3617, %v3657
    %v3659 = vpop.f32.mrb[0].mxu0
    %v3660 = vpop.f32.mrb[0].mxu0
    %3661 = vdwg.mxu0
    %3662 = vmatprep.subr.bf16.mxu0 %v2557
    %3663 = vmatpush1.bf16.msra.mxu0 %v2556
    %3664 = vmatprep.subr.bf16.mxu0 %v2561
    %3665 = vmatpush1.bf16.msra.mxu0 %v2560
    %3666 = vmatprep.subr.bf16.mxu0 %v2565
    %3667 = vmatpush1.bf16.msra.mxu0 %v2564
    %3668 = vmatprep.subr.bf16.mxu0 %v2569
    %3669 = vmatpush1.bf16.msra.mxu0 %v2568
    %3670 = vmatprep.subr.bf16.mxu0 %v2573
    %3671 = vmatpush1.bf16.msra.mxu0 %v2572
    %3672 = vmatprep.subr.bf16.mxu0 %v2577
    %3673 = vmatpush1.bf16.msra.mxu0 %v2576
    %3674 = vmatprep.subr.bf16.mxu0 %v2581
    %3675 = vmatpush1.bf16.msra.mxu0 %v2580
    %3676 = vmatprep.subr.bf16.mxu0 %v2585
    %3677 = vmatpush1.bf16.msra.mxu0 %v2584
    %3678 = vmatprep.subr.bf16.mxu0 %v2589
    %3679 = vmatpush1.bf16.msra.mxu0 %v2588
    %3680 = vmatprep.subr.bf16.mxu0 %v2593
    %3681 = vmatpush1.bf16.msra.mxu0 %v2592
    %3682 = vmatprep.subr.bf16.mxu0 %v2597
    %3683 = vmatpush1.bf16.msra.mxu0 %v2596
    %3684 = vmatprep.subr.bf16.mxu0 %v2601
    %3685 = vmatpush1.bf16.msra.mxu0 %v2600
    %3686 = vmatprep.subr.bf16.mxu0 %v2605
    %3687 = vmatpush1.bf16.msra.mxu0 %v2604
    %3688 = vmatprep.subr.bf16.mxu0 %v2609
    %3689 = vmatpush1.bf16.msra.mxu0 %v2608
    %3690 = vmatprep.subr.bf16.mxu0 %v2613
    %3691 = vmatpush1.bf16.msra.mxu0 %v2612
    %3692 = vmatprep.subr.bf16.mxu0 %v2617
    %3693 = vmatpush1.bf16.msra.mxu0 %v2616
    %3694 = vmatprep.mubr.bf16.mxu0 %v669
    %3695 = vmatmul.mubr.bf16.gmra.mrb[0].mxu0 %v668
    %v3696 = vpop.f32.mrb[0].mxu0
    %v3697 = vadd.f32 %v3656, %v3696
    %v3698 = vpop.f32.mrb[0].mxu0
    %v3699 = vadd.f32 %v3658, %v3698
    %v3700 = vpop.f32.mrb[0].mxu0
    %v3701 = vpop.f32.mrb[0].mxu0
    %3702 = vdwg.mxu0
    %3703 = vmatprep.subr.bf16.mxu0 %v2621
    %3704 = vmatpush1.bf16.msra.mxu0 %v2620
    %3705 = vmatprep.subr.bf16.mxu0 %v2625
    %3706 = vmatpush1.bf16.msra.mxu0 %v2624
    %3707 = vmatprep.subr.bf16.mxu0 %v2629
    %3708 = vmatpush1.bf16.msra.mxu0 %v2628
    %3709 = vmatprep.subr.bf16.mxu0 %v2633
    %3710 = vmatpush1.bf16.msra.mxu0 %v2632
    %3711 = vmatprep.subr.bf16.mxu0 %v2637
    %3712 = vmatpush1.bf16.msra.mxu0 %v2636
    %3713 = vmatprep.subr.bf16.mxu0 %v2641
    %3714 = vmatpush1.bf16.msra.mxu0 %v2640
    %3715 = vmatprep.subr.bf16.mxu0 %v2645
    %3716 = vmatpush1.bf16.msra.mxu0 %v2644
    %3717 = vmatprep.subr.bf16.mxu0 %v2649
    %3718 = vmatpush1.bf16.msra.mxu0 %v2648
    %3719 = vmatprep.subr.bf16.mxu0 %v2653
    %3720 = vmatpush1.bf16.msra.mxu0 %v2652
    %3721 = vmatprep.subr.bf16.mxu0 %v2657
    %3722 = vmatpush1.bf16.msra.mxu0 %v2656
    %3723 = vmatprep.subr.bf16.mxu0 %v2661
    %3724 = vmatpush1.bf16.msra.mxu0 %v2660
    %3725 = vmatprep.subr.bf16.mxu0 %v2665
    %3726 = vmatpush1.bf16.msra.mxu0 %v2664
    %3727 = vmatprep.subr.bf16.mxu0 %v2669
    %3728 = vmatpush1.bf16.msra.mxu0 %v2668
    %3729 = vmatprep.subr.bf16.mxu0 %v2673
    %3730 = vmatpush1.bf16.msra.mxu0 %v2672
    %3731 = vmatprep.subr.bf16.mxu0 %v2677
    %3732 = vmatpush1.bf16.msra.mxu0 %v2676
    %3733 = vmatprep.subr.bf16.mxu0 %v2681
    %3734 = vmatpush1.bf16.msra.mxu0 %v2680
    %3735 = vmatprep.mubr.bf16.mxu0 %v671
    %3736 = vmatmul.mubr.bf16.gmra.mrb[0].mxu0 %v670
    %v3737 = vpop.f32.mrb[0].mxu0
    %v3738 = vadd.f32 %v3697, %v3737
    %v3739 = vpop.f32.mrb[0].mxu0
    %v3740 = vadd.f32 %v3699, %v3739
    %v3741 = vpop.f32.mrb[0].mxu0
    %v3742 = vpop.f32.mrb[0].mxu0
    %3743 = vdwg.mxu0
    %3744 = vmatprep.subr.bf16.mxu0 %v2685
    %3745 = vmatpush1.bf16.msra.mxu0 %v2684
    %3746 = vmatprep.subr.bf16.mxu0 %v2689
    %3747 = vmatpush1.bf16.msra.mxu0 %v2688
    %3748 = vmatprep.subr.bf16.mxu0 %v2693
    %3749 = vmatpush1.bf16.msra.mxu0 %v2692
    %3750 = vmatprep.subr.bf16.mxu0 %v2697
    %3751 = vmatpush1.bf16.msra.mxu0 %v2696
    %3752 = vmatprep.subr.bf16.mxu0 %v2701
    %3753 = vmatpush1.bf16.msra.mxu0 %v2700
    %3754 = vmatprep.subr.bf16.mxu0 %v2705
    %3755 = vmatpush1.bf16.msra.mxu0 %v2704
    %3756 = vmatprep.subr.bf16.mxu0 %v2709
    %3757 = vmatpush1.bf16.msra.mxu0 %v2708
    %3758 = vmatprep.subr.bf16.mxu0 %v2713
    %3759 = vmatpush1.bf16.msra.mxu0 %v2712
    %3760 = vmatprep.subr.bf16.mxu0 %v2717
    %3761 = vmatpush1.bf16.msra.mxu0 %v2716
    %3762 = vmatprep.subr.bf16.mxu0 %v2721
    %3763 = vmatpush1.bf16.msra.mxu0 %v2720
    %3764 = vmatprep.subr.bf16.mxu0 %v2725
    %3765 = vmatpush1.bf16.msra.mxu0 %v2724
    %3766 = vmatprep.subr.bf16.mxu0 %v2729
    %3767 = vmatpush1.bf16.msra.mxu0 %v2728
    %3768 = vmatprep.subr.bf16.mxu0 %v2733
    %3769 = vmatpush1.bf16.msra.mxu0 %v2732
    %3770 = vmatprep.subr.bf16.mxu0 %v2737
    %3771 = vmatpush1.bf16.msra.mxu0 %v2736
    %3772 = vmatprep.subr.bf16.mxu0 %v2741
    %3773 = vmatpush1.bf16.msra.mxu0 %v2740
    %3774 = vmatprep.subr.bf16.mxu0 %v2745
    %3775 = vmatpush1.bf16.msra.mxu0 %v2744
    %3776 = vmatprep.mubr.bf16.mxu0 %v673
    %3777 = vmatmul.mubr.bf16.gmra.mrb[0].mxu0 %v672
    %v3778 = vpop.f32.mrb[0].mxu0
    %v3779 = vadd.f32 %v3738, %v3778
    %v3780 = vpop.f32.mrb[0].mxu0
    %v3781 = vadd.f32 %v3740, %v3780
    %v3782 = vpop.f32.mrb[0].mxu0
    %v3783 = vpop.f32.mrb[0].mxu0
    %3784 = vdwg.mxu0
    %3785 = vmatprep.subr.bf16.mxu0 %v2749
    %3786 = vmatpush1.bf16.msra.mxu0 %v2748
    %3787 = vmatprep.subr.bf16.mxu0 %v2753
    %3788 = vmatpush1.bf16.msra.mxu0 %v2752
    %3789 = vmatprep.subr.bf16.mxu0 %v2757
    %3790 = vmatpush1.bf16.msra.mxu0 %v2756
    %3791 = vmatprep.subr.bf16.mxu0 %v2761
    %3792 = vmatpush1.bf16.msra.mxu0 %v2760
    %3793 = vmatprep.subr.bf16.mxu0 %v2765
    %3794 = vmatpush1.bf16.msra.mxu0 %v2764
    %3795 = vmatprep.subr.bf16.mxu0 %v2769
    %3796 = vmatpush1.bf16.msra.mxu0 %v2768
    %3797 = vmatprep.subr.bf16.mxu0 %v2773
    %3798 = vmatpush1.bf16.msra.mxu0 %v2772
    %3799 = vmatprep.subr.bf16.mxu0 %v2777
    %3800 = vmatpush1.bf16.msra.mxu0 %v2776
    %3801 = vmatprep.subr.bf16.mxu0 %v2781
    %3802 = vmatpush1.bf16.msra.mxu0 %v2780
    %3803 = vmatprep.subr.bf16.mxu0 %v2785
    %3804 = vmatpush1.bf16.msra.mxu0 %v2784
    %3805 = vmatprep.subr.bf16.mxu0 %v2789
    %3806 = vmatpush1.bf16.msra.mxu0 %v2788
    %3807 = vmatprep.subr.bf16.mxu0 %v2793
    %3808 = vmatpush1.bf16.msra.mxu0 %v2792
    %3809 = vmatprep.subr.bf16.mxu0 %v2797
    %3810 = vmatpush1.bf16.msra.mxu0 %v2796
    %3811 = vmatprep.subr.bf16.mxu0 %v2801
    %3812 = vmatpush1.bf16.msra.mxu0 %v2800
    %3813 = vmatprep.subr.bf16.mxu0 %v2805
    %3814 = vmatpush1.bf16.msra.mxu0 %v2804
    %3815 = vmatprep.subr.bf16.mxu0 %v2809
    %3816 = vmatpush1.bf16.msra.mxu0 %v2808
    %3817 = vmatprep.mubr.bf16.mxu0 %v675
    %3818 = vmatmul.mubr.bf16.gmra.mrb[0].mxu0 %v674
    %v3819 = vpop.f32.mrb[0].mxu0
    %v3820 = vadd.f32 %v3779, %v3819
    %v3821 = vpop.f32.mrb[0].mxu0
    %v3822 = vadd.f32 %v3781, %v3821
    %v3823 = vpop.f32.mrb[0].mxu0
    %v3824 = vpop.f32.mrb[0].mxu0
    %3825 = vdwg.mxu0
    %3826 = vmatprep.subr.bf16.mxu0 %v2813
    %3827 = vmatpush1.bf16.msra.mxu0 %v2812
    %3828 = vmatprep.subr.bf16.mxu0 %v2817
    %3829 = vmatpush1.bf16.msra.mxu0 %v2816
    %3830 = vmatprep.subr.bf16.mxu0 %v2821
    %3831 = vmatpush1.bf16.msra.mxu0 %v2820
    %3832 = vmatprep.subr.bf16.mxu0 %v2825
    %3833 = vmatpush1.bf16.msra.mxu0 %v2824
    %3834 = vmatprep.subr.bf16.mxu0 %v2829
    %3835 = vmatpush1.bf16.msra.mxu0 %v2828
    %3836 = vmatprep.subr.bf16.mxu0 %v2833
    %3837 = vmatpush1.bf16.msra.mxu0 %v2832
    %3838 = vmatprep.subr.bf16.mxu0 %v2837
    %3839 = vmatpush1.bf16.msra.mxu0 %v2836
    %3840 = vmatprep.subr.bf16.mxu0 %v2841
    %3841 = vmatpush1.bf16.msra.mxu0 %v2840
    %3842 = vmatprep.subr.bf16.mxu0 %v2845
    %3843 = vmatpush1.bf16.msra.mxu0 %v2844
    %3844 = vmatprep.subr.bf16.mxu0 %v2849
    %3845 = vmatpush1.bf16.msra.mxu0 %v2848
    %3846 = vmatprep.subr.bf16.mxu0 %v2853
    %3847 = vmatpush1.bf16.msra.mxu0 %v2852
    %3848 = vmatprep.subr.bf16.mxu0 %v2857
    %3849 = vmatpush1.bf16.msra.mxu0 %v2856
    %3850 = vmatprep.subr.bf16.mxu0 %v2861
    %3851 = vmatpush1.bf16.msra.mxu0 %v2860
    %3852 = vmatprep.subr.bf16.mxu0 %v2865
    %3853 = vmatpush1.bf16.msra.mxu0 %v2864
    %3854 = vmatprep.subr.bf16.mxu0 %v2869
    %3855 = vmatpush1.bf16.msra.mxu0 %v2868
    %3856 = vmatprep.subr.bf16.mxu0 %v2873
    %3857 = vmatpush1.bf16.msra.mxu0 %v2872
    %3858 = vmatprep.mubr.bf16.mxu0 %v677
    %3859 = vmatmul.mubr.bf16.gmra.mrb[0].mxu0 %v676
    %v3860 = vpop.f32.mrb[0].mxu0
    %v3861 = vadd.f32 %v3820, %v3860
    %v3862 = vpop.f32.mrb[0].mxu0
    %v3863 = vadd.f32 %v3822, %v3862
    %v3864 = vpop.f32.mrb[0].mxu0
    %v3865 = vpop.f32.mrb[0].mxu0
    %3866 = vdwg.mxu0
    %3867 = vmatprep.subr.bf16.mxu0 %v2877
    %3868 = vmatpush1.bf16.msra.mxu0 %v2876
    %3869 = vmatprep.subr.bf16.mxu0 %v2881
    %3870 = vmatpush1.bf16.msra.mxu0 %v2880
    %3871 = vmatprep.subr.bf16.mxu0 %v2885
    %3872 = vmatpush1.bf16.msra.mxu0 %v2884
    %3873 = vmatprep.subr.bf16.mxu0 %v2889
    %3874 = vmatpush1.bf16.msra.mxu0 %v2888
    %3875 = vmatprep.subr.bf16.mxu0 %v2893
    %3876 = vmatpush1.bf16.msra.mxu0 %v2892
    %3877 = vmatprep.subr.bf16.mxu0 %v2897
    %3878 = vmatpush1.bf16.msra.mxu0 %v2896
    %3879 = vmatprep.subr.bf16.mxu0 %v2901
    %3880 = vmatpush1.bf16.msra.mxu0 %v2900
    %3881 = vmatprep.subr.bf16.mxu0 %v2905
    %3882 = vmatpush1.bf16.msra.mxu0 %v2904
    %3883 = vmatprep.subr.bf16.mxu0 %v2909
    %3884 = vmatpush1.bf16.msra.mxu0 %v2908
    %3885 = vmatprep.subr.bf16.mxu0 %v2913
    %3886 = vmatpush1.bf16.msra.mxu0 %v2912
    %3887 = vmatprep.subr.bf16.mxu0 %v2917
    %3888 = vmatpush1.bf16.msra.mxu0 %v2916
    %3889 = vmatprep.subr.bf16.mxu0 %v2921
    %3890 = vmatpush1.bf16.msra.mxu0 %v2920
    %3891 = vmatprep.subr.bf16.mxu0 %v2925
    %3892 = vmatpush1.bf16.msra.mxu0 %v2924
    %3893 = vmatprep.subr.bf16.mxu0 %v2929
    %3894 = vmatpush1.bf16.msra.mxu0 %v2928
    %3895 = vmatprep.subr.bf16.mxu0 %v2933
    %3896 = vmatpush1.bf16.msra.mxu0 %v2932
    %3897 = vmatprep.subr.bf16.mxu0 %v2937
    %3898 = vmatpush1.bf16.msra.mxu0 %v2936
    %3899 = vmatprep.mubr.bf16.mxu0 %v679
    %3900 = vmatmul.mubr.bf16.gmra.mrb[0].mxu0 %v678
    %v3901 = vpop.f32.mrb[0].mxu0
    %v3902 = vadd.f32 %v3861, %v3901
    %v3903 = vpop.f32.mrb[0].mxu0
    %v3904 = vadd.f32 %v3863, %v3903
    %v3905 = vpop.f32.mrb[0].mxu0
    %v3906 = vpop.f32.mrb[0].mxu0
    %3907 = vdwg.mxu0
    %3908 = vmatprep.subr.bf16.mxu0 %v2941
    %3909 = vmatpush1.bf16.msra.mxu0 %v2940
    %3910 = vmatprep.subr.bf16.mxu0 %v2945
    %3911 = vmatpush1.bf16.msra.mxu0 %v2944
    %3912 = vmatprep.subr.bf16.mxu0 %v2949
    %3913 = vmatpush1.bf16.msra.mxu0 %v2948
    %3914 = vmatprep.subr.bf16.mxu0 %v2953
    %3915 = vmatpush1.bf16.msra.mxu0 %v2952
    %3916 = vmatprep.subr.bf16.mxu0 %v2957
    %3917 = vmatpush1.bf16.msra.mxu0 %v2956
    %3918 = vmatprep.subr.bf16.mxu0 %v2961
    %3919 = vmatpush1.bf16.msra.mxu0 %v2960
    %3920 = vmatprep.subr.bf16.mxu0 %v2965
    %3921 = vmatpush1.bf16.msra.mxu0 %v2964
    %3922 = vmatprep.subr.bf16.mxu0 %v2969
    %3923 = vmatpush1.bf16.msra.mxu0 %v2968
    %3924 = vmatprep.subr.bf16.mxu0 %v2973
    %3925 = vmatpush1.bf16.msra.mxu0 %v2972
    %3926 = vmatprep.subr.bf16.mxu0 %v2977
    %3927 = vmatpush1.bf16.msra.mxu0 %v2976
    %3928 = vmatprep.subr.bf16.mxu0 %v2981
    %3929 = vmatpush1.bf16.msra.mxu0 %v2980
    %3930 = vmatprep.subr.bf16.mxu0 %v2985
    %3931 = vmatpush1.bf16.msra.mxu0 %v2984
    %3932 = vmatprep.subr.bf16.mxu0 %v2989
    %3933 = vmatpush1.bf16.msra.mxu0 %v2988
    %3934 = vmatprep.subr.bf16.mxu0 %v2993
    %3935 = vmatpush1.bf16.msra.mxu0 %v2992
    %3936 = vmatprep.subr.bf16.mxu0 %v2997
    %3937 = vmatpush1.bf16.msra.mxu0 %v2996
    %3938 = vmatprep.subr.bf16.mxu0 %v3001
    %3939 = vmatpush1.bf16.msra.mxu0 %v3000
    %3940 = vmatprep.mubr.bf16.mxu0 %v681
    %3941 = vmatmul.mubr.bf16.gmra.mrb[0].mxu0 %v680
    %v3942 = vpop.f32.mrb[0].mxu0
    %v3943 = vadd.f32 %v3902, %v3942
    %v3944 = vpop.f32.mrb[0].mxu0
    %v3945 = vadd.f32 %v3904, %v3944
    %v3946 = vpop.f32.mrb[0].mxu0
    %v3947 = vpop.f32.mrb[0].mxu0
    %3948 = vdwg.mxu0
    %3949 = vmatprep.subr.bf16.mxu0 %v2431
    %3950 = vmatpush1.bf16.msra.mxu0 %v2430
    %3951 = vmatprep.subr.bf16.mxu0 %v2435
    %3952 = vmatpush1.bf16.msra.mxu0 %v2434
    %3953 = vmatprep.subr.bf16.mxu0 %v2439
    %3954 = vmatpush1.bf16.msra.mxu0 %v2438
    %3955 = vmatprep.subr.bf16.mxu0 %v2443
    %3956 = vmatpush1.bf16.msra.mxu0 %v2442
    %3957 = vmatprep.subr.bf16.mxu0 %v2447
    %3958 = vmatpush1.bf16.msra.mxu0 %v2446
    %3959 = vmatprep.subr.bf16.mxu0 %v2451
    %3960 = vmatpush1.bf16.msra.mxu0 %v2450
    %3961 = vmatprep.subr.bf16.mxu0 %v2455
    %3962 = vmatpush1.bf16.msra.mxu0 %v2454
    %3963 = vmatprep.subr.bf16.mxu0 %v2459
    %3964 = vmatpush1.bf16.msra.mxu0 %v2458
    %3965 = vmatprep.subr.bf16.mxu0 %v2463
    %3966 = vmatpush1.bf16.msra.mxu0 %v2462
    %3967 = vmatprep.subr.bf16.mxu0 %v2467
    %3968 = vmatpush1.bf16.msra.mxu0 %v2466
    %3969 = vmatprep.subr.bf16.mxu0 %v2471
    %3970 = vmatpush1.bf16.msra.mxu0 %v2470
    %3971 = vmatprep.subr.bf16.mxu0 %v2475
    %3972 = vmatpush1.bf16.msra.mxu0 %v2474
    %3973 = vmatprep.subr.bf16.mxu0 %v2479
    %3974 = vmatpush1.bf16.msra.mxu0 %v2478
    %3975 = vmatprep.subr.bf16.mxu0 %v2483
    %3976 = vmatpush1.bf16.msra.mxu0 %v2482
    %3977 = vmatprep.subr.bf16.mxu0 %v2487
    %3978 = vmatpush1.bf16.msra.mxu0 %v2486
    %3979 = vmatprep.subr.bf16.mxu0 %v2491
    %3980 = vmatpush1.bf16.msra.mxu0 %v2490
    %3981 = vmatprep.mubr.bf16.mxu0 %v665
    %3982 = vmatmul.mubr.bf16.gmra.mrb[0].mxu0 %v664
    %v3983 = vpop.f32.mrb[0].mxu0
    %v3984 = vadd.f32 0.0, %v3983
    %v3985 = vpop.f32.mrb[0].mxu0
    %v3986 = vadd.f32 0.0, %v3985
    %v3987 = vpop.f32.mrb[0].mxu0
    %v3988 = vpop.f32.mrb[0].mxu0
    %3989 = vdwg.mxu0
    %3990 = vmatprep.subr.bf16.mxu0 %v2495
    %3991 = vmatpush1.bf16.msra.mxu0 %v2494
    %3992 = vmatprep.subr.bf16.mxu0 %v2499
    %3993 = vmatpush1.bf16.msra.mxu0 %v2498
    %3994 = vmatprep.subr.bf16.mxu0 %v2503
    %3995 = vmatpush1.bf16.msra.mxu0 %v2502
    %3996 = vmatprep.subr.bf16.mxu0 %v2507
    %3997 = vmatpush1.bf16.msra.mxu0 %v2506
    %3998 = vmatprep.subr.bf16.mxu0 %v2511
    %3999 = vmatpush1.bf16.msra.mxu0 %v2510
    %4000 = vmatprep.subr.bf16.mxu0 %v2515
    %4001 = vmatpush1.bf16.msra.mxu0 %v2514
    %4002 = vmatprep.subr.bf16.mxu0 %v2519
    %4003 = vmatpush1.bf16.msra.mxu0 %v2518
    %4004 = vmatprep.subr.bf16.mxu0 %v2523
    %4005 = vmatpush1.bf16.msra.mxu0 %v2522
    %4006 = vmatprep.subr.bf16.mxu0 %v2527
    %4007 = vmatpush1.bf16.msra.mxu0 %v2526
    %4008 = vmatprep.subr.bf16.mxu0 %v2531
    %4009 = vmatpush1.bf16.msra.mxu0 %v2530
    %4010 = vmatprep.subr.bf16.mxu0 %v2535
    %4011 = vmatpush1.bf16.msra.mxu0 %v2534
    %4012 = vmatprep.subr.bf16.mxu0 %v2539
    %4013 = vmatpush1.bf16.msra.mxu0 %v2538
    %4014 = vmatprep.subr.bf16.mxu0 %v2543
    %4015 = vmatpush1.bf16.msra.mxu0 %v2542
    %4016 = vmatprep.subr.bf16.mxu0 %v2547
    %4017 = vmatpush1.bf16.msra.mxu0 %v2546
    %4018 = vmatprep.subr.bf16.mxu0 %v2551
    %4019 = vmatpush1.bf16.msra.mxu0 %v2550
    %4020 = vmatprep.subr.bf16.mxu0 %v2555
    %4021 = vmatpush1.bf16.msra.mxu0 %v2554
    %4022 = vmatprep.mubr.bf16.mxu0 %v667
    %4023 = vmatmul.mubr.bf16.gmra.mrb[0].mxu0 %v666
    %v4024 = vpop.f32.mrb[0].mxu0
    %v4025 = vadd.f32 %v3984, %v4024
    %v4026 = vpop.f32.mrb[0].mxu0
    %v4027 = vadd.f32 %v3986, %v4026
    %v4028 = vpop.f32.mrb[0].mxu0
    %v4029 = vpop.f32.mrb[0].mxu0
    %4030 = vdwg.mxu0
    %4031 = vmatprep.subr.bf16.mxu0 %v2559
    %4032 = vmatpush1.bf16.msra.mxu0 %v2558
    %4033 = vmatprep.subr.bf16.mxu0 %v2563
    %4034 = vmatpush1.bf16.msra.mxu0 %v2562
    %4035 = vmatprep.subr.bf16.mxu0 %v2567
    %4036 = vmatpush1.bf16.msra.mxu0 %v2566
    %4037 = vmatprep.subr.bf16.mxu0 %v2571
    %4038 = vmatpush1.bf16.msra.mxu0 %v2570
    %4039 = vmatprep.subr.bf16.mxu0 %v2575
    %4040 = vmatpush1.bf16.msra.mxu0 %v2574
    %4041 = vmatprep.subr.bf16.mxu0 %v2579
    %4042 = vmatpush1.bf16.msra.mxu0 %v2578
    %4043 = vmatprep.subr.bf16.mxu0 %v2583
    %4044 = vmatpush1.bf16.msra.mxu0 %v2582
    %4045 = vmatprep.subr.bf16.mxu0 %v2587
    %4046 = vmatpush1.bf16.msra.mxu0 %v2586
    %4047 = vmatprep.subr.bf16.mxu0 %v2591
    %4048 = vmatpush1.bf16.msra.mxu0 %v2590
    %4049 = vmatprep.subr.bf16.mxu0 %v2595
    %4050 = vmatpush1.bf16.msra.mxu0 %v2594
    %4051 = vmatprep.subr.bf16.mxu0 %v2599
    %4052 = vmatpush1.bf16.msra.mxu0 %v2598
    %4053 = vmatprep.subr.bf16.mxu0 %v2603
    %4054 = vmatpush1.bf16.msra.mxu0 %v2602
    %4055 = vmatprep.subr.bf16.mxu0 %v2607
    %4056 = vmatpush1.bf16.msra.mxu0 %v2606
    %4057 = vmatprep.subr.bf16.mxu0 %v2611
    %4058 = vmatpush1.bf16.msra.mxu0 %v2610
    %4059 = vmatprep.subr.bf16.mxu0 %v2615
    %4060 = vmatpush1.bf16.msra.mxu0 %v2614
    %4061 = vmatprep.subr.bf16.mxu0 %v2619
    %4062 = vmatpush1.bf16.msra.mxu0 %v2618
    %4063 = vmatprep.mubr.bf16.mxu0 %v669
    %4064 = vmatmul.mubr.bf16.gmra.mrb[0].mxu0 %v668
    %v4065 = vpop.f32.mrb[0].mxu0
    %v4066 = vadd.f32 %v4025, %v4065
    %v4067 = vpop.f32.mrb[0].mxu0
    %v4068 = vadd.f32 %v4027, %v4067
    %v4069 = vpop.f32.mrb[0].mxu0
    %v4070 = vpop.f32.mrb[0].mxu0
    %4071 = vdwg.mxu0
    %4072 = vmatprep.subr.bf16.mxu0 %v2623
    %4073 = vmatpush1.bf16.msra.mxu0 %v2622
    %4074 = vmatprep.subr.bf16.mxu0 %v2627
    %4075 = vmatpush1.bf16.msra.mxu0 %v2626
    %4076 = vmatprep.subr.bf16.mxu0 %v2631
    %4077 = vmatpush1.bf16.msra.mxu0 %v2630
    %4078 = vmatprep.subr.bf16.mxu0 %v2635
    %4079 = vmatpush1.bf16.msra.mxu0 %v2634
    %4080 = vmatprep.subr.bf16.mxu0 %v2639
    %4081 = vmatpush1.bf16.msra.mxu0 %v2638
    %4082 = vmatprep.subr.bf16.mxu0 %v2643
    %4083 = vmatpush1.bf16.msra.mxu0 %v2642
    %4084 = vmatprep.subr.bf16.mxu0 %v2647
    %4085 = vmatpush1.bf16.msra.mxu0 %v2646
    %4086 = vmatprep.subr.bf16.mxu0 %v2651
    %4087 = vmatpush1.bf16.msra.mxu0 %v2650
    %4088 = vmatprep.subr.bf16.mxu0 %v2655
    %4089 = vmatpush1.bf16.msra.mxu0 %v2654
    %4090 = vmatprep.subr.bf16.mxu0 %v2659
    %4091 = vmatpush1.bf16.msra.mxu0 %v2658
    %4092 = vmatprep.subr.bf16.mxu0 %v2663
    %4093 = vmatpush1.bf16.msra.mxu0 %v2662
    %4094 = vmatprep.subr.bf16.mxu0 %v2667
    %4095 = vmatpush1.bf16.msra.mxu0 %v2666
    %4096 = vmatprep.subr.bf16.mxu0 %v2671
    %4097 = vmatpush1.bf16.msra.mxu0 %v2670
    %4098 = vmatprep.subr.bf16.mxu0 %v2675
    %4099 = vmatpush1.bf16.msra.mxu0 %v2674
    %4100 = vmatprep.subr.bf16.mxu0 %v2679
    %4101 = vmatpush1.bf16.msra.mxu0 %v2678
    %4102 = vmatprep.subr.bf16.mxu0 %v2683
    %4103 = vmatpush1.bf16.msra.mxu0 %v2682
    %4104 = vmatprep.mubr.bf16.mxu0 %v671
    %4105 = vmatmul.mubr.bf16.gmra.mrb[0].mxu0 %v670
    %v4106 = vpop.f32.mrb[0].mxu0
    %v4107 = vadd.f32 %v4066, %v4106
    %v4108 = vpop.f32.mrb[0].mxu0
    %v4109 = vadd.f32 %v4068, %v4108
    %v4110 = vpop.f32.mrb[0].mxu0
    %v4111 = vpop.f32.mrb[0].mxu0
    %4112 = vdwg.mxu0
    %4113 = vmatprep.subr.bf16.mxu0 %v2687
    %4114 = vmatpush1.bf16.msra.mxu0 %v2686
    %4115 = vmatprep.subr.bf16.mxu0 %v2691
    %4116 = vmatpush1.bf16.msra.mxu0 %v2690
    %4117 = vmatprep.subr.bf16.mxu0 %v2695
    %4118 = vmatpush1.bf16.msra.mxu0 %v2694
    %4119 = vmatprep.subr.bf16.mxu0 %v2699
    %4120 = vmatpush1.bf16.msra.mxu0 %v2698
    %4121 = vmatprep.subr.bf16.mxu0 %v2703
    %4122 = vmatpush1.bf16.msra.mxu0 %v2702
    %4123 = vmatprep.subr.bf16.mxu0 %v2707
    %4124 = vmatpush1.bf16.msra.mxu0 %v2706
    %4125 = vmatprep.subr.bf16.mxu0 %v2711
    %4126 = vmatpush1.bf16.msra.mxu0 %v2710
    %4127 = vmatprep.subr.bf16.mxu0 %v2715
    %4128 = vmatpush1.bf16.msra.mxu0 %v2714
    %4129 = vmatprep.subr.bf16.mxu0 %v2719
    %4130 = vmatpush1.bf16.msra.mxu0 %v2718
    %4131 = vmatprep.subr.bf16.mxu0 %v2723
    %4132 = vmatpush1.bf16.msra.mxu0 %v2722
    %4133 = vmatprep.subr.bf16.mxu0 %v2727
    %4134 = vmatpush1.bf16.msra.mxu0 %v2726
    %4135 = vmatprep.subr.bf16.mxu0 %v2731
    %4136 = vmatpush1.bf16.msra.mxu0 %v2730
    %4137 = vmatprep.subr.bf16.mxu0 %v2735
    %4138 = vmatpush1.bf16.msra.mxu0 %v2734
    %4139 = vmatprep.subr.bf16.mxu0 %v2739
    %4140 = vmatpush1.bf16.msra.mxu0 %v2738
    %4141 = vmatprep.subr.bf16.mxu0 %v2743
    %4142 = vmatpush1.bf16.msra.mxu0 %v2742
    %4143 = vmatprep.subr.bf16.mxu0 %v2747
    %4144 = vmatpush1.bf16.msra.mxu0 %v2746
    %4145 = vmatprep.mubr.bf16.mxu0 %v673
    %4146 = vmatmul.mubr.bf16.gmra.mrb[0].mxu0 %v672
    %v4147 = vpop.f32.mrb[0].mxu0
    %v4148 = vadd.f32 %v4107, %v4147
    %v4149 = vpop.f32.mrb[0].mxu0
    %v4150 = vadd.f32 %v4109, %v4149
    %v4151 = vpop.f32.mrb[0].mxu0
    %v4152 = vpop.f32.mrb[0].mxu0
    %4153 = vdwg.mxu0
    %4154 = vmatprep.subr.bf16.mxu0 %v2751
    %4155 = vmatpush1.bf16.msra.mxu0 %v2750
    %4156 = vmatprep.subr.bf16.mxu0 %v2755
    %4157 = vmatpush1.bf16.msra.mxu0 %v2754
    %4158 = vmatprep.subr.bf16.mxu0 %v2759
    %4159 = vmatpush1.bf16.msra.mxu0 %v2758
    %4160 = vmatprep.subr.bf16.mxu0 %v2763
    %4161 = vmatpush1.bf16.msra.mxu0 %v2762
    %4162 = vmatprep.subr.bf16.mxu0 %v2767
    %4163 = vmatpush1.bf16.msra.mxu0 %v2766
    %4164 = vmatprep.subr.bf16.mxu0 %v2771
    %4165 = vmatpush1.bf16.msra.mxu0 %v2770
    %4166 = vmatprep.subr.bf16.mxu0 %v2775
    %4167 = vmatpush1.bf16.msra.mxu0 %v2774
    %4168 = vmatprep.subr.bf16.mxu0 %v2779
    %4169 = vmatpush1.bf16.msra.mxu0 %v2778
    %4170 = vmatprep.subr.bf16.mxu0 %v2783
    %4171 = vmatpush1.bf16.msra.mxu0 %v2782
    %4172 = vmatprep.subr.bf16.mxu0 %v2787
    %4173 = vmatpush1.bf16.msra.mxu0 %v2786
    %4174 = vmatprep.subr.bf16.mxu0 %v2791
    %4175 = vmatpush1.bf16.msra.mxu0 %v2790
    %4176 = vmatprep.subr.bf16.mxu0 %v2795
    %4177 = vmatpush1.bf16.msra.mxu0 %v2794
    %4178 = vmatprep.subr.bf16.mxu0 %v2799
    %4179 = vmatpush1.bf16.msra.mxu0 %v2798
    %4180 = vmatprep.subr.bf16.mxu0 %v2803
    %4181 = vmatpush1.bf16.msra.mxu0 %v2802
    %4182 = vmatprep.subr.bf16.mxu0 %v2807
    %4183 = vmatpush1.bf16.msra.mxu0 %v2806
    %4184 = vmatprep.subr.bf16.mxu0 %v2811
    %4185 = vmatpush1.bf16.msra.mxu0 %v2810
    %4186 = vmatprep.mubr.bf16.mxu0 %v675
    %4187 = vmatmul.mubr.bf16.gmra.mrb[0].mxu0 %v674
    %v4188 = vpop.f32.mrb[0].mxu0
    %v4189 = vadd.f32 %v4148, %v4188
    %v4190 = vpop.f32.mrb[0].mxu0
    %v4191 = vadd.f32 %v4150, %v4190
    %v4192 = vpop.f32.mrb[0].mxu0
    %v4193 = vpop.f32.mrb[0].mxu0
    %4194 = vdwg.mxu0
    %4195 = vmatprep.subr.bf16.mxu0 %v2815
    %4196 = vmatpush1.bf16.msra.mxu0 %v2814
    %4197 = vmatprep.subr.bf16.mxu0 %v2819
    %4198 = vmatpush1.bf16.msra.mxu0 %v2818
    %4199 = vmatprep.subr.bf16.mxu0 %v2823
    %4200 = vmatpush1.bf16.msra.mxu0 %v2822
    %4201 = vmatprep.subr.bf16.mxu0 %v2827
    %4202 = vmatpush1.bf16.msra.mxu0 %v2826
    %4203 = vmatprep.subr.bf16.mxu0 %v2831
    %4204 = vmatpush1.bf16.msra.mxu0 %v2830
    %4205 = vmatprep.subr.bf16.mxu0 %v2835
    %4206 = vmatpush1.bf16.msra.mxu0 %v2834
    %4207 = vmatprep.subr.bf16.mxu0 %v2839
    %4208 = vmatpush1.bf16.msra.mxu0 %v2838
    %4209 = vmatprep.subr.bf16.mxu0 %v2843
    %4210 = vmatpush1.bf16.msra.mxu0 %v2842
    %4211 = vmatprep.subr.bf16.mxu0 %v2847
    %4212 = vmatpush1.bf16.msra.mxu0 %v2846
    %4213 = vmatprep.subr.bf16.mxu0 %v2851
    %4214 = vmatpush1.bf16.msra.mxu0 %v2850
    %4215 = vmatprep.subr.bf16.mxu0 %v2855
    %4216 = vmatpush1.bf16.msra.mxu0 %v2854
    %4217 = vmatprep.subr.bf16.mxu0 %v2859
    %4218 = vmatpush1.bf16.msra.mxu0 %v2858
    %4219 = vmatprep.subr.bf16.mxu0 %v2863
    %4220 = vmatpush1.bf16.msra.mxu0 %v2862
    %4221 = vmatprep.subr.bf16.mxu0 %v2867
    %4222 = vmatpush1.bf16.msra.mxu0 %v2866
    %4223 = vmatprep.subr.bf16.mxu0 %v2871
    %4224 = vmatpush1.bf16.msra.mxu0 %v2870
    %4225 = vmatprep.subr.bf16.mxu0 %v2875
    %4226 = vmatpush1.bf16.msra.mxu0 %v2874
    %4227 = vmatprep.mubr.bf16.mxu0 %v677
    %4228 = vmatmul.mubr.bf16.gmra.mrb[0].mxu0 %v676
    %v4229 = vpop.f32.mrb[0].mxu0
    %v4230 = vadd.f32 %v4189, %v4229
    %v4231 = vpop.f32.mrb[0].mxu0
    %v4232 = vadd.f32 %v4191, %v4231
    %v4233 = vpop.f32.mrb[0].mxu0
    %v4234 = vpop.f32.mrb[0].mxu0
    %4235 = vdwg.mxu0
    %4236 = vmatprep.subr.bf16.mxu0 %v2879
    %4237 = vmatpush1.bf16.msra.mxu0 %v2878
    %4238 = vmatprep.subr.bf16.mxu0 %v2883
    %4239 = vmatpush1.bf16.msra.mxu0 %v2882
    %4240 = vmatprep.subr.bf16.mxu0 %v2887
    %4241 = vmatpush1.bf16.msra.mxu0 %v2886
    %4242 = vmatprep.subr.bf16.mxu0 %v2891
    %4243 = vmatpush1.bf16.msra.mxu0 %v2890
    %4244 = vmatprep.subr.bf16.mxu0 %v2895
    %4245 = vmatpush1.bf16.msra.mxu0 %v2894
    %4246 = vmatprep.subr.bf16.mxu0 %v2899
    %4247 = vmatpush1.bf16.msra.mxu0 %v2898
    %4248 = vmatprep.subr.bf16.mxu0 %v2903
    %4249 = vmatpush1.bf16.msra.mxu0 %v2902
    %4250 = vmatprep.subr.bf16.mxu0 %v2907
    %4251 = vmatpush1.bf16.msra.mxu0 %v2906
    %4252 = vmatprep.subr.bf16.mxu0 %v2911
    %4253 = vmatpush1.bf16.msra.mxu0 %v2910
    %4254 = vmatprep.subr.bf16.mxu0 %v2915
    %4255 = vmatpush1.bf16.msra.mxu0 %v2914
    %4256 = vmatprep.subr.bf16.mxu0 %v2919
    %4257 = vmatpush1.bf16.msra.mxu0 %v2918
    %4258 = vmatprep.subr.bf16.mxu0 %v2923
    %4259 = vmatpush1.bf16.msra.mxu0 %v2922
    %4260 = vmatprep.subr.bf16.mxu0 %v2927
    %4261 = vmatpush1.bf16.msra.mxu0 %v2926
    %4262 = vmatprep.subr.bf16.mxu0 %v2931
    %4263 = vmatpush1.bf16.msra.mxu0 %v2930
    %4264 = vmatprep.subr.bf16.mxu0 %v2935
    %4265 = vmatpush1.bf16.msra.mxu0 %v2934
    %4266 = vmatprep.subr.bf16.mxu0 %v2939
    %4267 = vmatpush1.bf16.msra.mxu0 %v2938
    %4268 = vmatprep.mubr.bf16.mxu0 %v679
    %4269 = vmatmul.mubr.bf16.gmra.mrb[0].mxu0 %v678
    %v4270 = vpop.f32.mrb[0].mxu0
    %v4271 = vadd.f32 %v4230, %v4270
    %v4272 = vpop.f32.mrb[0].mxu0
    %v4273 = vadd.f32 %v4232, %v4272
    %v4274 = vpop.f32.mrb[0].mxu0
    %v4275 = vpop.f32.mrb[0].mxu0
    %4276 = vdwg.mxu0
    %4277 = vmatprep.subr.bf16.mxu0 %v2943
    %4278 = vmatpush1.bf16.msra.mxu0 %v2942
    %4279 = vmatprep.subr.bf16.mxu0 %v2947
    %4280 = vmatpush1.bf16.msra.mxu0 %v2946
    %4281 = vmatprep.subr.bf16.mxu0 %v2951
    %4282 = vmatpush1.bf16.msra.mxu0 %v2950
    %4283 = vmatprep.subr.bf16.mxu0 %v2955
    %4284 = vmatpush1.bf16.msra.mxu0 %v2954
    %4285 = vmatprep.subr.bf16.mxu0 %v2959
    %4286 = vmatpush1.bf16.msra.mxu0 %v2958
    %4287 = vmatprep.subr.bf16.mxu0 %v2963
    %4288 = vmatpush1.bf16.msra.mxu0 %v2962
    %4289 = vmatprep.subr.bf16.mxu0 %v2967
    %4290 = vmatpush1.bf16.msra.mxu0 %v2966
    %4291 = vmatprep.subr.bf16.mxu0 %v2971
    %4292 = vmatpush1.bf16.msra.mxu0 %v2970
    %4293 = vmatprep.subr.bf16.mxu0 %v2975
    %4294 = vmatpush1.bf16.msra.mxu0 %v2974
    %4295 = vmatprep.subr.bf16.mxu0 %v2979
    %4296 = vmatpush1.bf16.msra.mxu0 %v2978
    %4297 = vmatprep.subr.bf16.mxu0 %v2983
    %4298 = vmatpush1.bf16.msra.mxu0 %v2982
    %4299 = vmatprep.subr.bf16.mxu0 %v2987
    %4300 = vmatpush1.bf16.msra.mxu0 %v2986
    %4301 = vmatprep.subr.bf16.mxu0 %v2991
    %4302 = vmatpush1.bf16.msra.mxu0 %v2990
    %4303 = vmatprep.subr.bf16.mxu0 %v2995
    %4304 = vmatpush1.bf16.msra.mxu0 %v2994
    %4305 = vmatprep.subr.bf16.mxu0 %v2999
    %4306 = vmatpush1.bf16.msra.mxu0 %v2998
    %4307 = vmatprep.subr.bf16.mxu0 %v3003
    %4308 = vmatpush1.bf16.msra.mxu0 %v3002
    %4309 = vmatprep.mubr.bf16.mxu0 %v681
    %4310 = vmatmul.mubr.bf16.gmra.mrb[0].mxu0 %v680
    %v4311 = vpop.f32.mrb[0].mxu0
    %v4312 = vadd.f32 %v4271, %v4311
    %v4313 = vpop.f32.mrb[0].mxu0
    %v4314 = vadd.f32 %v4273, %v4313
    %v4315 = vpop.f32.mrb[0].mxu0
    %v4316 = vpop.f32.mrb[0].mxu0
    %4317 = vdwg.mxu0
    %v4318 = vmax.f32 %v3943, %v4312
    %v4319 = vmax.f32 %v3945, %v4314
    %v4320 = vmax.f32 %v4318, %v4319
    %v4321 = vld [vmem:[#allocation7] sm:$0x1]
    %v4323 = vlaneseq
    %v4324 = vshrl.u32 %v4323, 7
    %v4325 = vsub.s32 0, %v4324
    %v4326 = vrot.slane %v4321, %v4325
    %v4328 = vadd.f32 %v4320, %v4326
    %v4329 = vsub.f32 0.0, %v4328
    %v4330 = vmul.f32 %v4329, 1.442695
    %v4331 = vpow.pop %v4330
    %v4332 = vadd.f32 %v4331, 1.0
    %v4333 = vrcp.pop %v4332
    %v4334 = vmul.f32 1.0, %v4333
    %v4335 = vmul.f32 %v4328, %v4334
    %4336 = vst [vmem:[#allocation8] sm:$0xff] %v4335
    // Predicated region
    $region26: #{tpu_custom_call.1} parent=1 // pred_check
      _
    $region27: #{tpu_custom_call.1} parent=1 // pred_check_branch
      %4338 = sbr.rel (0) target = $region29
    $region28: #{tpu_custom_call.1} parent=1 // pred_region
      %s4340 = ssub.s32 128, 128
      %4341 = vsyncadd [#allocation4], %s4340
      %s4343 = sshll.u32 [#allocation8], 4
      %s4344 = int_to_ptr.vmem [resolvable:$true] %s4343
      %4346 = dma.vmem_to_hbm [thread:$0]  %s4344, 128, %s3, [#allocation4]
    $region29: #{tpu_custom_call.1} parent=1 // pred_fallthru
      _
    // Predicated region
    $region30: #{tpu_custom_call.1} parent=1 // pred_check
      _
    $region31: #{tpu_custom_call.1} parent=1 // pred_check_branch
      %4348 = sbr.rel (0) target = $region33
    $region32: #{tpu_custom_call.1} parent=1 // pred_region
      %4349 = dma.done [#allocation4], 128
    $region33: #{tpu_custom_call.1} parent=1 // pred_fallthru
      _
    %4350 = vsyncpa [#allocation3], 1
    %4351 = vsyncpa [#allocation6], 1
    %4352 = vsyncpa [#allocation4], 1

</llo_original>
